<compile_context>
chip_gen: v6e
topology: v6e:2x2x1
jax: 0.10.0
libtpu: 0.0.40
codegen_flags: <defaults>
</compile_context>

<pallas_src>
import functools

import jax
import jax.numpy as jnp
import numpy as np
from jax import lax
from jax.experimental import pallas as pl
from jax.experimental.pallas import tpu as pltpu


def _round_up(x, m):
    return (x + m - 1) // m * m


@functools.lru_cache(maxsize=1)
def _vmem_limit():
    """Generation-aware VMEM budget (leave headroom for double buffering)."""
    try:
        cap = int(pltpu.get_tpu_info().vmem_capacity_bytes)
        return int(min(cap * 3 // 4, 100 * 1024 * 1024))
    except Exception:
        return 48 * 1024 * 1024  # safe on v7x (64 MiB physical)


# ----------------------------------------------------------------------------
# Fused conv1 + relu + conv2 + relu + 2x2 max-pool.
#
# Per image (TB images per grid step, all intermediates stay in VMEM):
#   pw_ref[b] : (624, 15) "wide" conv1 patches, row m = h*24+w (h<26, w<24),
#               column a*5+s = x[h+a, w+s]                                (bf16)
#   xs        : (624, 96)  xs[m, kj*32+c] = relu(conv1)[h, w+kj, c]
#               i.e. all three kw-shifted copies from ONE K=15 matmul
#   conv2     : 3 accumulated matmuls (576,96)@(96,64); the kh taps a=0..2 are
#               the sublane-aligned windows xs[a*24 : a*24+576, :]  (K=kw*cin=96)
#   pool      : strided sublane reads + leading-dim pairing; relu after max
#               (relu is monotone, so relu(max) == max(relu)).
# ----------------------------------------------------------------------------
def _fused_conv_kernel(pw_ref, w1_ref, b1_ref, w2_ref, b2_ref, o_ref,
                       xs_ref, acc_ref, *, tb):
    w1 = w1_ref[...]                      # (15, 96)   bf16
    b1 = b1_ref[...]                      # (1, 96)    f32
    b2 = b2_ref[...]                      # (1, 1, 64) f32
    for b in range(tb):
        # conv1 + relu: one matmul produces all three kw-shifted output copies
        xs_ref[...] = jnp.maximum(
            jnp.dot(pw_ref[b], w1, preferred_element_type=jnp.float32) + b1,
            0.0)

        # conv2: bias-initialized VMEM accumulator, 3 deep (K=96) MXU matmuls
        acc_ref[...] = jnp.zeros(acc_ref.shape, acc_ref.dtype) + b2
        for a in range(3):
            chunk = xs_ref[pl.ds(a * 24, 576), :].astype(jnp.bfloat16)   # (576, 96)
            acc_ref[...] += jnp.dot(
                chunk, w2_ref[a], preferred_element_type=jnp.float32
            ).reshape(24, 24, 64)

        # 2x2 max-pool (+ relu), one image, epilogue of the same kernel
        even = acc_ref[:, pl.ds(0, 12, 2), :]            # (24, 12, 64)
        odd = acc_ref[:, pl.ds(1, 12, 2), :]
        m = jnp.maximum(even, odd).reshape(12, 2, 12, 64)
        pooled = jnp.maximum(jnp.max(m, axis=1), 0.0)    # (12, 12, 64)
        o_ref[b] = pooled.astype(o_ref.dtype)


def fused_conv_pool(pw, w1w, b1w, w2a, b2, *, tb):
    """pw: (B, 624, 15) bf16 -> pooled activations (B, 12, 12, 64) bf16."""
    bp = pw.shape[0]
    assert bp % tb == 0
    return pl.pallas_call(
        functools.partial(_fused_conv_kernel, tb=tb),
        out_shape=jax.ShapeDtypeStruct((bp, 12, 12, 64), jnp.bfloat16),
        grid_spec=pltpu.PrefetchScalarGridSpec(
            num_scalar_prefetch=0,
            grid=(bp // tb,),
            in_specs=[
                pl.BlockSpec((tb, 624, 15), lambda i: (i, 0, 0)),
                pl.BlockSpec((15, 96), lambda i: (0, 0)),
                pl.BlockSpec((1, 96), lambda i: (0, 0)),
                pl.BlockSpec((3, 96, 64), lambda i: (0, 0, 0)),
                pl.BlockSpec((1, 1, 64), lambda i: (0, 0, 0)),
            ],
            out_specs=pl.BlockSpec((tb, 12, 12, 64), lambda i: (i, 0, 0, 0)),
            scratch_shapes=[
                pltpu.VMEM((624, 96), jnp.float32),     # conv1 out (3 shifts)
                pltpu.VMEM((24, 24, 64), jnp.float32),  # conv2 accumulator
            ],
        ),
        compiler_params=pltpu.CompilerParams(
            dimension_semantics=("parallel",),
            vmem_limit_bytes=_vmem_limit(),
        ),
    )(pw, w1w, b1w, w2a, b2)


# ----------------------------------------------------------------------------
# fc1 (K-tiled, bias folded into accumulator init) + relu, with fc2 fused into
# the last-K-step epilogue.  fc2's N is pre-padded 10 -> 128 so the output
# store is lane-dense; the real logits are sliced outside.
# ----------------------------------------------------------------------------
def _fc_head_kernel(a_ref, w1_ref, b1_ref, w2_ref, b2_ref, o_ref, acc_ref):
    @pl.when(pl.program_id(1) == 0)
    def _():
        acc_ref[...] = jnp.zeros(acc_ref.shape, acc_ref.dtype) + b1_ref[...]

    acc_ref[...] += jnp.dot(a_ref[...], w1_ref[...],
                            preferred_element_type=jnp.float32)

    @pl.when(pl.program_id(1) == pl.num_programs(1) - 1)
    def _():
        h = jnp.maximum(acc_ref[...], 0.0).astype(jnp.bfloat16)   # (tm, 128)
        logits = jnp.dot(h, w2_ref[...],
                         preferred_element_type=jnp.float32) + b2_ref[...]
        o_ref[...] = logits.astype(o_ref.dtype)


def fc_head(flat, w1, b1, w2p, b2p, *, tm=512, tk_target=2304):
    """flat: (M, 9216) bf16 -> padded logits (M, 128) f32 (cols >= 10 are junk)."""
    m, k = flat.shape
    n = w1.shape[1]
    tm = min(tm, _round_up(m, 8))
    mp = _round_up(m, tm)
    if mp != m:
        flat = jnp.pad(flat, ((0, mp - m), (0, 0)))
    tk = k
    if k > tk_target:
        for cand in (2304, 2048, 1536, 1152, 1024, 768, 512, 384, 256, 128):
            if cand <= tk_target and k % cand == 0:
                tk = cand
                break
    out = pl.pallas_call(
        _fc_head_kernel,
        out_shape=jax.ShapeDtypeStruct((mp, n), jnp.float32),
        grid_spec=pltpu.PrefetchScalarGridSpec(
            num_scalar_prefetch=0,
            grid=(mp // tm, k // tk),
            in_specs=[
                pl.BlockSpec((tm, tk), lambda i, kk: (i, kk)),
                pl.BlockSpec((tk, n), lambda i, kk: (kk, 0)),
                pl.BlockSpec((1, n), lambda i, kk: (0, 0)),
                pl.BlockSpec((n, n), lambda i, kk: (0, 0)),
                pl.BlockSpec((1, n), lambda i, kk: (0, 0)),
            ],
            out_specs=pl.BlockSpec((tm, n), lambda i, kk: (i, 0)),
            scratch_shapes=[pltpu.VMEM((tm, n), jnp.float32)],
        ),
        compiler_params=pltpu.CompilerParams(
            dimension_semantics=("parallel", "arbitrary"),
            vmem_limit_bytes=_vmem_limit(),
        ),
    )(flat, w1, b1, w2p, b2p)
    return out[:m] if mp != m else out


# ----------------------------------------------------------------------------
# Parameters: torch-layout init + one-time layout prep.
# ----------------------------------------------------------------------------
def init_params(key):
    """Deterministic torch-layout parameters (Conv2d: OIHW, Linear: (out, in))."""
    ks = jax.random.split(key, 8)

    def u(k, shape, fan_in):
        bound = 1.0 / np.sqrt(fan_in)
        return jax.random.uniform(k, shape, jnp.float32, -bound, bound)

    return {
        "conv1_w": u(ks[0], (32, 1, 3, 3), 1 * 9),
        "conv1_b": u(ks[1], (32,), 1 * 9),
        "conv2_w": u(ks[2], (64, 32, 3, 3), 32 * 9),
        "conv2_b": u(ks[3], (64,), 32 * 9),
        "fc1_w": u(ks[4], (128, 12 * 12 * 64), 12 * 12 * 64),
        "fc1_b": u(ks[5], (128,), 12 * 12 * 64),
        "fc2_w": u(ks[6], (10, 128), 128),
        "fc2_b": u(ks[7], (10,), 128),
    }


def prepare_params(params):
    """One-time layout prep:
      * conv1 -> "wide" (15, 96) weight so one matmul per image produces all
        three kw-shifted copies of the conv1 output needed by conv2:
          W1w[a*5+s, kj*32+c] = conv1_w[c, 0, a, s-kj]  if 0 <= s-kj < 3 else 0
      * conv2 OIHW -> (kh, kw*cin, cout): each kh tap is one K=96 matmul
      * fc1 weight transposed with the NCHW-flatten permutation folded in
      * fc2 weight/bias padded N 10 -> 128 (lane-dense output)
      * matmul weights stored as bf16 (f32 accumulation in-kernel).
    """
    k1 = params["conv1_w"][:, 0]                       # (32, 3, 3) [c, kh, kw]
    w1w = jnp.zeros((15, 96), jnp.float32)
    for kj in range(3):            # kw shift of the conv1 output copy
        for a in range(3):         # kh tap
            for bb in range(3):    # kw tap
                w1w = w1w.at[a * 5 + kj + bb,
                             kj * 32:(kj + 1) * 32].set(k1[:, a, bb])
    b1w = jnp.tile(params["conv1_b"], 3).reshape(1, 96)

    w2a = jnp.transpose(params["conv2_w"], (2, 3, 1, 0)).reshape(3, 96, 64)
    b2 = params["conv2_b"].reshape(1, 1, 64)

    wf1 = jnp.transpose(params["fc1_w"].reshape(128, 64, 12, 12),
                        (2, 3, 1, 0)).reshape(12 * 12 * 64, 128)
    wf2p = jnp.zeros((128, 128), jnp.float32).at[:, :10].set(params["fc2_w"].T)
    bf2p = jnp.zeros((1, 128), jnp.float32).at[0, :10].set(params["fc2_b"])

    return {
        "w1w": w1w.astype(jnp.bfloat16),
        "b1w": b1w.astype(jnp.float32),
        "w2a": w2a.astype(jnp.bfloat16),
        "b2": b2.astype(jnp.float32),
        "w_fc1": wf1.astype(jnp.bfloat16),
        "b_fc1": params["fc1_b"].reshape(1, 128).astype(jnp.float32),
        "w_fc2p": wf2p.astype(jnp.bfloat16),
        "b_fc2p": bf2p,
    }


# ----------------------------------------------------------------------------
# Forward pass.
# ----------------------------------------------------------------------------
def convnet_forward(prep, x_nchw):
    b = x_nchw.shape[0]
    assert x_nchw.shape[1:] == (1, 28, 28), x_nchw.shape

    # Images per grid step: amortize per-step overhead, keep >= 2 grid entries
    # so both v7x TensorCores get work.
    tb = max(1, min(8, b // 2))
    bp = _round_up(b, tb)
    if bp != b:
        x_nchw = jnp.pad(x_nchw, ((0, bp - b), (0, 0), (0, 0), (0, 0)))
    x = x_nchw[:, 0].astype(jnp.bfloat16)                       # (bp, 28, 28)

    # "Wide" conv1 patches: pw[b, h*24+w, a*5+s] = x[b, h+a, w+s]  (~19 KB/img)
    cols = [x[:, a:a + 26, s:s + 24] for a in range(3) for s in range(5)]
    pw = jnp.stack(cols, axis=-1).reshape(bp, 26 * 24, 15)

    # Fused conv1 -> relu -> conv2 -> relu -> 2x2 max-pool (VMEM-resident).
    pooled = fused_conv_pool(pw, prep["w1w"], prep["b1w"], prep["w2a"],
                             prep["b2"], tb=tb)                 # (bp, 12, 12, 64)

    # Dropout2d == identity in eval mode.
    # NHWC flatten; the NCHW permutation is folded into w_fc1.
    flat = pooled.reshape(bp, 12 * 12 * 64)

    logits = fc_head(flat, prep["w_fc1"], prep["b_fc1"],
                     prep["w_fc2p"], prep["b_fc2p"])            # (bp, 128)
    return logits[:b, :10]


# ----------------------------------------------------------------------------
# Pure-JAX reference (mirrors the PyTorch forward, eval-mode dropout).
# ----------------------------------------------------------------------------
def reference_forward(params, x_nchw):
    dn = ("NCHW", "OIHW", "NCHW")
    y = lax.conv_general_dilated(
        x_nchw, params["conv1_w"], (1, 1), "VALID", dimension_numbers=dn
    ) + params["conv1_b"][None, :, None, None]
    y = jnp.maximum(y, 0.0)
    y = lax.conv_general_dilated(
        y, params["conv2_w"], (1, 1), "VALID", dimension_numbers=dn
    ) + params["conv2_b"][None, :, None, None]
    y = jnp.maximum(y, 0.0)
    y = lax.reduce_window(
        y, -jnp.inf, lax.max, (1, 1, 2, 2), (1, 1, 2, 2), "VALID"
    )
    y = y.reshape(y.shape[0], -1)
    y = jnp.maximum(y @ params["fc1_w"].T + params["fc1_b"], 0.0)
    y = y @ params["fc2_w"].T + params["fc2_b"]
    return y


if __name__ == "__main__":
    params = init_params(jax.random.PRNGKey(42))
    # Input spatial size 28 is implied by the flatten: 12*12*64 after two
    # valid 3x3 convs and a 2x2 pool.
    x = jax.random.normal(jax.random.PRNGKey(0), (2, 1, 28, 28), jnp.float32)

    prep = prepare_params(params)
    fwd = jax.jit(convnet_forward)
    out = jax.block_until_ready(fwd(prep, x))
    assert out.shape == (2, 10), out.shape

    ref = reference_forward(params, x)
    # bf16 MXU operands (f32 accumulation) -> slightly looser tolerance than
    # the pure-f32 version; estimated logit error is ~2e-3.
    np.testing.assert_allclose(
        np.asarray(out), np.asarray(ref), rtol=2e-2, atol=2e-2
    )
    print("KERNEL_OK")
</pallas_src>

<mosaic_0001>
module attributes {stable_mosaic.version = 11 : i64} {
  func.func @_fused_conv_kernel(%arg0: i32, %arg1: memref<1x624x15xbf16, #tpu.memory_space<vmem>>, %arg2: memref<15x96xbf16, #tpu.memory_space<vmem>>, %arg3: memref<1x96xf32, #tpu.memory_space<vmem>>, %arg4: memref<3x96x64xbf16, #tpu.memory_space<vmem>>, %arg5: memref<1x1x64xf32, #tpu.memory_space<vmem>>, %arg6: memref<1x12x12x64xbf16, #tpu.memory_space<vmem>>, %arg7: memref<624x96xf32, #tpu.memory_space<vmem>>, %arg8: memref<24x24x64xf32, #tpu.memory_space<vmem>>) attributes {dimension_semantics = [#tpu.dimension_semantics<parallel>], iteration_bounds = array<i64: 2>, scalar_prefetch = 0 : i64, scratch_operands = 2 : i64, tpu.core_type = #tpu.core_type<tc>, window_params = [{transform_indices = @transform_0, window_bounds = array<i64: 1, 624, 15>}, {pipeline_mode = #tpu.pipeline_mode<synchronous>, transform_indices = @transform_1, window_bounds = array<i64: 15, 96>}, {pipeline_mode = #tpu.pipeline_mode<synchronous>, transform_indices = @transform_2, window_bounds = array<i64: 1, 96>}, {pipeline_mode = #tpu.pipeline_mode<synchronous>, transform_indices = @transform_3, window_bounds = array<i64: 3, 96, 64>}, {pipeline_mode = #tpu.pipeline_mode<synchronous>, transform_indices = @transform_4, window_bounds = array<i64: 1, 1, 64>}, {transform_indices = @transform_5, window_bounds = array<i64: 1, 12, 12, 64>}]} {
    %c0 = arith.constant 0 : index
    %c0_0 = arith.constant 0 : index
    %0 = vector.load %arg2[%c0, %c0_0] : memref<15x96xbf16, #tpu.memory_space<vmem>>, vector<15x96xbf16>
    %c0_1 = arith.constant 0 : index
    %c0_2 = arith.constant 0 : index
    %1 = vector.load %arg3[%c0_1, %c0_2] : memref<1x96xf32, #tpu.memory_space<vmem>>, vector<1x96xf32>
    %c0_3 = arith.constant 0 : index
    %c0_4 = arith.constant 0 : index
    %c0_5 = arith.constant 0 : index
    %2 = vector.load %arg5[%c0_3, %c0_4, %c0_5] : memref<1x1x64xf32, #tpu.memory_space<vmem>>, vector<1x1x64xf32>
    %c0_6 = arith.constant 0 : index
    %c0_7 = arith.constant 0 : index
    %c0_8 = arith.constant 0 : index
    %3 = vector.load %arg1[%c0_6, %c0_7, %c0_8] : memref<1x624x15xbf16, #tpu.memory_space<vmem>>, vector<1x624x15xbf16>
    %4 = vector.shape_cast %3 : vector<1x624x15xbf16> to vector<624x15xbf16>
    %cst = arith.constant dense<0.000000e+00> : vector<624x96xf32>
    %5 = tpu.matmul %4, %0, %cst {dimension_numbers = #tpu.dot_dimension_numbers<[1], [0], [0], [1], [0, 0, 1, 1], [], []>} : vector<624x15xbf16>, vector<15x96xbf16>, vector<624x96xf32> -> vector<624x96xf32>
    %6 = vector.broadcast %1 : vector<1x96xf32> to vector<624x96xf32>
    %7 = arith.addf %5, %6 : vector<624x96xf32>
    %cst_9 = arith.constant 0.000000e+00 : f32
    %8 = vector.broadcast %cst_9 : f32 to vector<624x96xf32>
    %9 = arith.maximumf %7, %8 : vector<624x96xf32>
    %c0_10 = arith.constant 0 : index
    %c0_11 = arith.constant 0 : index
    %10 = vector.load %arg7[%c0_10, %c0_11] : memref<624x96xf32, #tpu.memory_space<vmem>>, vector<624x96xf32>
    tpu.vector_store %arg7[%c0_10, %c0_11], %9 {strides = array<i32>} : memref<624x96xf32, #tpu.memory_space<vmem>>, vector<624x96xf32>,
    %cst_12 = arith.constant 0.000000e+00 : f32
    %11 = vector.broadcast %cst_12 : f32 to vector<24x24x64xf32>
    %12 = vector.broadcast %2 : vector<1x1x64xf32> to vector<24x24x64xf32>
    %13 = arith.addf %11, %12 : vector<24x24x64xf32>
    %c0_13 = arith.constant 0 : index
    %c0_14 = arith.constant 0 : index
    %c0_15 = arith.constant 0 : index
    %14 = vector.load %arg8[%c0_13, %c0_14, %c0_15] : memref<24x24x64xf32, #tpu.memory_space<vmem>>, vector<24x24x64xf32>
    tpu.vector_store %arg8[%c0_13, %c0_14, %c0_15], %13 {strides = array<i32>} : memref<24x24x64xf32, #tpu.memory_space<vmem>>, vector<24x24x64xf32>,
    %c0_16 = arith.constant 0 : index
    %c0_17 = arith.constant 0 : index
    %15 = vector.load %arg7[%c0_16, %c0_17] : memref<624x96xf32, #tpu.memory_space<vmem>>, vector<576x96xf32>
    %16 = arith.truncf %15 : vector<576x96xf32> to vector<576x96xbf16>
    %c0_18 = arith.constant 0 : index
    %c0_19 = arith.constant 0 : index
    %c0_20 = arith.constant 0 : index
    %17 = vector.load %arg8[%c0_18, %c0_19, %c0_20] : memref<24x24x64xf32, #tpu.memory_space<vmem>>, vector<24x24x64xf32>
    %c0_21 = arith.constant 0 : index
    %c0_22 = arith.constant 0 : index
    %c0_23 = arith.constant 0 : index
    %18 = vector.load %arg4[%c0_21, %c0_22, %c0_23] : memref<3x96x64xbf16, #tpu.memory_space<vmem>>, vector<1x96x64xbf16>
    %19 = vector.shape_cast %18 : vector<1x96x64xbf16> to vector<96x64xbf16>
    %cst_24 = arith.constant dense<0.000000e+00> : vector<576x64xf32>
    %20 = tpu.matmul %16, %19, %cst_24 {dimension_numbers = #tpu.dot_dimension_numbers<[1], [0], [0], [1], [0, 0, 1, 1], [], []>} : vector<576x96xbf16>, vector<96x64xbf16>, vector<576x64xf32> -> vector<576x64xf32>
    %21 = vector.shape_cast %20 : vector<576x64xf32> to vector<24x24x64xf32>
    %22 = arith.addf %17, %21 : vector<24x24x64xf32>
    %c0_25 = arith.constant 0 : index
    %c0_26 = arith.constant 0 : index
    %c0_27 = arith.constant 0 : index
    %23 = vector.load %arg8[%c0_25, %c0_26, %c0_27] : memref<24x24x64xf32, #tpu.memory_space<vmem>>, vector<24x24x64xf32>
    tpu.vector_store %arg8[%c0_25, %c0_26, %c0_27], %22 {strides = array<i32>} : memref<24x24x64xf32, #tpu.memory_space<vmem>>, vector<24x24x64xf32>,
    %c24 = arith.constant 24 : index
    %c0_28 = arith.constant 0 : index
    %24 = vector.load %arg7[%c24, %c0_28] : memref<624x96xf32, #tpu.memory_space<vmem>>, vector<576x96xf32>
    %25 = arith.truncf %24 : vector<576x96xf32> to vector<576x96xbf16>
    %c0_29 = arith.constant 0 : index
    %c0_30 = arith.constant 0 : index
    %c0_31 = arith.constant 0 : index
    %26 = vector.load %arg8[%c0_29, %c0_30, %c0_31] : memref<24x24x64xf32, #tpu.memory_space<vmem>>, vector<24x24x64xf32>
    %c1 = arith.constant 1 : index
    %c0_32 = arith.constant 0 : index
    %c0_33 = arith.constant 0 : index
    %27 = vector.load %arg4[%c1, %c0_32, %c0_33] : memref<3x96x64xbf16, #tpu.memory_space<vmem>>, vector<1x96x64xbf16>
    %28 = vector.shape_cast %27 : vector<1x96x64xbf16> to vector<96x64xbf16>
    %cst_34 = arith.constant dense<0.000000e+00> : vector<576x64xf32>
    %29 = tpu.matmul %25, %28, %cst_34 {dimension_numbers = #tpu.dot_dimension_numbers<[1], [0], [0], [1], [0, 0, 1, 1], [], []>} : vector<576x96xbf16>, vector<96x64xbf16>, vector<576x64xf32> -> vector<576x64xf32>
    %30 = vector.shape_cast %29 : vector<576x64xf32> to vector<24x24x64xf32>
    %31 = arith.addf %26, %30 : vector<24x24x64xf32>
    %c0_35 = arith.constant 0 : index
    %c0_36 = arith.constant 0 : index
    %c0_37 = arith.constant 0 : index
    %32 = vector.load %arg8[%c0_35, %c0_36, %c0_37] : memref<24x24x64xf32, #tpu.memory_space<vmem>>, vector<24x24x64xf32>
    tpu.vector_store %arg8[%c0_35, %c0_36, %c0_37], %31 {strides = array<i32>} : memref<24x24x64xf32, #tpu.memory_space<vmem>>, vector<24x24x64xf32>,
    %c48 = arith.constant 48 : index
    %c0_38 = arith.constant 0 : index
    %33 = vector.load %arg7[%c48, %c0_38] : memref<624x96xf32, #tpu.memory_space<vmem>>, vector<576x96xf32>
    %34 = arith.truncf %33 : vector<576x96xf32> to vector<576x96xbf16>
    %c0_39 = arith.constant 0 : index
    %c0_40 = arith.constant 0 : index
    %c0_41 = arith.constant 0 : index
    %35 = vector.load %arg8[%c0_39, %c0_40, %c0_41] : memref<24x24x64xf32, #tpu.memory_space<vmem>>, vector<24x24x64xf32>
    %c2 = arith.constant 2 : index
    %c0_42 = arith.constant 0 : index
    %c0_43 = arith.constant 0 : index
    %36 = vector.load %arg4[%c2, %c0_42, %c0_43] : memref<3x96x64xbf16, #tpu.memory_space<vmem>>, vector<1x96x64xbf16>
    %37 = vector.shape_cast %36 : vector<1x96x64xbf16> to vector<96x64xbf16>
    %cst_44 = arith.constant dense<0.000000e+00> : vector<576x64xf32>
    %38 = tpu.matmul %34, %37, %cst_44 {dimension_numbers = #tpu.dot_dimension_numbers<[1], [0], [0], [1], [0, 0, 1, 1], [], []>} : vector<576x96xbf16>, vector<96x64xbf16>, vector<576x64xf32> -> vector<576x64xf32>
    %39 = vector.shape_cast %38 : vector<576x64xf32> to vector<24x24x64xf32>
    %40 = arith.addf %35, %39 : vector<24x24x64xf32>
    %c0_45 = arith.constant 0 : index
    %c0_46 = arith.constant 0 : index
    %c0_47 = arith.constant 0 : index
    %41 = vector.load %arg8[%c0_45, %c0_46, %c0_47] : memref<24x24x64xf32, #tpu.memory_space<vmem>>, vector<24x24x64xf32>
    tpu.vector_store %arg8[%c0_45, %c0_46, %c0_47], %40 {strides = array<i32>} : memref<24x24x64xf32, #tpu.memory_space<vmem>>, vector<24x24x64xf32>,
    %c0_48 = arith.constant 0 : index
    %c0_49 = arith.constant 0 : index
    %c0_50 = arith.constant 0 : index
    %42 = tpu.strided_load %arg8[%c0_48, %c0_49, %c0_50] {strides = array<i32: 1, 2, 1>} : memref<24x24x64xf32, #tpu.memory_space<vmem>>, vector<24x12x64xf32>
    %c0_51 = arith.constant 0 : index
    %c1_52 = arith.constant 1 : index
    %c0_53 = arith.constant 0 : index
    %43 = tpu.strided_load %arg8[%c0_51, %c1_52, %c0_53] {strides = array<i32: 1, 2, 1>} : memref<24x24x64xf32, #tpu.memory_space<vmem>>, vector<24x12x64xf32>
    %44 = arith.maximumf %42, %43 : vector<24x12x64xf32>
    %45 = vector.shape_cast %44 : vector<24x12x64xf32> to vector<12x2x12x64xf32>
    %cst_54 = arith.constant dense<0xFF800000> : vector<12x12x64xf32>
    %46 = vector.multi_reduction <maximumf>, %45, %cst_54 [1] : vector<12x2x12x64xf32> to vector<12x12x64xf32>
    %cst_55 = arith.constant 0.000000e+00 : f32
    %47 = vector.broadcast %cst_55 : f32 to vector<12x12x64xf32>
    %48 = arith.maximumf %46, %47 : vector<12x12x64xf32>
    %49 = arith.truncf %48 : vector<12x12x64xf32> to vector<12x12x64xbf16>
    %c0_56 = arith.constant 0 : index
    %c0_57 = arith.constant 0 : index
    %c0_58 = arith.constant 0 : index
    %c0_59 = arith.constant 0 : index
    %50 = vector.load %arg6[%c0_56, %c0_57, %c0_58, %c0_59] : memref<1x12x12x64xbf16, #tpu.memory_space<vmem>>, vector<1x12x12x64xbf16>
    %51 = vector.shape_cast %50 : vector<1x12x12x64xbf16> to vector<12x12x64xbf16>
    %52 = vector.shape_cast %49 : vector<12x12x64xbf16> to vector<1x12x12x64xbf16>
    tpu.vector_store %arg6[%c0_56, %c0_57, %c0_58, %c0_59], %52 {strides = array<i32>} : memref<1x12x12x64xbf16, #tpu.memory_space<vmem>>, vector<1x12x12x64xbf16>,
    return
  }
  func.func @transform_0(%arg0: i32) -> (i32, i32, i32) {
    %c0_i32 = arith.constant 0 : i32
    %c0_i32_0 = arith.constant 0 : i32
    %c0_i32_1 = arith.constant 0 : i32
    return %arg0, %c0_i32, %c0_i32_0 : i32, i32, i32
  }
  func.func @transform_1(%arg0: i32) -> (i32, i32) {
    %c0_i32 = arith.constant 0 : i32
    %c0_i32_0 = arith.constant 0 : i32
    %c0_i32_1 = arith.constant 0 : i32
    return %c0_i32, %c0_i32_0 : i32, i32
  }
  func.func @transform_2(%arg0: i32) -> (i32, i32) {
    %c0_i32 = arith.constant 0 : i32
    %c0_i32_0 = arith.constant 0 : i32
    %c0_i32_1 = arith.constant 0 : i32
    return %c0_i32, %c0_i32_0 : i32, i32
  }
  func.func @transform_3(%arg0: i32) -> (i32, i32, i32) {
    %c0_i32 = arith.constant 0 : i32
    %c0_i32_0 = arith.constant 0 : i32
    %c0_i32_1 = arith.constant 0 : i32
    %c0_i32_2 = arith.constant 0 : i32
    return %c0_i32, %c0_i32_0, %c0_i32_1 : i32, i32, i32
  }
  func.func @transform_4(%arg0: i32) -> (i32, i32, i32) {
    %c0_i32 = arith.constant 0 : i32
    %c0_i32_0 = arith.constant 0 : i32
    %c0_i32_1 = arith.constant 0 : i32
    %c0_i32_2 = arith.constant 0 : i32
    return %c0_i32, %c0_i32_0, %c0_i32_1 : i32, i32, i32
  }
  func.func @transform_5(%arg0: i32) -> (i32, i32, i32, i32) {
    %c0_i32 = arith.constant 0 : i32
    %c0_i32_0 = arith.constant 0 : i32
    %c0_i32_1 = arith.constant 0 : i32
    %c0_i32_2 = arith.constant 0 : i32
    return %arg0, %c0_i32, %c0_i32_0, %c0_i32_1 : i32, i32, i32, i32
  }
}

module attributes {stable_mosaic.version = 11 : i64} {
  func.func @_fc_head_kernel(%arg0: i32, %arg1: i32, %arg2: memref<8x2304xbf16, #tpu.memory_space<vmem>>, %arg3: memref<2304x128xbf16, #tpu.memory_space<vmem>>, %arg4: memref<1x128xf32, #tpu.memory_space<vmem>>, %arg5: memref<128x128xbf16, #tpu.memory_space<vmem>>, %arg6: memref<1x128xf32, #tpu.memory_space<vmem>>, %arg7: memref<8x128xf32, #tpu.memory_space<vmem>>, %arg8: memref<8x128xf32, #tpu.memory_space<vmem>>) attributes {dimension_semantics = [#tpu.dimension_semantics<parallel>, #tpu.dimension_semantics<arbitrary>], iteration_bounds = array<i64: 1, 4>, scalar_prefetch = 0 : i64, scratch_operands = 1 : i64, tpu.core_type = #tpu.core_type<tc>, window_params = [{transform_indices = @transform_0, window_bounds = array<i64: 8, 2304>}, {transform_indices = @transform_1, window_bounds = array<i64: 2304, 128>}, {pipeline_mode = #tpu.pipeline_mode<synchronous>, transform_indices = @transform_2, window_bounds = array<i64: 1, 128>}, {pipeline_mode = #tpu.pipeline_mode<synchronous>, transform_indices = @transform_3, window_bounds = array<i64: 128, 128>}, {pipeline_mode = #tpu.pipeline_mode<synchronous>, transform_indices = @transform_4, window_bounds = array<i64: 1, 128>}, {transform_indices = @transform_5, window_bounds = array<i64: 8, 128>}]} {
    %c0_i32 = arith.constant 0 : i32
    %0 = arith.cmpi eq, %arg1, %c0_i32 : i32
    %1 = arith.extui %0 : i1 to i32
    %c0_i32_0 = arith.constant 0 : i32
    %2 = arith.cmpi ne, %1, %c0_i32_0 : i32
    scf.if %2 {
      %cst_9 = arith.constant 0.000000e+00 : f32
      %12 = vector.broadcast %cst_9 : f32 to vector<8x128xf32>
      %c0_10 = arith.constant 0 : index
      %c0_11 = arith.constant 0 : index
      %13 = vector.load %arg4[%c0_10, %c0_11] : memref<1x128xf32, #tpu.memory_space<vmem>>, vector<1x128xf32>
      %14 = vector.broadcast %13 : vector<1x128xf32> to vector<8x128xf32>
      %15 = arith.addf %12, %14 : vector<8x128xf32>
      %c0_12 = arith.constant 0 : index
      %c0_13 = arith.constant 0 : index
      %16 = vector.load %arg8[%c0_12, %c0_13] : memref<8x128xf32, #tpu.memory_space<vmem>>, vector<8x128xf32>
      tpu.vector_store %arg8[%c0_12, %c0_13], %15 {strides = array<i32>} : memref<8x128xf32, #tpu.memory_space<vmem>>, vector<8x128xf32>,
    } else {
    }
    %c0 = arith.constant 0 : index
    %c0_1 = arith.constant 0 : index
    %3 = vector.load %arg8[%c0, %c0_1] : memref<8x128xf32, #tpu.memory_space<vmem>>, vector<8x128xf32>
    %c0_2 = arith.constant 0 : index
    %c0_3 = arith.constant 0 : index
    %4 = vector.load %arg2[%c0_2, %c0_3] : memref<8x2304xbf16, #tpu.memory_space<vmem>>, vector<8x2304xbf16>
    %c0_4 = arith.constant 0 : index
    %c0_5 = arith.constant 0 : index
    %5 = vector.load %arg3[%c0_4, %c0_5] : memref<2304x128xbf16, #tpu.memory_space<vmem>>, vector<2304x128xbf16>
    %cst = arith.constant dense<0.000000e+00> : vector<8x128xf32>
    %6 = tpu.matmul %4, %5, %cst {dimension_numbers = #tpu.dot_dimension_numbers<[1], [0], [0], [1], [0, 0, 1, 1], [], []>} : vector<8x2304xbf16>, vector<2304x128xbf16>, vector<8x128xf32> -> vector<8x128xf32>
    %7 = arith.addf %3, %6 : vector<8x128xf32>
    %c0_6 = arith.constant 0 : index
    %c0_7 = arith.constant 0 : index
    %8 = vector.load %arg8[%c0_6, %c0_7] : memref<8x128xf32, #tpu.memory_space<vmem>>, vector<8x128xf32>
    tpu.vector_store %arg8[%c0_6, %c0_7], %7 {strides = array<i32>} : memref<8x128xf32, #tpu.memory_space<vmem>>, vector<8x128xf32>,
    %c3_i32 = arith.constant 3 : i32
    %9 = arith.cmpi eq, %arg1, %c3_i32 : i32
    %10 = arith.extui %9 : i1 to i32
    %c0_i32_8 = arith.constant 0 : i32
    %11 = arith.cmpi ne, %10, %c0_i32_8 : i32
    scf.if %11 {
      %c0_9 = arith.constant 0 : index
      %c0_10 = arith.constant 0 : index
      %12 = vector.load %arg8[%c0_9, %c0_10] : memref<8x128xf32, #tpu.memory_space<vmem>>, vector<8x128xf32>
      %cst_11 = arith.constant 0.000000e+00 : f32
      %13 = vector.broadcast %cst_11 : f32 to vector<8x128xf32>
      %14 = arith.maximumf %12, %13 : vector<8x128xf32>
      %15 = arith.truncf %14 : vector<8x128xf32> to vector<8x128xbf16>
      %c0_12 = arith.constant 0 : index
      %c0_13 = arith.constant 0 : index
      %16 = vector.load %arg5[%c0_12, %c0_13] : memref<128x128xbf16, #tpu.memory_space<vmem>>, vector<128x128xbf16>
      %cst_14 = arith.constant dense<0.000000e+00> : vector<8x128xf32>
      %17 = tpu.matmul %15, %16, %cst_14 {dimension_numbers = #tpu.dot_dimension_numbers<[1], [0], [0], [1], [0, 0, 1, 1], [], []>} : vector<8x128xbf16>, vector<128x128xbf16>, vector<8x128xf32> -> vector<8x128xf32>
      %c0_15 = arith.constant 0 : index
      %c0_16 = arith.constant 0 : index
      %18 = vector.load %arg6[%c0_15, %c0_16] : memref<1x128xf32, #tpu.memory_space<vmem>>, vector<1x128xf32>
      %19 = vector.broadcast %18 : vector<1x128xf32> to vector<8x128xf32>
      %20 = arith.addf %17, %19 : vector<8x128xf32>
      %c0_17 = arith.constant 0 : index
      %c0_18 = arith.constant 0 : index
      %21 = vector.load %arg7[%c0_17, %c0_18] : memref<8x128xf32, #tpu.memory_space<vmem>>, vector<8x128xf32>
      tpu.vector_store %arg7[%c0_17, %c0_18], %20 {strides = array<i32>} : memref<8x128xf32, #tpu.memory_space<vmem>>, vector<8x128xf32>,
    } else {
    }
    return
  }
  func.func @transform_0(%arg0: i32, %arg1: i32) -> (i32, i32) {
    %c0_i32 = arith.constant 0 : i32
    return %arg0, %arg1 : i32, i32
  }
  func.func @transform_1(%arg0: i32, %arg1: i32) -> (i32, i32) {
    %c0_i32 = arith.constant 0 : i32
    %c0_i32_0 = arith.constant 0 : i32
    return %arg1, %c0_i32 : i32, i32
  }
  func.func @transform_2(%arg0: i32, %arg1: i32) -> (i32, i32) {
    %c0_i32 = arith.constant 0 : i32
    %c0_i32_0 = arith.constant 0 : i32
    %c0_i32_1 = arith.constant 0 : i32
    return %c0_i32, %c0_i32_0 : i32, i32
  }
  func.func @transform_3(%arg0: i32, %arg1: i32) -> (i32, i32) {
    %c0_i32 = arith.constant 0 : i32
    %c0_i32_0 = arith.constant 0 : i32
    %c0_i32_1 = arith.constant 0 : i32
    return %c0_i32, %c0_i32_0 : i32, i32
  }
  func.func @transform_4(%arg0: i32, %arg1: i32) -> (i32, i32) {
    %c0_i32 = arith.constant 0 : i32
    %c0_i32_0 = arith.constant 0 : i32
    %c0_i32_1 = arith.constant 0 : i32
    return %c0_i32, %c0_i32_0 : i32, i32
  }
  func.func @transform_5(%arg0: i32, %arg1: i32) -> (i32, i32) {
    %c0_i32 = arith.constant 0 : i32
    %c0_i32_0 = arith.constant 0 : i32
    return %arg0, %c0_i32 : i32, i32
  }
}

</mosaic_0001>

<llo_original>
// kernel: convnet_forward.3
$region0: #{convnet_forward.3}
  #allocation0 [shape = 'u32[]', space=smem, size = 0x4, offset = 0x4, fixed_abs, tag = 'smem constant byte address 0x4 - core index']
  #allocation1 [shape = 'u32[144,128]{1,0:T(1,128)}', space=vmem, size = 0x12000, scoped, tag = 'internal scratch']
  #allocation2 [shape = 'f32[8,128]{1,0:T(8,128)}', space=vmem, size = 0x1000, scoped, tag = 'scratch operand']
  %s0 = inlined_call_operand.vmem [shape: bf16[8,9216], index: 0, kind: input, shape index: {}]
  %s1 = inlined_call_operand.vmem [shape: bf16[9216,128], index: 1, kind: input, shape index: {}]
  %s2 = inlined_call_operand.vmem [shape: f32[1,128], index: 2, kind: input, shape index: {}]
  %s3 = inlined_call_operand.vmem [shape: bf16[128,128], index: 3, kind: input, shape index: {}]
  %s4 = inlined_call_operand.vmem [shape: f32[1,128], index: 4, kind: input, shape index: {}]
  %s5 = inlined_call_operand.vmem [shape: f32[8,128], index: 5, kind: output, shape index: {}]
  %s6 = sld [smem:[#allocation0]]
  $region61: #{convnet_forward.3} parent=0
    _
  %s8 = ssub.s32 1, %s6
  %s9 = scalar_select 0, %s8, %s6
  loop: start=0, step=1, limit=6
  $region2: #{convnet_forward.3} parent=0 // loop_pre_header
    _
  $region3: #{convnet_forward.3} parent=0 // loop_header
    %s11 = sphi 0, %s15
    %p12 = scmp.ge.s32.totalorder %s11, 6
    %s18 = sphi 0, %s30
    %s19 = sphi 0, %s26
    %s20 = sphi 0, %s18
    %s21 = sphi 0, %s19
    %s22 = sphi 0, %s20
    %s23 = sphi 0, %s21
    %s35 = sphi 0, %s37
    %s38 = sphi 0, %s35
    %s39 = sphi 0, %s38
    %s55 = sphi 0, %s39
    %s61 = sphi 0, %s63
    %s64 = sphi 0, %s61
    %s65 = sphi 0, %s64
    %s81 = sphi 0, %s65
    %s85 = sphi 0, %s85
    %s87 = sphi 0, %s85
    %s88 = sphi 0, %s87
    %s102 = sphi 0, %s88
    %s106 = sphi 0, %s106
    %s108 = sphi 0, %s106
    %s109 = sphi 0, %s108
    %s123 = sphi 0, %s109
    %s127 = sphi 0, %s127
    %s129 = sphi 0, %s127
    %s130 = sphi 0, %s129
    %s144 = sphi 0, %s130
    %s150 = sphi 0, %s152
    %s153 = sphi 0, %s150
    %s154 = sphi 0, %s153
    %s170 = sphi 0, %s154
  $region4: #{convnet_forward.3} parent=0 // loop_header_branch
    %14 = sbr.rel (%p12) target = $region8
  $region5: #{convnet_forward.3} parent=0 // loop_body
    %s16 = ssub.s32 %s11, 1
    %s17 = ssub.s32 %s11, 2
    %s24 = sadd.s32 1, %s19
    %p25 = scmp.ge.s32.totalorder %s24, 4
    %s26 = scalar_select %p25, 0, %s24
    %s27 = sadd.s32 1, %s18
    %s28 = scalar_select %p25, %s27, %s18
    %p29 = scmp.ge.s32.totalorder %s28, 1
    %s30 = scalar_select %p29, 0, %s28
    %s31 = ssub.s32 %s18, %s30
    %s32 = ssub.s32 %s19, %s26
    %s33 = sor.u32 %s31, %s32
    %p34 = scmp.eq.s32.totalorder %s33, 0
    %s36 = sadd.s32 %s35, 1
    %s37 = scalar_select %p34, %s35, %s36
    %p40 = pneg %p34
    %p41 = scmp.eq.s32.totalorder %s11, 3
    %p42 = por %p40, %p41
    %p43 = scmp.ne.s32.totalorder %s35, %s38
    %p44 = scmp.eq.s32.totalorder %s11, 0
    %p45 = por %p43, %p44
    %p46 = scmp.ne.s32.totalorder %s35, %s38
    %p47 = scmp.eq.s32.totalorder %s16, 3
    %p48 = por %p46, %p47
    %p49 = scmp.ne.s32.totalorder %s38, %s39
    %p50 = scmp.eq.s32.totalorder %s16, 0
    %p51 = por %p49, %p50
    %p52 = scmp.ne.s32.totalorder %s38, %s39
    %p53 = scmp.eq.s32.totalorder %s17, 3
    %p54 = por %p52, %p53
    %p56 = scmp.ne.s32.totalorder %s39, %s55
    %p57 = scmp.eq.s32.totalorder %s17, 0
    %p58 = por %p56, %p57
    %s59 = ssub.s32 %s19, %s26
    %p60 = scmp.eq.s32.totalorder %s59, 0
    %s62 = sadd.s32 %s61, 1
    %s63 = scalar_select %p60, %s61, %s62
    %p66 = pneg %p60
    %p67 = scmp.eq.s32.totalorder %s11, 3
    %p68 = por %p66, %p67
    %p69 = scmp.ne.s32.totalorder %s61, %s64
    %p70 = scmp.eq.s32.totalorder %s11, 0
    %p71 = por %p69, %p70
    %p72 = scmp.ne.s32.totalorder %s61, %s64
    %p73 = scmp.eq.s32.totalorder %s16, 3
    %p74 = por %p72, %p73
    %p75 = scmp.ne.s32.totalorder %s64, %s65
    %p76 = scmp.eq.s32.totalorder %s16, 0
    %p77 = por %p75, %p76
    %p78 = scmp.ne.s32.totalorder %s64, %s65
    %p79 = scmp.eq.s32.totalorder %s17, 3
    %p80 = por %p78, %p79
    %p82 = scmp.ne.s32.totalorder %s65, %s81
    %p83 = scmp.eq.s32.totalorder %s17, 0
    %p84 = por %p82, %p83
    %s86 = sadd.s32 %s85, 1
    %p89 = scmp.eq.s32.totalorder %s11, 3
    %p90 = scmp.ne.s32.totalorder %s85, %s87
    %p91 = scmp.eq.s32.totalorder %s11, 0
    %p92 = por %p90, %p91
    %p93 = scmp.ne.s32.totalorder %s85, %s87
    %p94 = scmp.eq.s32.totalorder %s16, 3
    %p95 = por %p93, %p94
    %p96 = scmp.ne.s32.totalorder %s87, %s88
    %p97 = scmp.eq.s32.totalorder %s16, 0
    %p98 = por %p96, %p97
    %p99 = scmp.ne.s32.totalorder %s87, %s88
    %p100 = scmp.eq.s32.totalorder %s17, 3
    %p101 = por %p99, %p100
    %p103 = scmp.ne.s32.totalorder %s88, %s102
    %p104 = scmp.eq.s32.totalorder %s17, 0
    %p105 = por %p103, %p104
    %s107 = sadd.s32 %s106, 1
    %p110 = scmp.eq.s32.totalorder %s11, 3
    %p111 = scmp.ne.s32.totalorder %s106, %s108
    %p112 = scmp.eq.s32.totalorder %s11, 0
    %p113 = por %p111, %p112
    %p114 = scmp.ne.s32.totalorder %s106, %s108
    %p115 = scmp.eq.s32.totalorder %s16, 3
    %p116 = por %p114, %p115
    %p117 = scmp.ne.s32.totalorder %s108, %s109
    %p118 = scmp.eq.s32.totalorder %s16, 0
    %p119 = por %p117, %p118
    %p120 = scmp.ne.s32.totalorder %s108, %s109
    %p121 = scmp.eq.s32.totalorder %s17, 3
    %p122 = por %p120, %p121
    %p124 = scmp.ne.s32.totalorder %s109, %s123
    %p125 = scmp.eq.s32.totalorder %s17, 0
    %p126 = por %p124, %p125
    %s128 = sadd.s32 %s127, 1
    %p131 = scmp.eq.s32.totalorder %s11, 3
    %p132 = scmp.ne.s32.totalorder %s127, %s129
    %p133 = scmp.eq.s32.totalorder %s11, 0
    %p134 = por %p132, %p133
    %p135 = scmp.ne.s32.totalorder %s127, %s129
    %p136 = scmp.eq.s32.totalorder %s16, 3
    %p137 = por %p135, %p136
    %p138 = scmp.ne.s32.totalorder %s129, %s130
    %p139 = scmp.eq.s32.totalorder %s16, 0
    %p140 = por %p138, %p139
    %p141 = scmp.ne.s32.totalorder %s129, %s130
    %p142 = scmp.eq.s32.totalorder %s17, 3
    %p143 = por %p141, %p142
    %p145 = scmp.ne.s32.totalorder %s130, %s144
    %p146 = scmp.eq.s32.totalorder %s17, 0
    %p147 = por %p145, %p146
    %s148 = ssub.s32 %s18, %s30
    %p149 = scmp.eq.s32.totalorder %s148, 0
    %s151 = sadd.s32 %s150, 1
    %s152 = scalar_select %p149, %s150, %s151
    %p155 = pneg %p149
    %p156 = scmp.eq.s32.totalorder %s11, 3
    %p157 = por %p155, %p156
    %p158 = scmp.ne.s32.totalorder %s150, %s153
    %p159 = scmp.eq.s32.totalorder %s11, 0
    %p160 = por %p158, %p159
    %p161 = scmp.ne.s32.totalorder %s150, %s153
    %p162 = scmp.eq.s32.totalorder %s16, 3
    %p163 = por %p161, %p162
    %p164 = scmp.ne.s32.totalorder %s153, %s154
    %p165 = scmp.eq.s32.totalorder %s16, 0
    %p166 = por %p164, %p165
    %p167 = scmp.ne.s32.totalorder %s153, %s154
    %p168 = scmp.eq.s32.totalorder %s17, 3
    %p169 = por %p167, %p168
    %p171 = scmp.ne.s32.totalorder %s154, %s170
    %p172 = scmp.eq.s32.totalorder %s17, 0
    %p173 = por %p171, %p172
    %p174 = scmp.le.s32.totalorder 1, %s11
    %p175 = scmp.lt.s32.totalorder %s11, 5
    %p176 = pnand %p174, %p175
    %p177 = pneg %p176
    // Predicated region
    $region9: #{convnet_forward.3} parent=5 // pred_check
      _
    $region10: #{convnet_forward.3} parent=5 // pred_check_branch
      %179 = sbr.rel (%p176) target = $region12
    $region11: #{convnet_forward.3} parent=5 // pred_region
      %s180 = ssub.s32 %s11, 1
      // Predicated region
      $region13: #{convnet_forward.3} parent=11 // pred_check
        %p181 = pneg %p98
      $region14: #{convnet_forward.3} parent=11 // pred_check_branch
        %183 = sbr.rel (%p181) target = $region16
      $region15: #{convnet_forward.3} parent=11 // pred_region
        _
      $region16: #{convnet_forward.3} parent=11 // pred_fallthru
        _
      // Predicated region
      $region17: #{convnet_forward.3} parent=11 // pred_check
        %p184 = pneg %p119
      $region18: #{convnet_forward.3} parent=11 // pred_check_branch
        %186 = sbr.rel (%p184) target = $region20
      $region19: #{convnet_forward.3} parent=11 // pred_region
        _
      $region20: #{convnet_forward.3} parent=11 // pred_fallthru
        _
      // Predicated region
      $region21: #{convnet_forward.3} parent=11 // pred_check
        %p187 = pneg %p140
      $region22: #{convnet_forward.3} parent=11 // pred_check_branch
        %189 = sbr.rel (%p187) target = $region24
      $region23: #{convnet_forward.3} parent=11 // pred_region
        _
      $region24: #{convnet_forward.3} parent=11 // pred_fallthru
        _
    $region12: #{convnet_forward.3} parent=5 // pred_fallthru
      _
    %p190 = scmp.lt.s32.totalorder %s11, 4
    // Predicated region
    $region25: #{convnet_forward.3} parent=5 // pred_check
      %p191 = pneg %p190
    $region26: #{convnet_forward.3} parent=5 // pred_check_branch
      %193 = sbr.rel (%p191) target = $region28
    $region27: #{convnet_forward.3} parent=5 // pred_region
      // Predicated region
      $region29: #{convnet_forward.3} parent=27 // pred_check
        %p194 = pneg %p45
      $region30: #{convnet_forward.3} parent=27 // pred_check_branch
        %196 = sbr.rel (%p194) target = $region32
      $region31: #{convnet_forward.3} parent=27 // pred_region
        %s197 = smul.u32 18, %s19
        %p198 = scmp.lt.s32.totalorder %s18, 0
        %s199 = scalar_select %p198, %s18, 0
        %p200 = scmp.lt.s32.totalorder %s197, 71
        %s201 = scalar_select %p200, %s197, 71
        %s202 = smul.addr %s199, 72
        %s203 = sadd.s32 %s201, %s202
        %s204 = smul.addr %s203, 4
        %s205 = scalar_lea.vmem %s0, %s204
        %s206 = smul.u32 18, %s19
      $region32: #{convnet_forward.3} parent=27 // pred_fallthru
        _
      // Predicated region
      $region33: #{convnet_forward.3} parent=27 // pred_check
        %p207 = pneg %p71
      $region34: #{convnet_forward.3} parent=27 // pred_check_branch
        %209 = sbr.rel (%p207) target = $region36
      $region35: #{convnet_forward.3} parent=27 // pred_region
        %s210 = smul.u32 288, %s19
        %p211 = scmp.lt.s32.totalorder %s210, 1151
        %s212 = scalar_select %p211, %s210, 1151
        %s213 = smul.addr %s212, 4
        %s214 = scalar_lea.vmem %s1, %s213
        %s215 = smul.u32 288, %s19
      $region36: #{convnet_forward.3} parent=27 // pred_fallthru
        _
    $region28: #{convnet_forward.3} parent=5 // pred_fallthru
      _
    %p216 = scmp.le.s32.totalorder 1, %s11
    %p217 = scmp.lt.s32.totalorder %s11, 5
    %p218 = pnand %p216, %p217
    %p219 = pneg %p218
    // Predicated region
    $region37: #{convnet_forward.3} parent=5 // pred_check
      _
    $region38: #{convnet_forward.3} parent=5 // pred_check_branch
      %221 = sbr.rel (%p218) target = $region40
    $region39: #{convnet_forward.3} parent=5 // pred_region
      %s222 = ssub.s32 %s11, 1
      %s223 = smul.u32 18, %s21
      %p224 = scmp.lt.s32.totalorder %s20, 0
      %s225 = scalar_select %p224, %s20, 0
      %p226 = scmp.lt.s32.totalorder %s223, 71
      %s227 = scalar_select %p226, %s223, 71
      %s228 = smul.addr %s225, 72
      %s229 = sadd.s32 %s227, %s228
      %s230 = smul.addr %s229, 4
      %s231 = scalar_lea.vmem %s0, %s230
      %p232 = pneg %p51
      %p233 = pneg %p48
      %s234 = smul.u32 288, %s21
      %p235 = scmp.lt.s32.totalorder %s234, 1151
      %s236 = scalar_select %p235, %s234, 1151
      %s237 = smul.addr %s236, 4
      %s238 = scalar_lea.vmem %s1, %s237
      %p239 = pneg %p77
      %p240 = pneg %p74
      %p241 = pneg %p98
      %p242 = pneg %p95
      %p243 = pneg %p119
      %p244 = pneg %p116
      %p245 = pneg %p140
      %p246 = pneg %p137
      %p247 = pneg %p166
      %p248 = pneg %p163
      %p249 = scmp.lt.s32.totalorder %s20, 0
      %s250 = scalar_select %p249, %s20, 0
      %s251 = smul.addr %s250, 8
      %s252 = scalar_lea.vmem %s5, %s251
      %s253 = smul.u32 18, %s21
      %p254 = scmp.lt.s32.totalorder %s20, 0
      %s255 = scalar_select %p254, %s20, 0
      %p256 = scmp.lt.s32.totalorder %s253, 71
      %s257 = scalar_select %p256, %s253, 71
      %s258 = smul.addr %s255, 72
      %s259 = sadd.s32 %s257, %s258
      %s260 = smul.addr %s259, 4
      %s261 = scalar_lea.vmem %s0, %s260
      %s262 = smul.u32 18, %s21
      %s263 = smul.u32 288, %s21
      %p264 = scmp.lt.s32.totalorder %s263, 1151
      %s265 = scalar_select %p264, %s263, 1151
      %s266 = smul.addr %s265, 4
      %s267 = scalar_lea.vmem %s1, %s266
      %s268 = smul.u32 288, %s21
      %p269 = scmp.lt.s32.totalorder %s20, 0
      %s270 = scalar_select %p269, %s20, 0
      %s271 = smul.addr %s270, 8
      %s272 = scalar_lea.vmem %s5, %s271
      %p274 = scmp.eq.s32.totalorder %s21, 0
      // Predicated region
      $region41: #{convnet_forward.3} parent=39 // pred_check
        %p275 = pneg %p274
      $region42: #{convnet_forward.3} parent=39 // pred_check_branch
        %277 = sbr.rel (%p275) target = $region44
      $region43: #{convnet_forward.3} parent=39 // pred_region
        %v278 = vld [vmem:[%s2] sm:$0x1]
        %v280 = vlaneseq
        %v281 = vshrl.u32 %v280, 7
        %v282 = vsub.s32 0, %v281
        %v283 = vrot.slane %v278, %v282
        %v285 = vadd.f32 %v283, 0.0
        %286 = vst [vmem:[#allocation2] sm:$0xff] %v285
      $region44: #{convnet_forward.3} parent=39 // pred_fallthru
        _
      %v287 = vld [vmem:[#allocation2] sm:$0xff]
      %v288 = vld [vmem:[%s261] sm:$0xff]
      %v289 = vld [vmem:[%s261 + $0x8] sm:$0xff]
      %v290 = vld [vmem:[%s261 + $0x10] sm:$0xff]
      %v291 = vld [vmem:[%s261 + $0x18] sm:$0xff]
      %v292 = vld [vmem:[%s261 + $0x20] sm:$0xff]
      %v293 = vld [vmem:[%s261 + $0x28] sm:$0xff]
      %v294 = vld [vmem:[%s261 + $0x30] sm:$0xff]
      %v295 = vld [vmem:[%s261 + $0x38] sm:$0xff]
      %v296 = vld [vmem:[%s261 + $0x40] sm:$0xff]
      %v297 = vld [vmem:[%s267] sm:$0xf]
      %v298 = vld [vmem:[%s267 + $0x4] sm:$0xf]
      %v299 = vld [vmem:[%s267 + $0x8] sm:$0xf]
      %v300 = vld [vmem:[%s267 + $0xc] sm:$0xf]
      %v301 = vld [vmem:[%s267 + $0x10] sm:$0xf]
      %v302 = vld [vmem:[%s267 + $0x14] sm:$0xf]
      %v303 = vld [vmem:[%s267 + $0x18] sm:$0xf]
      %v304 = vld [vmem:[%s267 + $0x1c] sm:$0xf]
      %v305 = vld [vmem:[%s267 + $0x20] sm:$0xf]
      %v306 = vld [vmem:[%s267 + $0x24] sm:$0xf]
      %v307 = vld [vmem:[%s267 + $0x28] sm:$0xf]
      %v308 = vld [vmem:[%s267 + $0x2c] sm:$0xf]
      %v309 = vld [vmem:[%s267 + $0x30] sm:$0xf]
      %v310 = vld [vmem:[%s267 + $0x34] sm:$0xf]
      %v311 = vld [vmem:[%s267 + $0x38] sm:$0xf]
      %v312 = vld [vmem:[%s267 + $0x3c] sm:$0xf]
      %v313 = vld [vmem:[%s267 + $0x40] sm:$0xf]
      %v314 = vld [vmem:[%s267 + $0x44] sm:$0xf]
      %v315 = vld [vmem:[%s267 + $0x48] sm:$0xf]
      %v316 = vld [vmem:[%s267 + $0x4c] sm:$0xf]
      %v317 = vld [vmem:[%s267 + $0x50] sm:$0xf]
      %v318 = vld [vmem:[%s267 + $0x54] sm:$0xf]
      %v319 = vld [vmem:[%s267 + $0x58] sm:$0xf]
      %v320 = vld [vmem:[%s267 + $0x5c] sm:$0xf]
      %v321 = vld [vmem:[%s267 + $0x60] sm:$0xf]
      %v322 = vld [vmem:[%s267 + $0x64] sm:$0xf]
      %v323 = vld [vmem:[%s267 + $0x68] sm:$0xf]
      %v324 = vld [vmem:[%s267 + $0x6c] sm:$0xf]
      %v325 = vld [vmem:[%s267 + $0x70] sm:$0xf]
      %v326 = vld [vmem:[%s267 + $0x74] sm:$0xf]
      %v327 = vld [vmem:[%s267 + $0x78] sm:$0xf]
      %v328 = vld [vmem:[%s267 + $0x7c] sm:$0xf]
      %v329 = vld [vmem:[%s267 + $0x80] sm:$0xf]
      %v330 = vld [vmem:[%s267 + $0x84] sm:$0xf]
      %v331 = vld [vmem:[%s267 + $0x88] sm:$0xf]
      %v332 = vld [vmem:[%s267 + $0x8c] sm:$0xf]
      %v333 = vld [vmem:[%s267 + $0x90] sm:$0xf]
      %v334 = vld [vmem:[%s267 + $0x94] sm:$0xf]
      %v335 = vld [vmem:[%s267 + $0x98] sm:$0xf]
      %v336 = vld [vmem:[%s267 + $0x9c] sm:$0xf]
      %v337 = vld [vmem:[%s267 + $0xa0] sm:$0xf]
      %v338 = vld [vmem:[%s267 + $0xa4] sm:$0xf]
      %v339 = vld [vmem:[%s267 + $0xa8] sm:$0xf]
      %v340 = vld [vmem:[%s267 + $0xac] sm:$0xf]
      %v341 = vld [vmem:[%s267 + $0xb0] sm:$0xf]
      %v342 = vld [vmem:[%s267 + $0xb4] sm:$0xf]
      %v343 = vld [vmem:[%s267 + $0xb8] sm:$0xf]
      %v344 = vld [vmem:[%s267 + $0xbc] sm:$0xf]
      %v345 = vld [vmem:[%s267 + $0xc0] sm:$0xf]
      %v346 = vld [vmem:[%s267 + $0xc4] sm:$0xf]
      %v347 = vld [vmem:[%s267 + $0xc8] sm:$0xf]
      %v348 = vld [vmem:[%s267 + $0xcc] sm:$0xf]
      %v349 = vld [vmem:[%s267 + $0xd0] sm:$0xf]
      %v350 = vld [vmem:[%s267 + $0xd4] sm:$0xf]
      %v351 = vld [vmem:[%s267 + $0xd8] sm:$0xf]
      %v352 = vld [vmem:[%s267 + $0xdc] sm:$0xf]
      %v353 = vld [vmem:[%s267 + $0xe0] sm:$0xf]
      %v354 = vld [vmem:[%s267 + $0xe4] sm:$0xf]
      %v355 = vld [vmem:[%s267 + $0xe8] sm:$0xf]
      %v356 = vld [vmem:[%s267 + $0xec] sm:$0xf]
      %v357 = vld [vmem:[%s267 + $0xf0] sm:$0xf]
      %v358 = vld [vmem:[%s267 + $0xf4] sm:$0xf]
      %v359 = vld [vmem:[%s267 + $0xf8] sm:$0xf]
      %v360 = vld [vmem:[%s267 + $0xfc] sm:$0xf]
      %v361 = vld [vmem:[%s267 + $0x100] sm:$0xf]
      %v362 = vld [vmem:[%s267 + $0x104] sm:$0xf]
      %v363 = vld [vmem:[%s267 + $0x108] sm:$0xf]
      %v364 = vld [vmem:[%s267 + $0x10c] sm:$0xf]
      %v365 = vld [vmem:[%s267 + $0x110] sm:$0xf]
      %v366 = vld [vmem:[%s267 + $0x114] sm:$0xf]
      %v367 = vld [vmem:[%s267 + $0x118] sm:$0xf]
      %v368 = vld [vmem:[%s267 + $0x11c] sm:$0xf]
      %v369 = vld [vmem:[%s267 + $0x120] sm:$0xf]
      %v370 = vld [vmem:[%s267 + $0x124] sm:$0xf]
      %v371 = vld [vmem:[%s267 + $0x128] sm:$0xf]
      %v372 = vld [vmem:[%s267 + $0x12c] sm:$0xf]
      %v373 = vld [vmem:[%s267 + $0x130] sm:$0xf]
      %v374 = vld [vmem:[%s267 + $0x134] sm:$0xf]
      %v375 = vld [vmem:[%s267 + $0x138] sm:$0xf]
      %v376 = vld [vmem:[%s267 + $0x13c] sm:$0xf]
      %v377 = vld [vmem:[%s267 + $0x140] sm:$0xf]
      %v378 = vld [vmem:[%s267 + $0x144] sm:$0xf]
      %v379 = vld [vmem:[%s267 + $0x148] sm:$0xf]
      %v380 = vld [vmem:[%s267 + $0x14c] sm:$0xf]
      %v381 = vld [vmem:[%s267 + $0x150] sm:$0xf]
      %v382 = vld [vmem:[%s267 + $0x154] sm:$0xf]
      %v383 = vld [vmem:[%s267 + $0x158] sm:$0xf]
      %v384 = vld [vmem:[%s267 + $0x15c] sm:$0xf]
      %v385 = vld [vmem:[%s267 + $0x160] sm:$0xf]
      %v386 = vld [vmem:[%s267 + $0x164] sm:$0xf]
      %v387 = vld [vmem:[%s267 + $0x168] sm:$0xf]
      %v388 = vld [vmem:[%s267 + $0x16c] sm:$0xf]
      %v389 = vld [vmem:[%s267 + $0x170] sm:$0xf]
      %v390 = vld [vmem:[%s267 + $0x174] sm:$0xf]
      %v391 = vld [vmem:[%s267 + $0x178] sm:$0xf]
      %v392 = vld [vmem:[%s267 + $0x17c] sm:$0xf]
      %v393 = vld [vmem:[%s267 + $0x180] sm:$0xf]
      %v394 = vld [vmem:[%s267 + $0x184] sm:$0xf]
      %v395 = vld [vmem:[%s267 + $0x188] sm:$0xf]
      %v396 = vld [vmem:[%s267 + $0x18c] sm:$0xf]
      %v397 = vld [vmem:[%s267 + $0x190] sm:$0xf]
      %v398 = vld [vmem:[%s267 + $0x194] sm:$0xf]
      %v399 = vld [vmem:[%s267 + $0x198] sm:$0xf]
      %v400 = vld [vmem:[%s267 + $0x19c] sm:$0xf]
      %v401 = vld [vmem:[%s267 + $0x1a0] sm:$0xf]
      %v402 = vld [vmem:[%s267 + $0x1a4] sm:$0xf]
      %v403 = vld [vmem:[%s267 + $0x1a8] sm:$0xf]
      %v404 = vld [vmem:[%s267 + $0x1ac] sm:$0xf]
      %v405 = vld [vmem:[%s267 + $0x1b0] sm:$0xf]
      %v406 = vld [vmem:[%s267 + $0x1b4] sm:$0xf]
      %v407 = vld [vmem:[%s267 + $0x1b8] sm:$0xf]
      %v408 = vld [vmem:[%s267 + $0x1bc] sm:$0xf]
      %v409 = vld [vmem:[%s267 + $0x1c0] sm:$0xf]
      %v410 = vld [vmem:[%s267 + $0x1c4] sm:$0xf]
      %v411 = vld [vmem:[%s267 + $0x1c8] sm:$0xf]
      %v412 = vld [vmem:[%s267 + $0x1cc] sm:$0xf]
      %v413 = vld [vmem:[%s267 + $0x1d0] sm:$0xf]
      %v414 = vld [vmem:[%s267 + $0x1d4] sm:$0xf]
      %v415 = vld [vmem:[%s267 + $0x1d8] sm:$0xf]
      %v416 = vld [vmem:[%s267 + $0x1dc] sm:$0xf]
      %v417 = vld [vmem:[%s267 + $0x1e0] sm:$0xf]
      %v418 = vld [vmem:[%s267 + $0x1e4] sm:$0xf]
      %v419 = vld [vmem:[%s267 + $0x1e8] sm:$0xf]
      %v420 = vld [vmem:[%s267 + $0x1ec] sm:$0xf]
      %v421 = vld [vmem:[%s267 + $0x1f0] sm:$0xf]
      %v422 = vld [vmem:[%s267 + $0x1f4] sm:$0xf]
      %v423 = vld [vmem:[%s267 + $0x1f8] sm:$0xf]
      %v424 = vld [vmem:[%s267 + $0x1fc] sm:$0xf]
      %v425 = vld [vmem:[%s267 + $0x200] sm:$0xf]
      %v426 = vld [vmem:[%s267 + $0x204] sm:$0xf]
      %v427 = vld [vmem:[%s267 + $0x208] sm:$0xf]
      %v428 = vld [vmem:[%s267 + $0x20c] sm:$0xf]
      %v429 = vld [vmem:[%s267 + $0x210] sm:$0xf]
      %v430 = vld [vmem:[%s267 + $0x214] sm:$0xf]
      %v431 = vld [vmem:[%s267 + $0x218] sm:$0xf]
      %v432 = vld [vmem:[%s267 + $0x21c] sm:$0xf]
      %v433 = vld [vmem:[%s267 + $0x220] sm:$0xf]
      %v434 = vld [vmem:[%s267 + $0x224] sm:$0xf]
      %v435 = vld [vmem:[%s267 + $0x228] sm:$0xf]
      %v436 = vld [vmem:[%s267 + $0x22c] sm:$0xf]
      %v437 = vld [vmem:[%s267 + $0x230] sm:$0xf]
      %v438 = vld [vmem:[%s267 + $0x234] sm:$0xf]
      %v439 = vld [vmem:[%s267 + $0x238] sm:$0xf]
      %v440 = vld [vmem:[%s267 + $0x23c] sm:$0xf]
      %v441 = vld [vmem:[%s267 + $0x240] sm:$0xf]
      %v442 = vld [vmem:[%s267 + $0x244] sm:$0xf]
      %v443 = vld [vmem:[%s267 + $0x248] sm:$0xf]
      %v444 = vld [vmem:[%s267 + $0x24c] sm:$0xf]
      %v445 = vld [vmem:[%s267 + $0x250] sm:$0xf]
      %v446 = vld [vmem:[%s267 + $0x254] sm:$0xf]
      %v447 = vld [vmem:[%s267 + $0x258] sm:$0xf]
      %v448 = vld [vmem:[%s267 + $0x25c] sm:$0xf]
      %v449 = vld [vmem:[%s267 + $0x260] sm:$0xf]
      %v450 = vld [vmem:[%s267 + $0x264] sm:$0xf]
      %v451 = vld [vmem:[%s267 + $0x268] sm:$0xf]
      %v452 = vld [vmem:[%s267 + $0x26c] sm:$0xf]
      %v453 = vld [vmem:[%s267 + $0x270] sm:$0xf]
      %v454 = vld [vmem:[%s267 + $0x274] sm:$0xf]
      %v455 = vld [vmem:[%s267 + $0x278] sm:$0xf]
      %v456 = vld [vmem:[%s267 + $0x27c] sm:$0xf]
      %v457 = vld [vmem:[%s267 + $0x280] sm:$0xf]
      %v458 = vld [vmem:[%s267 + $0x284] sm:$0xf]
      %v459 = vld [vmem:[%s267 + $0x288] sm:$0xf]
      %v460 = vld [vmem:[%s267 + $0x28c] sm:$0xf]
      %v461 = vld [vmem:[%s267 + $0x290] sm:$0xf]
      %v462 = vld [vmem:[%s267 + $0x294] sm:$0xf]
      %v463 = vld [vmem:[%s267 + $0x298] sm:$0xf]
      %v464 = vld [vmem:[%s267 + $0x29c] sm:$0xf]
      %v465 = vld [vmem:[%s267 + $0x2a0] sm:$0xf]
      %v466 = vld [vmem:[%s267 + $0x2a4] sm:$0xf]
      %v467 = vld [vmem:[%s267 + $0x2a8] sm:$0xf]
      %v468 = vld [vmem:[%s267 + $0x2ac] sm:$0xf]
      %v469 = vld [vmem:[%s267 + $0x2b0] sm:$0xf]
      %v470 = vld [vmem:[%s267 + $0x2b4] sm:$0xf]
      %v471 = vld [vmem:[%s267 + $0x2b8] sm:$0xf]
      %v472 = vld [vmem:[%s267 + $0x2bc] sm:$0xf]
      %v473 = vld [vmem:[%s267 + $0x2c0] sm:$0xf]
      %v474 = vld [vmem:[%s267 + $0x2c4] sm:$0xf]
      %v475 = vld [vmem:[%s267 + $0x2c8] sm:$0xf]
      %v476 = vld [vmem:[%s267 + $0x2cc] sm:$0xf]
      %v477 = vld [vmem:[%s267 + $0x2d0] sm:$0xf]
      %v478 = vld [vmem:[%s267 + $0x2d4] sm:$0xf]
      %v479 = vld [vmem:[%s267 + $0x2d8] sm:$0xf]
      %v480 = vld [vmem:[%s267 + $0x2dc] sm:$0xf]
      %v481 = vld [vmem:[%s267 + $0x2e0] sm:$0xf]
      %v482 = vld [vmem:[%s267 + $0x2e4] sm:$0xf]
      %v483 = vld [vmem:[%s267 + $0x2e8] sm:$0xf]
      %v484 = vld [vmem:[%s267 + $0x2ec] sm:$0xf]
      %v485 = vld [vmem:[%s267 + $0x2f0] sm:$0xf]
      %v486 = vld [vmem:[%s267 + $0x2f4] sm:$0xf]
      %v487 = vld [vmem:[%s267 + $0x2f8] sm:$0xf]
      %v488 = vld [vmem:[%s267 + $0x2fc] sm:$0xf]
      %v489 = vld [vmem:[%s267 + $0x300] sm:$0xf]
      %v490 = vld [vmem:[%s267 + $0x304] sm:$0xf]
      %v491 = vld [vmem:[%s267 + $0x308] sm:$0xf]
      %v492 = vld [vmem:[%s267 + $0x30c] sm:$0xf]
      %v493 = vld [vmem:[%s267 + $0x310] sm:$0xf]
      %v494 = vld [vmem:[%s267 + $0x314] sm:$0xf]
      %v495 = vld [vmem:[%s267 + $0x318] sm:$0xf]
      %v496 = vld [vmem:[%s267 + $0x31c] sm:$0xf]
      %v497 = vld [vmem:[%s267 + $0x320] sm:$0xf]
      %v498 = vld [vmem:[%s267 + $0x324] sm:$0xf]
      %v499 = vld [vmem:[%s267 + $0x328] sm:$0xf]
      %v500 = vld [vmem:[%s267 + $0x32c] sm:$0xf]
      %v501 = vld [vmem:[%s267 + $0x330] sm:$0xf]
      %v502 = vld [vmem:[%s267 + $0x334] sm:$0xf]
      %v503 = vld [vmem:[%s267 + $0x338] sm:$0xf]
      %v504 = vld [vmem:[%s267 + $0x33c] sm:$0xf]
      %v505 = vld [vmem:[%s267 + $0x340] sm:$0xf]
      %v506 = vld [vmem:[%s267 + $0x344] sm:$0xf]
      %v507 = vld [vmem:[%s267 + $0x348] sm:$0xf]
      %v508 = vld [vmem:[%s267 + $0x34c] sm:$0xf]
      %v509 = vld [vmem:[%s267 + $0x350] sm:$0xf]
      %v510 = vld [vmem:[%s267 + $0x354] sm:$0xf]
      %v511 = vld [vmem:[%s267 + $0x358] sm:$0xf]
      %v512 = vld [vmem:[%s267 + $0x35c] sm:$0xf]
      %v513 = vld [vmem:[%s267 + $0x360] sm:$0xf]
      %v514 = vld [vmem:[%s267 + $0x364] sm:$0xf]
      %v515 = vld [vmem:[%s267 + $0x368] sm:$0xf]
      %v516 = vld [vmem:[%s267 + $0x36c] sm:$0xf]
      %v517 = vld [vmem:[%s267 + $0x370] sm:$0xf]
      %v518 = vld [vmem:[%s267 + $0x374] sm:$0xf]
      %v519 = vld [vmem:[%s267 + $0x378] sm:$0xf]
      %v520 = vld [vmem:[%s267 + $0x37c] sm:$0xf]
      %v521 = vld [vmem:[%s267 + $0x380] sm:$0xf]
      %v522 = vld [vmem:[%s267 + $0x384] sm:$0xf]
      %v523 = vld [vmem:[%s267 + $0x388] sm:$0xf]
      %v524 = vld [vmem:[%s267 + $0x38c] sm:$0xf]
      %v525 = vld [vmem:[%s267 + $0x390] sm:$0xf]
      %v526 = vld [vmem:[%s267 + $0x394] sm:$0xf]
      %v527 = vld [vmem:[%s267 + $0x398] sm:$0xf]
      %v528 = vld [vmem:[%s267 + $0x39c] sm:$0xf]
      %v529 = vld [vmem:[%s267 + $0x3a0] sm:$0xf]
      %v530 = vld [vmem:[%s267 + $0x3a4] sm:$0xf]
      %v531 = vld [vmem:[%s267 + $0x3a8] sm:$0xf]
      %v532 = vld [vmem:[%s267 + $0x3ac] sm:$0xf]
      %v533 = vld [vmem:[%s267 + $0x3b0] sm:$0xf]
      %v534 = vld [vmem:[%s267 + $0x3b4] sm:$0xf]
      %v535 = vld [vmem:[%s267 + $0x3b8] sm:$0xf]
      %v536 = vld [vmem:[%s267 + $0x3bc] sm:$0xf]
      %v537 = vld [vmem:[%s267 + $0x3c0] sm:$0xf]
      %v538 = vld [vmem:[%s267 + $0x3c4] sm:$0xf]
      %v539 = vld [vmem:[%s267 + $0x3c8] sm:$0xf]
      %v540 = vld [vmem:[%s267 + $0x3cc] sm:$0xf]
      %v541 = vld [vmem:[%s267 + $0x3d0] sm:$0xf]
      %v542 = vld [vmem:[%s267 + $0x3d4] sm:$0xf]
      %v543 = vld [vmem:[%s267 + $0x3d8] sm:$0xf]
      %v544 = vld [vmem:[%s267 + $0x3dc] sm:$0xf]
      %v545 = vld [vmem:[%s267 + $0x3e0] sm:$0xf]
      %v546 = vld [vmem:[%s267 + $0x3e4] sm:$0xf]
      %v547 = vld [vmem:[%s267 + $0x3e8] sm:$0xf]
      %v548 = vld [vmem:[%s267 + $0x3ec] sm:$0xf]
      %v549 = vld [vmem:[%s267 + $0x3f0] sm:$0xf]
      %v550 = vld [vmem:[%s267 + $0x3f4] sm:$0xf]
      %v551 = vld [vmem:[%s267 + $0x3f8] sm:$0xf]
      %v552 = vld [vmem:[%s267 + $0x3fc] sm:$0xf]
      %v553 = vld [vmem:[%s267 + $0x400] sm:$0xf]
      %v554 = vld [vmem:[%s267 + $0x404] sm:$0xf]
      %v555 = vld [vmem:[%s267 + $0x408] sm:$0xf]
      %v556 = vld [vmem:[%s267 + $0x40c] sm:$0xf]
      %v557 = vld [vmem:[%s267 + $0x410] sm:$0xf]
      %v558 = vld [vmem:[%s267 + $0x414] sm:$0xf]
      %v559 = vld [vmem:[%s267 + $0x418] sm:$0xf]
      %v560 = vld [vmem:[%s267 + $0x41c] sm:$0xf]
      %v561 = vld [vmem:[%s267 + $0x420] sm:$0xf]
      %v562 = vld [vmem:[%s267 + $0x424] sm:$0xf]
      %v563 = vld [vmem:[%s267 + $0x428] sm:$0xf]
      %v564 = vld [vmem:[%s267 + $0x42c] sm:$0xf]
      %v565 = vld [vmem:[%s267 + $0x430] sm:$0xf]
      %v566 = vld [vmem:[%s267 + $0x434] sm:$0xf]
      %v567 = vld [vmem:[%s267 + $0x438] sm:$0xf]
      %v568 = vld [vmem:[%s267 + $0x43c] sm:$0xf]
      %v569 = vld [vmem:[%s267 + $0x440] sm:$0xf]
      %v570 = vld [vmem:[%s267 + $0x444] sm:$0xf]
      %v571 = vld [vmem:[%s267 + $0x448] sm:$0xf]
      %v572 = vld [vmem:[%s267 + $0x44c] sm:$0xf]
      %v573 = vld [vmem:[%s267 + $0x450] sm:$0xf]
      %v574 = vld [vmem:[%s267 + $0x454] sm:$0xf]
      %v575 = vld [vmem:[%s267 + $0x458] sm:$0xf]
      %v576 = vld [vmem:[%s267 + $0x45c] sm:$0xf]
      %v577 = vld [vmem:[%s267 + $0x460] sm:$0xf]
      %v578 = vld [vmem:[%s267 + $0x464] sm:$0xf]
      %v579 = vld [vmem:[%s267 + $0x468] sm:$0xf]
      %v580 = vld [vmem:[%s267 + $0x46c] sm:$0xf]
      %v581 = vld [vmem:[%s267 + $0x470] sm:$0xf]
      %v582 = vld [vmem:[%s267 + $0x474] sm:$0xf]
      %v583 = vld [vmem:[%s267 + $0x478] sm:$0xf]
      %v584 = vld [vmem:[%s267 + $0x47c] sm:$0xf]
      %v594 = vunpack.c.l.b16 %v288
      %v595 = vunpack.c.h.b16 %v288
      %v596 = vunpack.c.l.b16 %v289
      %v597 = vunpack.c.h.b16 %v289
      %v598 = vunpack.c.l.b16 %v290
      %v599 = vunpack.c.h.b16 %v290
      %v600 = vunpack.c.l.b16 %v291
      %v601 = vunpack.c.h.b16 %v291
      %v602 = vunpack.c.l.b16 %v292
      %v603 = vunpack.c.h.b16 %v292
      %v604 = vunpack.c.l.b16 %v293
      %v605 = vunpack.c.h.b16 %v293
      %v606 = vunpack.c.l.b16 %v294
      %v607 = vunpack.c.h.b16 %v294
      %v608 = vunpack.c.l.b16 %v295
      %v609 = vunpack.c.h.b16 %v295
      %v610 = vunpack.c.l.b16 %v296
      %v611 = vunpack.c.h.b16 %v296
      %v612 = vpack.c.b16 %v594, %v594
      %v613 = vpack.c.b16 %v595, %v595
      %v614 = vpack.c.b16 %v596, %v596
      %v615 = vpack.c.b16 %v597, %v597
      %v616 = vpack.c.b16 %v598, %v598
      %v617 = vpack.c.b16 %v599, %v599
      %v618 = vpack.c.b16 %v600, %v600
      %v619 = vpack.c.b16 %v601, %v601
      %v620 = vpack.c.b16 %v602, %v602
      %v621 = vpack.c.b16 %v603, %v603
      %v622 = vpack.c.b16 %v604, %v604
      %v623 = vpack.c.b16 %v605, %v605
      %v624 = vpack.c.b16 %v606, %v606
      %v625 = vpack.c.b16 %v607, %v607
      %v626 = vpack.c.b16 %v608, %v608
      %v627 = vpack.c.b16 %v609, %v609
      %v628 = vpack.c.b16 %v610, %v610
      %v629 = vpack.c.b16 %v611, %v611
      %v936 = vunpack.c.l.b16 %v297
      %v937 = vunpack.c.l.b16 %v298
      %v938 = vunpack.c.l.b16 %v299
      %v939 = vunpack.c.l.b16 %v300
      %v940 = vunpack.c.l.b16 %v301
      %v941 = vunpack.c.l.b16 %v302
      %v942 = vunpack.c.l.b16 %v303
      %v943 = vunpack.c.l.b16 %v304
      %v944 = vunpack.c.l.b16 %v305
      %v945 = vunpack.c.l.b16 %v306
      %v946 = vunpack.c.l.b16 %v307
      %v947 = vunpack.c.l.b16 %v308
      %v948 = vunpack.c.l.b16 %v309
      %v949 = vunpack.c.l.b16 %v310
      %v950 = vunpack.c.l.b16 %v311
      %v951 = vunpack.c.l.b16 %v312
      %v952 = vunpack.c.l.b16 %v313
      %v953 = vunpack.c.l.b16 %v314
      %v954 = vunpack.c.l.b16 %v315
      %v955 = vunpack.c.l.b16 %v316
      %v956 = vunpack.c.l.b16 %v317
      %v957 = vunpack.c.l.b16 %v318
      %v958 = vunpack.c.l.b16 %v319
      %v959 = vunpack.c.l.b16 %v320
      %v960 = vunpack.c.l.b16 %v321
      %v961 = vunpack.c.l.b16 %v322
      %v962 = vunpack.c.l.b16 %v323
      %v963 = vunpack.c.l.b16 %v324
      %v964 = vunpack.c.l.b16 %v325
      %v965 = vunpack.c.l.b16 %v326
      %v966 = vunpack.c.l.b16 %v327
      %v967 = vunpack.c.l.b16 %v328
      %v968 = vunpack.c.l.b16 %v329
      %v969 = vunpack.c.l.b16 %v330
      %v970 = vunpack.c.l.b16 %v331
      %v971 = vunpack.c.l.b16 %v332
      %v972 = vunpack.c.l.b16 %v333
      %v973 = vunpack.c.l.b16 %v334
      %v974 = vunpack.c.l.b16 %v335
      %v975 = vunpack.c.l.b16 %v336
      %v976 = vunpack.c.l.b16 %v337
      %v977 = vunpack.c.l.b16 %v338
      %v978 = vunpack.c.l.b16 %v339
      %v979 = vunpack.c.l.b16 %v340
      %v980 = vunpack.c.l.b16 %v341
      %v981 = vunpack.c.l.b16 %v342
      %v982 = vunpack.c.l.b16 %v343
      %v983 = vunpack.c.l.b16 %v344
      %v984 = vunpack.c.l.b16 %v345
      %v985 = vunpack.c.l.b16 %v346
      %v986 = vunpack.c.l.b16 %v347
      %v987 = vunpack.c.l.b16 %v348
      %v988 = vunpack.c.l.b16 %v349
      %v989 = vunpack.c.l.b16 %v350
      %v990 = vunpack.c.l.b16 %v351
      %v991 = vunpack.c.l.b16 %v352
      %v992 = vunpack.c.l.b16 %v353
      %v993 = vunpack.c.l.b16 %v354
      %v994 = vunpack.c.l.b16 %v355
      %v995 = vunpack.c.l.b16 %v356
      %v996 = vunpack.c.l.b16 %v357
      %v997 = vunpack.c.l.b16 %v358
      %v998 = vunpack.c.l.b16 %v359
      %v999 = vunpack.c.l.b16 %v360
      %v1000 = vunpack.c.l.b16 %v361
      %v1001 = vunpack.c.l.b16 %v362
      %v1002 = vunpack.c.l.b16 %v363
      %v1003 = vunpack.c.l.b16 %v364
      %v1004 = vunpack.c.l.b16 %v365
      %v1005 = vunpack.c.l.b16 %v366
      %v1006 = vunpack.c.l.b16 %v367
      %v1007 = vunpack.c.l.b16 %v368
      %v1008 = vunpack.c.l.b16 %v369
      %v1009 = vunpack.c.l.b16 %v370
      %v1010 = vunpack.c.l.b16 %v371
      %v1011 = vunpack.c.l.b16 %v372
      %v1012 = vunpack.c.l.b16 %v373
      %v1013 = vunpack.c.l.b16 %v374
      %v1014 = vunpack.c.l.b16 %v375
      %v1015 = vunpack.c.l.b16 %v376
      %v1016 = vunpack.c.l.b16 %v377
      %v1017 = vunpack.c.l.b16 %v378
      %v1018 = vunpack.c.l.b16 %v379
      %v1019 = vunpack.c.l.b16 %v380
      %v1020 = vunpack.c.l.b16 %v381
      %v1021 = vunpack.c.l.b16 %v382
      %v1022 = vunpack.c.l.b16 %v383
      %v1023 = vunpack.c.l.b16 %v384
      %v1024 = vunpack.c.l.b16 %v385
      %v1025 = vunpack.c.l.b16 %v386
      %v1026 = vunpack.c.l.b16 %v387
      %v1027 = vunpack.c.l.b16 %v388
      %v1028 = vunpack.c.l.b16 %v389
      %v1029 = vunpack.c.l.b16 %v390
      %v1030 = vunpack.c.l.b16 %v391
      %v1031 = vunpack.c.l.b16 %v392
      %v1032 = vunpack.c.l.b16 %v393
      %v1033 = vunpack.c.l.b16 %v394
      %v1034 = vunpack.c.l.b16 %v395
      %v1035 = vunpack.c.l.b16 %v396
      %v1036 = vunpack.c.l.b16 %v397
      %v1037 = vunpack.c.l.b16 %v398
      %v1038 = vunpack.c.l.b16 %v399
      %v1039 = vunpack.c.l.b16 %v400
      %v1040 = vunpack.c.l.b16 %v401
      %v1041 = vunpack.c.l.b16 %v402
      %v1042 = vunpack.c.l.b16 %v403
      %v1043 = vunpack.c.l.b16 %v404
      %v1044 = vunpack.c.l.b16 %v405
      %v1045 = vunpack.c.l.b16 %v406
      %v1046 = vunpack.c.l.b16 %v407
      %v1047 = vunpack.c.l.b16 %v408
      %v1048 = vunpack.c.l.b16 %v409
      %v1049 = vunpack.c.l.b16 %v410
      %v1050 = vunpack.c.l.b16 %v411
      %v1051 = vunpack.c.l.b16 %v412
      %v1052 = vunpack.c.l.b16 %v413
      %v1053 = vunpack.c.l.b16 %v414
      %v1054 = vunpack.c.l.b16 %v415
      %v1055 = vunpack.c.l.b16 %v416
      %v1056 = vunpack.c.l.b16 %v417
      %v1057 = vunpack.c.l.b16 %v418
      %v1058 = vunpack.c.l.b16 %v419
      %v1059 = vunpack.c.l.b16 %v420
      %v1060 = vunpack.c.l.b16 %v421
      %v1061 = vunpack.c.l.b16 %v422
      %v1062 = vunpack.c.l.b16 %v423
      %v1063 = vunpack.c.l.b16 %v424
      %v1064 = vunpack.c.l.b16 %v425
      %v1065 = vunpack.c.l.b16 %v426
      %v1066 = vunpack.c.l.b16 %v427
      %v1067 = vunpack.c.l.b16 %v428
      %v1068 = vunpack.c.l.b16 %v429
      %v1069 = vunpack.c.l.b16 %v430
      %v1070 = vunpack.c.l.b16 %v431
      %v1071 = vunpack.c.l.b16 %v432
      %v1072 = vunpack.c.l.b16 %v433
      %v1073 = vunpack.c.l.b16 %v434
      %v1074 = vunpack.c.l.b16 %v435
      %v1075 = vunpack.c.l.b16 %v436
      %v1076 = vunpack.c.l.b16 %v437
      %v1077 = vunpack.c.l.b16 %v438
      %v1078 = vunpack.c.l.b16 %v439
      %v1079 = vunpack.c.l.b16 %v440
      %v1080 = vunpack.c.l.b16 %v441
      %v1081 = vunpack.c.l.b16 %v442
      %v1082 = vunpack.c.l.b16 %v443
      %v1083 = vunpack.c.l.b16 %v444
      %v1084 = vunpack.c.l.b16 %v445
      %v1085 = vunpack.c.l.b16 %v446
      %v1086 = vunpack.c.l.b16 %v447
      %v1087 = vunpack.c.l.b16 %v448
      %v1088 = vunpack.c.l.b16 %v449
      %v1089 = vunpack.c.l.b16 %v450
      %v1090 = vunpack.c.l.b16 %v451
      %v1091 = vunpack.c.l.b16 %v452
      %v1092 = vunpack.c.l.b16 %v453
      %v1093 = vunpack.c.l.b16 %v454
      %v1094 = vunpack.c.l.b16 %v455
      %v1095 = vunpack.c.l.b16 %v456
      %v1096 = vunpack.c.l.b16 %v457
      %v1097 = vunpack.c.l.b16 %v458
      %v1098 = vunpack.c.l.b16 %v459
      %v1099 = vunpack.c.l.b16 %v460
      %v1100 = vunpack.c.l.b16 %v461
      %v1101 = vunpack.c.l.b16 %v462
      %v1102 = vunpack.c.l.b16 %v463
      %v1103 = vunpack.c.l.b16 %v464
      %v1104 = vunpack.c.l.b16 %v465
      %v1105 = vunpack.c.l.b16 %v466
      %v1106 = vunpack.c.l.b16 %v467
      %v1107 = vunpack.c.l.b16 %v468
      %v1108 = vunpack.c.l.b16 %v469
      %v1109 = vunpack.c.l.b16 %v470
      %v1110 = vunpack.c.l.b16 %v471
      %v1111 = vunpack.c.l.b16 %v472
      %v1112 = vunpack.c.l.b16 %v473
      %v1113 = vunpack.c.l.b16 %v474
      %v1114 = vunpack.c.l.b16 %v475
      %v1115 = vunpack.c.l.b16 %v476
      %v1116 = vunpack.c.l.b16 %v477
      %v1117 = vunpack.c.l.b16 %v478
      %v1118 = vunpack.c.l.b16 %v479
      %v1119 = vunpack.c.l.b16 %v480
      %v1120 = vunpack.c.l.b16 %v481
      %v1121 = vunpack.c.l.b16 %v482
      %v1122 = vunpack.c.l.b16 %v483
      %v1123 = vunpack.c.l.b16 %v484
      %v1124 = vunpack.c.l.b16 %v485
      %v1125 = vunpack.c.l.b16 %v486
      %v1126 = vunpack.c.l.b16 %v487
      %v1127 = vunpack.c.l.b16 %v488
      %v1128 = vunpack.c.l.b16 %v489
      %v1129 = vunpack.c.l.b16 %v490
      %v1130 = vunpack.c.l.b16 %v491
      %v1131 = vunpack.c.l.b16 %v492
      %v1132 = vunpack.c.l.b16 %v493
      %v1133 = vunpack.c.l.b16 %v494
      %v1134 = vunpack.c.l.b16 %v495
      %v1135 = vunpack.c.l.b16 %v496
      %v1136 = vunpack.c.l.b16 %v497
      %v1137 = vunpack.c.l.b16 %v498
      %v1138 = vunpack.c.l.b16 %v499
      %v1139 = vunpack.c.l.b16 %v500
      %v1140 = vunpack.c.l.b16 %v501
      %v1141 = vunpack.c.l.b16 %v502
      %v1142 = vunpack.c.l.b16 %v503
      %v1143 = vunpack.c.l.b16 %v504
      %v1144 = vunpack.c.l.b16 %v505
      %v1145 = vunpack.c.l.b16 %v506
      %v1146 = vunpack.c.l.b16 %v507
      %v1147 = vunpack.c.l.b16 %v508
      %v1148 = vunpack.c.l.b16 %v509
      %v1149 = vunpack.c.l.b16 %v510
      %v1150 = vunpack.c.l.b16 %v511
      %v1151 = vunpack.c.l.b16 %v512
      %v1152 = vunpack.c.l.b16 %v513
      %v1153 = vunpack.c.l.b16 %v514
      %v1154 = vunpack.c.l.b16 %v515
      %v1155 = vunpack.c.l.b16 %v516
      %v1156 = vunpack.c.l.b16 %v517
      %v1157 = vunpack.c.l.b16 %v518
      %v1158 = vunpack.c.l.b16 %v519
      %v1159 = vunpack.c.l.b16 %v520
      %v1160 = vunpack.c.l.b16 %v521
      %v1161 = vunpack.c.l.b16 %v522
      %v1162 = vunpack.c.l.b16 %v523
      %v1163 = vunpack.c.l.b16 %v524
      %v1164 = vunpack.c.l.b16 %v525
      %v1165 = vunpack.c.l.b16 %v526
      %v1166 = vunpack.c.l.b16 %v527
      %v1167 = vunpack.c.l.b16 %v528
      %v1168 = vunpack.c.l.b16 %v529
      %v1169 = vunpack.c.l.b16 %v530
      %v1170 = vunpack.c.l.b16 %v531
      %v1171 = vunpack.c.l.b16 %v532
      %v1172 = vunpack.c.l.b16 %v533
      %v1173 = vunpack.c.l.b16 %v534
      %v1174 = vunpack.c.l.b16 %v535
      %v1175 = vunpack.c.l.b16 %v536
      %v1176 = vunpack.c.l.b16 %v537
      %v1177 = vunpack.c.l.b16 %v538
      %v1178 = vunpack.c.l.b16 %v539
      %v1179 = vunpack.c.l.b16 %v540
      %v1180 = vunpack.c.l.b16 %v541
      %v1181 = vunpack.c.l.b16 %v542
      %v1182 = vunpack.c.l.b16 %v543
      %v1183 = vunpack.c.l.b16 %v544
      %v1184 = vunpack.c.l.b16 %v545
      %v1185 = vunpack.c.l.b16 %v546
      %v1186 = vunpack.c.l.b16 %v547
      %v1187 = vunpack.c.l.b16 %v548
      %v1188 = vunpack.c.l.b16 %v549
      %v1189 = vunpack.c.l.b16 %v550
      %v1190 = vunpack.c.l.b16 %v551
      %v1191 = vunpack.c.l.b16 %v552
      %v1192 = vunpack.c.l.b16 %v553
      %v1193 = vunpack.c.l.b16 %v554
      %v1194 = vunpack.c.l.b16 %v555
      %v1195 = vunpack.c.l.b16 %v556
      %v1196 = vunpack.c.l.b16 %v557
      %v1197 = vunpack.c.l.b16 %v558
      %v1198 = vunpack.c.l.b16 %v559
      %v1199 = vunpack.c.l.b16 %v560
      %v1200 = vunpack.c.l.b16 %v561
      %v1201 = vunpack.c.l.b16 %v562
      %v1202 = vunpack.c.l.b16 %v563
      %v1203 = vunpack.c.l.b16 %v564
      %v1204 = vunpack.c.l.b16 %v565
      %v1205 = vunpack.c.l.b16 %v566
      %v1206 = vunpack.c.l.b16 %v567
      %v1207 = vunpack.c.l.b16 %v568
      %v1208 = vunpack.c.l.b16 %v569
      %v1209 = vunpack.c.l.b16 %v570
      %v1210 = vunpack.c.l.b16 %v571
      %v1211 = vunpack.c.l.b16 %v572
      %v1212 = vunpack.c.l.b16 %v573
      %v1213 = vunpack.c.l.b16 %v574
      %v1214 = vunpack.c.l.b16 %v575
      %v1215 = vunpack.c.l.b16 %v576
      %v1216 = vunpack.c.l.b16 %v577
      %v1217 = vunpack.c.l.b16 %v578
      %v1218 = vunpack.c.l.b16 %v579
      %v1219 = vunpack.c.l.b16 %v580
      %v1220 = vunpack.c.l.b16 %v581
      %v1221 = vunpack.c.l.b16 %v582
      %v1222 = vunpack.c.l.b16 %v583
      %v1223 = vunpack.c.l.b16 %v584
      %v1224 = vpack.c.b16 %v937, %v936
      %v1225 = vpack.c.b16 %v939, %v938
      %v1226 = vpack.c.b16 %v941, %v940
      %v1227 = vpack.c.b16 %v943, %v942
      %v1228 = vpack.c.b16 %v945, %v944
      %v1229 = vpack.c.b16 %v947, %v946
      %v1230 = vpack.c.b16 %v949, %v948
      %v1231 = vpack.c.b16 %v951, %v950
      %v1232 = vpack.c.b16 %v953, %v952
      %v1233 = vpack.c.b16 %v955, %v954
      %v1234 = vpack.c.b16 %v957, %v956
      %v1235 = vpack.c.b16 %v959, %v958
      %v1236 = vpack.c.b16 %v961, %v960
      %v1237 = vpack.c.b16 %v963, %v962
      %v1238 = vpack.c.b16 %v965, %v964
      %v1239 = vpack.c.b16 %v967, %v966
      %v1240 = vpack.c.b16 %v969, %v968
      %v1241 = vpack.c.b16 %v971, %v970
      %v1242 = vpack.c.b16 %v973, %v972
      %v1243 = vpack.c.b16 %v975, %v974
      %v1244 = vpack.c.b16 %v977, %v976
      %v1245 = vpack.c.b16 %v979, %v978
      %v1246 = vpack.c.b16 %v981, %v980
      %v1247 = vpack.c.b16 %v983, %v982
      %v1248 = vpack.c.b16 %v985, %v984
      %v1249 = vpack.c.b16 %v987, %v986
      %v1250 = vpack.c.b16 %v989, %v988
      %v1251 = vpack.c.b16 %v991, %v990
      %v1252 = vpack.c.b16 %v993, %v992
      %v1253 = vpack.c.b16 %v995, %v994
      %v1254 = vpack.c.b16 %v997, %v996
      %v1255 = vpack.c.b16 %v999, %v998
      %v1256 = vpack.c.b16 %v1001, %v1000
      %v1257 = vpack.c.b16 %v1003, %v1002
      %v1258 = vpack.c.b16 %v1005, %v1004
      %v1259 = vpack.c.b16 %v1007, %v1006
      %v1260 = vpack.c.b16 %v1009, %v1008
      %v1261 = vpack.c.b16 %v1011, %v1010
      %v1262 = vpack.c.b16 %v1013, %v1012
      %v1263 = vpack.c.b16 %v1015, %v1014
      %v1264 = vpack.c.b16 %v1017, %v1016
      %v1265 = vpack.c.b16 %v1019, %v1018
      %v1266 = vpack.c.b16 %v1021, %v1020
      %v1267 = vpack.c.b16 %v1023, %v1022
      %v1268 = vpack.c.b16 %v1025, %v1024
      %v1269 = vpack.c.b16 %v1027, %v1026
      %v1270 = vpack.c.b16 %v1029, %v1028
      %v1271 = vpack.c.b16 %v1031, %v1030
      %v1272 = vpack.c.b16 %v1033, %v1032
      %v1273 = vpack.c.b16 %v1035, %v1034
      %v1274 = vpack.c.b16 %v1037, %v1036
      %v1275 = vpack.c.b16 %v1039, %v1038
      %v1276 = vpack.c.b16 %v1041, %v1040
      %v1277 = vpack.c.b16 %v1043, %v1042
      %v1278 = vpack.c.b16 %v1045, %v1044
      %v1279 = vpack.c.b16 %v1047, %v1046
      %v1280 = vpack.c.b16 %v1049, %v1048
      %v1281 = vpack.c.b16 %v1051, %v1050
      %v1282 = vpack.c.b16 %v1053, %v1052
      %v1283 = vpack.c.b16 %v1055, %v1054
      %v1284 = vpack.c.b16 %v1057, %v1056
      %v1285 = vpack.c.b16 %v1059, %v1058
      %v1286 = vpack.c.b16 %v1061, %v1060
      %v1287 = vpack.c.b16 %v1063, %v1062
      %v1288 = vpack.c.b16 %v1065, %v1064
      %v1289 = vpack.c.b16 %v1067, %v1066
      %v1290 = vpack.c.b16 %v1069, %v1068
      %v1291 = vpack.c.b16 %v1071, %v1070
      %v1292 = vpack.c.b16 %v1073, %v1072
      %v1293 = vpack.c.b16 %v1075, %v1074
      %v1294 = vpack.c.b16 %v1077, %v1076
      %v1295 = vpack.c.b16 %v1079, %v1078
      %v1296 = vpack.c.b16 %v1081, %v1080
      %v1297 = vpack.c.b16 %v1083, %v1082
      %v1298 = vpack.c.b16 %v1085, %v1084
      %v1299 = vpack.c.b16 %v1087, %v1086
      %v1300 = vpack.c.b16 %v1089, %v1088
      %v1301 = vpack.c.b16 %v1091, %v1090
      %v1302 = vpack.c.b16 %v1093, %v1092
      %v1303 = vpack.c.b16 %v1095, %v1094
      %v1304 = vpack.c.b16 %v1097, %v1096
      %v1305 = vpack.c.b16 %v1099, %v1098
      %v1306 = vpack.c.b16 %v1101, %v1100
      %v1307 = vpack.c.b16 %v1103, %v1102
      %v1308 = vpack.c.b16 %v1105, %v1104
      %v1309 = vpack.c.b16 %v1107, %v1106
      %v1310 = vpack.c.b16 %v1109, %v1108
      %v1311 = vpack.c.b16 %v1111, %v1110
      %v1312 = vpack.c.b16 %v1113, %v1112
      %v1313 = vpack.c.b16 %v1115, %v1114
      %v1314 = vpack.c.b16 %v1117, %v1116
      %v1315 = vpack.c.b16 %v1119, %v1118
      %v1316 = vpack.c.b16 %v1121, %v1120
      %v1317 = vpack.c.b16 %v1123, %v1122
      %v1318 = vpack.c.b16 %v1125, %v1124
      %v1319 = vpack.c.b16 %v1127, %v1126
      %v1320 = vpack.c.b16 %v1129, %v1128
      %v1321 = vpack.c.b16 %v1131, %v1130
      %v1322 = vpack.c.b16 %v1133, %v1132
      %v1323 = vpack.c.b16 %v1135, %v1134
      %v1324 = vpack.c.b16 %v1137, %v1136
      %v1325 = vpack.c.b16 %v1139, %v1138
      %v1326 = vpack.c.b16 %v1141, %v1140
      %v1327 = vpack.c.b16 %v1143, %v1142
      %v1328 = vpack.c.b16 %v1145, %v1144
      %v1329 = vpack.c.b16 %v1147, %v1146
      %v1330 = vpack.c.b16 %v1149, %v1148
      %v1331 = vpack.c.b16 %v1151, %v1150
      %v1332 = vpack.c.b16 %v1153, %v1152
      %v1333 = vpack.c.b16 %v1155, %v1154
      %v1334 = vpack.c.b16 %v1157, %v1156
      %v1335 = vpack.c.b16 %v1159, %v1158
      %v1336 = vpack.c.b16 %v1161, %v1160
      %v1337 = vpack.c.b16 %v1163, %v1162
      %v1338 = vpack.c.b16 %v1165, %v1164
      %v1339 = vpack.c.b16 %v1167, %v1166
      %v1340 = vpack.c.b16 %v1169, %v1168
      %v1341 = vpack.c.b16 %v1171, %v1170
      %v1342 = vpack.c.b16 %v1173, %v1172
      %v1343 = vpack.c.b16 %v1175, %v1174
      %v1344 = vpack.c.b16 %v1177, %v1176
      %v1345 = vpack.c.b16 %v1179, %v1178
      %v1346 = vpack.c.b16 %v1181, %v1180
      %v1347 = vpack.c.b16 %v1183, %v1182
      %v1348 = vpack.c.b16 %v1185, %v1184
      %v1349 = vpack.c.b16 %v1187, %v1186
      %v1350 = vpack.c.b16 %v1189, %v1188
      %v1351 = vpack.c.b16 %v1191, %v1190
      %v1352 = vpack.c.b16 %v1193, %v1192
      %v1353 = vpack.c.b16 %v1195, %v1194
      %v1354 = vpack.c.b16 %v1197, %v1196
      %v1355 = vpack.c.b16 %v1199, %v1198
      %v1356 = vpack.c.b16 %v1201, %v1200
      %v1357 = vpack.c.b16 %v1203, %v1202
      %v1358 = vpack.c.b16 %v1205, %v1204
      %v1359 = vpack.c.b16 %v1207, %v1206
      %v1360 = vpack.c.b16 %v1209, %v1208
      %v1361 = vpack.c.b16 %v1211, %v1210
      %v1362 = vpack.c.b16 %v1213, %v1212
      %v1363 = vpack.c.b16 %v1215, %v1214
      %v1364 = vpack.c.b16 %v1217, %v1216
      %v1365 = vpack.c.b16 %v1219, %v1218
      %v1366 = vpack.c.b16 %v1221, %v1220
      %v1367 = vpack.c.b16 %v1223, %v1222
      %1512 = vmatprep.subr.bf16.mxu0 0
      %1513 = vmatpush1.bf16.msra.mxu0 %v1231
      %1514 = vmatprep.subr.bf16.mxu0 0
      %1515 = vmatpush1.bf16.msra.mxu0 %v1230
      %1516 = vmatprep.subr.bf16.mxu0 0
      %1517 = vmatpush1.bf16.msra.mxu0 %v1229
      %1518 = vmatprep.subr.bf16.mxu0 0
      %1519 = vmatpush1.bf16.msra.mxu0 %v1228
      %1520 = vmatprep.subr.bf16.mxu0 0
      %1521 = vmatpush1.bf16.msra.mxu0 %v1227
      %1522 = vmatprep.subr.bf16.mxu0 0
      %1523 = vmatpush1.bf16.msra.mxu0 %v1226
      %1524 = vmatprep.subr.bf16.mxu0 0
      %1525 = vmatpush1.bf16.msra.mxu0 %v1225
      %1526 = vmatprep.subr.bf16.mxu0 0
      %1527 = vmatpush1.bf16.msra.mxu0 %v1224
      %1528 = vmatprep.subr.bf16.mxu0 0
      %1529 = vmatpush2.bf16.msra.mxu0 %v1239
      %1530 = vmatprep.subr.bf16.mxu0 0
      %1531 = vmatpush2.bf16.msra.mxu0 %v1238
      %1532 = vmatprep.subr.bf16.mxu0 0
      %1533 = vmatpush2.bf16.msra.mxu0 %v1237
      %1534 = vmatprep.subr.bf16.mxu0 0
      %1535 = vmatpush2.bf16.msra.mxu0 %v1236
      %1536 = vmatprep.subr.bf16.mxu0 0
      %1537 = vmatpush2.bf16.msra.mxu0 %v1235
      %1538 = vmatprep.subr.bf16.mxu0 0
      %1539 = vmatpush2.bf16.msra.mxu0 %v1234
      %1540 = vmatprep.subr.bf16.mxu0 0
      %1541 = vmatpush2.bf16.msra.mxu0 %v1233
      %1542 = vmatprep.subr.bf16.mxu0 0
      %1543 = vmatpush2.bf16.msra.mxu0 %v1232
      %1544 = vmatprep.mubr.bf16.mxu0 %v613
      %1545 = vmatmul.mubr.bf16.gmra.mxu0 %v612
      %v1546 = vpop.f32.mrf.mxu0
      %v1547 = vadd.f32 0.0, %v1546
      %v1548 = vpop.f32.mrf.mxu0
      %v1549 = vpop.f32.mrf.mxu0
      %v1550 = vpop.f32.mrf.mxu0
      %1551 = vdwg.mxu0
      %1552 = vmatprep.subr.bf16.mxu0 0
      %1553 = vmatpush1.bf16.msra.mxu0 %v1247
      %1554 = vmatprep.subr.bf16.mxu0 0
      %1555 = vmatpush1.bf16.msra.mxu0 %v1246
      %1556 = vmatprep.subr.bf16.mxu0 0
      %1557 = vmatpush1.bf16.msra.mxu0 %v1245
      %1558 = vmatprep.subr.bf16.mxu0 0
      %1559 = vmatpush1.bf16.msra.mxu0 %v1244
      %1560 = vmatprep.subr.bf16.mxu0 0
      %1561 = vmatpush1.bf16.msra.mxu0 %v1243
      %1562 = vmatprep.subr.bf16.mxu0 0
      %1563 = vmatpush1.bf16.msra.mxu0 %v1242
      %1564 = vmatprep.subr.bf16.mxu0 0
      %1565 = vmatpush1.bf16.msra.mxu0 %v1241
      %1566 = vmatprep.subr.bf16.mxu0 0
      %1567 = vmatpush1.bf16.msra.mxu0 %v1240
      %1568 = vmatprep.subr.bf16.mxu0 0
      %1569 = vmatpush2.bf16.msra.mxu0 %v1255
      %1570 = vmatprep.subr.bf16.mxu0 0
      %1571 = vmatpush2.bf16.msra.mxu0 %v1254
      %1572 = vmatprep.subr.bf16.mxu0 0
      %1573 = vmatpush2.bf16.msra.mxu0 %v1253
      %1574 = vmatprep.subr.bf16.mxu0 0
      %1575 = vmatpush2.bf16.msra.mxu0 %v1252
      %1576 = vmatprep.subr.bf16.mxu0 0
      %1577 = vmatpush2.bf16.msra.mxu0 %v1251
      %1578 = vmatprep.subr.bf16.mxu0 0
      %1579 = vmatpush2.bf16.msra.mxu0 %v1250
      %1580 = vmatprep.subr.bf16.mxu0 0
      %1581 = vmatpush2.bf16.msra.mxu0 %v1249
      %1582 = vmatprep.subr.bf16.mxu0 0
      %1583 = vmatpush2.bf16.msra.mxu0 %v1248
      %1584 = vmatprep.mubr.bf16.mxu0 %v615
      %1585 = vmatmul.mubr.bf16.gmra.mxu0 %v614
      %v1586 = vpop.f32.mrf.mxu0
      %v1587 = vadd.f32 %v1547, %v1586
      %v1588 = vpop.f32.mrf.mxu0
      %v1589 = vpop.f32.mrf.mxu0
      %v1590 = vpop.f32.mrf.mxu0
      %1591 = vdwg.mxu0
      %1592 = vmatprep.subr.bf16.mxu0 0
      %1593 = vmatpush1.bf16.msra.mxu0 %v1263
      %1594 = vmatprep.subr.bf16.mxu0 0
      %1595 = vmatpush1.bf16.msra.mxu0 %v1262
      %1596 = vmatprep.subr.bf16.mxu0 0
      %1597 = vmatpush1.bf16.msra.mxu0 %v1261
      %1598 = vmatprep.subr.bf16.mxu0 0
      %1599 = vmatpush1.bf16.msra.mxu0 %v1260
      %1600 = vmatprep.subr.bf16.mxu0 0
      %1601 = vmatpush1.bf16.msra.mxu0 %v1259
      %1602 = vmatprep.subr.bf16.mxu0 0
      %1603 = vmatpush1.bf16.msra.mxu0 %v1258
      %1604 = vmatprep.subr.bf16.mxu0 0
      %1605 = vmatpush1.bf16.msra.mxu0 %v1257
      %1606 = vmatprep.subr.bf16.mxu0 0
      %1607 = vmatpush1.bf16.msra.mxu0 %v1256
      %1608 = vmatprep.subr.bf16.mxu0 0
      %1609 = vmatpush2.bf16.msra.mxu0 %v1271
      %1610 = vmatprep.subr.bf16.mxu0 0
      %1611 = vmatpush2.bf16.msra.mxu0 %v1270
      %1612 = vmatprep.subr.bf16.mxu0 0
      %1613 = vmatpush2.bf16.msra.mxu0 %v1269
      %1614 = vmatprep.subr.bf16.mxu0 0
      %1615 = vmatpush2.bf16.msra.mxu0 %v1268
      %1616 = vmatprep.subr.bf16.mxu0 0
      %1617 = vmatpush2.bf16.msra.mxu0 %v1267
      %1618 = vmatprep.subr.bf16.mxu0 0
      %1619 = vmatpush2.bf16.msra.mxu0 %v1266
      %1620 = vmatprep.subr.bf16.mxu0 0
      %1621 = vmatpush2.bf16.msra.mxu0 %v1265
      %1622 = vmatprep.subr.bf16.mxu0 0
      %1623 = vmatpush2.bf16.msra.mxu0 %v1264
      %1624 = vmatprep.mubr.bf16.mxu0 %v617
      %1625 = vmatmul.mubr.bf16.gmra.mxu0 %v616
      %v1626 = vpop.f32.mrf.mxu0
      %v1627 = vadd.f32 %v1587, %v1626
      %v1628 = vpop.f32.mrf.mxu0
      %v1629 = vpop.f32.mrf.mxu0
      %v1630 = vpop.f32.mrf.mxu0
      %1631 = vdwg.mxu0
      %1632 = vmatprep.subr.bf16.mxu0 0
      %1633 = vmatpush1.bf16.msra.mxu0 %v1279
      %1634 = vmatprep.subr.bf16.mxu0 0
      %1635 = vmatpush1.bf16.msra.mxu0 %v1278
      %1636 = vmatprep.subr.bf16.mxu0 0
      %1637 = vmatpush1.bf16.msra.mxu0 %v1277
      %1638 = vmatprep.subr.bf16.mxu0 0
      %1639 = vmatpush1.bf16.msra.mxu0 %v1276
      %1640 = vmatprep.subr.bf16.mxu0 0
      %1641 = vmatpush1.bf16.msra.mxu0 %v1275
      %1642 = vmatprep.subr.bf16.mxu0 0
      %1643 = vmatpush1.bf16.msra.mxu0 %v1274
      %1644 = vmatprep.subr.bf16.mxu0 0
      %1645 = vmatpush1.bf16.msra.mxu0 %v1273
      %1646 = vmatprep.subr.bf16.mxu0 0
      %1647 = vmatpush1.bf16.msra.mxu0 %v1272
      %1648 = vmatprep.subr.bf16.mxu0 0
      %1649 = vmatpush2.bf16.msra.mxu0 %v1287
      %1650 = vmatprep.subr.bf16.mxu0 0
      %1651 = vmatpush2.bf16.msra.mxu0 %v1286
      %1652 = vmatprep.subr.bf16.mxu0 0
      %1653 = vmatpush2.bf16.msra.mxu0 %v1285
      %1654 = vmatprep.subr.bf16.mxu0 0
      %1655 = vmatpush2.bf16.msra.mxu0 %v1284
      %1656 = vmatprep.subr.bf16.mxu0 0
      %1657 = vmatpush2.bf16.msra.mxu0 %v1283
      %1658 = vmatprep.subr.bf16.mxu0 0
      %1659 = vmatpush2.bf16.msra.mxu0 %v1282
      %1660 = vmatprep.subr.bf16.mxu0 0
      %1661 = vmatpush2.bf16.msra.mxu0 %v1281
      %1662 = vmatprep.subr.bf16.mxu0 0
      %1663 = vmatpush2.bf16.msra.mxu0 %v1280
      %1664 = vmatprep.mubr.bf16.mxu0 %v619
      %1665 = vmatmul.mubr.bf16.gmra.mxu0 %v618
      %v1666 = vpop.f32.mrf.mxu0
      %v1667 = vadd.f32 %v1627, %v1666
      %v1668 = vpop.f32.mrf.mxu0
      %v1669 = vpop.f32.mrf.mxu0
      %v1670 = vpop.f32.mrf.mxu0
      %1671 = vdwg.mxu0
      %1672 = vmatprep.subr.bf16.mxu0 0
      %1673 = vmatpush1.bf16.msra.mxu0 %v1295
      %1674 = vmatprep.subr.bf16.mxu0 0
      %1675 = vmatpush1.bf16.msra.mxu0 %v1294
      %1676 = vmatprep.subr.bf16.mxu0 0
      %1677 = vmatpush1.bf16.msra.mxu0 %v1293
      %1678 = vmatprep.subr.bf16.mxu0 0
      %1679 = vmatpush1.bf16.msra.mxu0 %v1292
      %1680 = vmatprep.subr.bf16.mxu0 0
      %1681 = vmatpush1.bf16.msra.mxu0 %v1291
      %1682 = vmatprep.subr.bf16.mxu0 0
      %1683 = vmatpush1.bf16.msra.mxu0 %v1290
      %1684 = vmatprep.subr.bf16.mxu0 0
      %1685 = vmatpush1.bf16.msra.mxu0 %v1289
      %1686 = vmatprep.subr.bf16.mxu0 0
      %1687 = vmatpush1.bf16.msra.mxu0 %v1288
      %1688 = vmatprep.subr.bf16.mxu0 0
      %1689 = vmatpush2.bf16.msra.mxu0 %v1303
      %1690 = vmatprep.subr.bf16.mxu0 0
      %1691 = vmatpush2.bf16.msra.mxu0 %v1302
      %1692 = vmatprep.subr.bf16.mxu0 0
      %1693 = vmatpush2.bf16.msra.mxu0 %v1301
      %1694 = vmatprep.subr.bf16.mxu0 0
      %1695 = vmatpush2.bf16.msra.mxu0 %v1300
      %1696 = vmatprep.subr.bf16.mxu0 0
      %1697 = vmatpush2.bf16.msra.mxu0 %v1299
      %1698 = vmatprep.subr.bf16.mxu0 0
      %1699 = vmatpush2.bf16.msra.mxu0 %v1298
      %1700 = vmatprep.subr.bf16.mxu0 0
      %1701 = vmatpush2.bf16.msra.mxu0 %v1297
      %1702 = vmatprep.subr.bf16.mxu0 0
      %1703 = vmatpush2.bf16.msra.mxu0 %v1296
      %1704 = vmatprep.mubr.bf16.mxu0 %v621
      %1705 = vmatmul.mubr.bf16.gmra.mxu0 %v620
      %v1706 = vpop.f32.mrf.mxu0
      %v1707 = vadd.f32 %v1667, %v1706
      %v1708 = vpop.f32.mrf.mxu0
      %v1709 = vpop.f32.mrf.mxu0
      %v1710 = vpop.f32.mrf.mxu0
      %1711 = vdwg.mxu0
      %1712 = vmatprep.subr.bf16.mxu0 0
      %1713 = vmatpush1.bf16.msra.mxu0 %v1311
      %1714 = vmatprep.subr.bf16.mxu0 0
      %1715 = vmatpush1.bf16.msra.mxu0 %v1310
      %1716 = vmatprep.subr.bf16.mxu0 0
      %1717 = vmatpush1.bf16.msra.mxu0 %v1309
      %1718 = vmatprep.subr.bf16.mxu0 0
      %1719 = vmatpush1.bf16.msra.mxu0 %v1308
      %1720 = vmatprep.subr.bf16.mxu0 0
      %1721 = vmatpush1.bf16.msra.mxu0 %v1307
      %1722 = vmatprep.subr.bf16.mxu0 0
      %1723 = vmatpush1.bf16.msra.mxu0 %v1306
      %1724 = vmatprep.subr.bf16.mxu0 0
      %1725 = vmatpush1.bf16.msra.mxu0 %v1305
      %1726 = vmatprep.subr.bf16.mxu0 0
      %1727 = vmatpush1.bf16.msra.mxu0 %v1304
      %1728 = vmatprep.subr.bf16.mxu0 0
      %1729 = vmatpush2.bf16.msra.mxu0 %v1319
      %1730 = vmatprep.subr.bf16.mxu0 0
      %1731 = vmatpush2.bf16.msra.mxu0 %v1318
      %1732 = vmatprep.subr.bf16.mxu0 0
      %1733 = vmatpush2.bf16.msra.mxu0 %v1317
      %1734 = vmatprep.subr.bf16.mxu0 0
      %1735 = vmatpush2.bf16.msra.mxu0 %v1316
      %1736 = vmatprep.subr.bf16.mxu0 0
      %1737 = vmatpush2.bf16.msra.mxu0 %v1315
      %1738 = vmatprep.subr.bf16.mxu0 0
      %1739 = vmatpush2.bf16.msra.mxu0 %v1314
      %1740 = vmatprep.subr.bf16.mxu0 0
      %1741 = vmatpush2.bf16.msra.mxu0 %v1313
      %1742 = vmatprep.subr.bf16.mxu0 0
      %1743 = vmatpush2.bf16.msra.mxu0 %v1312
      %1744 = vmatprep.mubr.bf16.mxu0 %v623
      %1745 = vmatmul.mubr.bf16.gmra.mxu0 %v622
      %v1746 = vpop.f32.mrf.mxu0
      %v1747 = vadd.f32 %v1707, %v1746
      %v1748 = vpop.f32.mrf.mxu0
      %v1749 = vpop.f32.mrf.mxu0
      %v1750 = vpop.f32.mrf.mxu0
      %1751 = vdwg.mxu0
      %1752 = vmatprep.subr.bf16.mxu0 0
      %1753 = vmatpush1.bf16.msra.mxu0 %v1327
      %1754 = vmatprep.subr.bf16.mxu0 0
      %1755 = vmatpush1.bf16.msra.mxu0 %v1326
      %1756 = vmatprep.subr.bf16.mxu0 0
      %1757 = vmatpush1.bf16.msra.mxu0 %v1325
      %1758 = vmatprep.subr.bf16.mxu0 0
      %1759 = vmatpush1.bf16.msra.mxu0 %v1324
      %1760 = vmatprep.subr.bf16.mxu0 0
      %1761 = vmatpush1.bf16.msra.mxu0 %v1323
      %1762 = vmatprep.subr.bf16.mxu0 0
      %1763 = vmatpush1.bf16.msra.mxu0 %v1322
      %1764 = vmatprep.subr.bf16.mxu0 0
      %1765 = vmatpush1.bf16.msra.mxu0 %v1321
      %1766 = vmatprep.subr.bf16.mxu0 0
      %1767 = vmatpush1.bf16.msra.mxu0 %v1320
      %1768 = vmatprep.subr.bf16.mxu0 0
      %1769 = vmatpush2.bf16.msra.mxu0 %v1335
      %1770 = vmatprep.subr.bf16.mxu0 0
      %1771 = vmatpush2.bf16.msra.mxu0 %v1334
      %1772 = vmatprep.subr.bf16.mxu0 0
      %1773 = vmatpush2.bf16.msra.mxu0 %v1333
      %1774 = vmatprep.subr.bf16.mxu0 0
      %1775 = vmatpush2.bf16.msra.mxu0 %v1332
      %1776 = vmatprep.subr.bf16.mxu0 0
      %1777 = vmatpush2.bf16.msra.mxu0 %v1331
      %1778 = vmatprep.subr.bf16.mxu0 0
      %1779 = vmatpush2.bf16.msra.mxu0 %v1330
      %1780 = vmatprep.subr.bf16.mxu0 0
      %1781 = vmatpush2.bf16.msra.mxu0 %v1329
      %1782 = vmatprep.subr.bf16.mxu0 0
      %1783 = vmatpush2.bf16.msra.mxu0 %v1328
      %1784 = vmatprep.mubr.bf16.mxu0 %v625
      %1785 = vmatmul.mubr.bf16.gmra.mxu0 %v624
      %v1786 = vpop.f32.mrf.mxu0
      %v1787 = vadd.f32 %v1747, %v1786
      %v1788 = vpop.f32.mrf.mxu0
      %v1789 = vpop.f32.mrf.mxu0
      %v1790 = vpop.f32.mrf.mxu0
      %1791 = vdwg.mxu0
      %1792 = vmatprep.subr.bf16.mxu0 0
      %1793 = vmatpush1.bf16.msra.mxu0 %v1343
      %1794 = vmatprep.subr.bf16.mxu0 0
      %1795 = vmatpush1.bf16.msra.mxu0 %v1342
      %1796 = vmatprep.subr.bf16.mxu0 0
      %1797 = vmatpush1.bf16.msra.mxu0 %v1341
      %1798 = vmatprep.subr.bf16.mxu0 0
      %1799 = vmatpush1.bf16.msra.mxu0 %v1340
      %1800 = vmatprep.subr.bf16.mxu0 0
      %1801 = vmatpush1.bf16.msra.mxu0 %v1339
      %1802 = vmatprep.subr.bf16.mxu0 0
      %1803 = vmatpush1.bf16.msra.mxu0 %v1338
      %1804 = vmatprep.subr.bf16.mxu0 0
      %1805 = vmatpush1.bf16.msra.mxu0 %v1337
      %1806 = vmatprep.subr.bf16.mxu0 0
      %1807 = vmatpush1.bf16.msra.mxu0 %v1336
      %1808 = vmatprep.subr.bf16.mxu0 0
      %1809 = vmatpush2.bf16.msra.mxu0 %v1351
      %1810 = vmatprep.subr.bf16.mxu0 0
      %1811 = vmatpush2.bf16.msra.mxu0 %v1350
      %1812 = vmatprep.subr.bf16.mxu0 0
      %1813 = vmatpush2.bf16.msra.mxu0 %v1349
      %1814 = vmatprep.subr.bf16.mxu0 0
      %1815 = vmatpush2.bf16.msra.mxu0 %v1348
      %1816 = vmatprep.subr.bf16.mxu0 0
      %1817 = vmatpush2.bf16.msra.mxu0 %v1347
      %1818 = vmatprep.subr.bf16.mxu0 0
      %1819 = vmatpush2.bf16.msra.mxu0 %v1346
      %1820 = vmatprep.subr.bf16.mxu0 0
      %1821 = vmatpush2.bf16.msra.mxu0 %v1345
      %1822 = vmatprep.subr.bf16.mxu0 0
      %1823 = vmatpush2.bf16.msra.mxu0 %v1344
      %1824 = vmatprep.mubr.bf16.mxu0 %v627
      %1825 = vmatmul.mubr.bf16.gmra.mxu0 %v626
      %v1826 = vpop.f32.mrf.mxu0
      %v1827 = vadd.f32 %v1787, %v1826
      %v1828 = vpop.f32.mrf.mxu0
      %v1829 = vpop.f32.mrf.mxu0
      %v1830 = vpop.f32.mrf.mxu0
      %1831 = vdwg.mxu0
      %1832 = vmatprep.subr.bf16.mxu0 0
      %1833 = vmatpush1.bf16.msra.mxu0 %v1359
      %1834 = vmatprep.subr.bf16.mxu0 0
      %1835 = vmatpush1.bf16.msra.mxu0 %v1358
      %1836 = vmatprep.subr.bf16.mxu0 0
      %1837 = vmatpush1.bf16.msra.mxu0 %v1357
      %1838 = vmatprep.subr.bf16.mxu0 0
      %1839 = vmatpush1.bf16.msra.mxu0 %v1356
      %1840 = vmatprep.subr.bf16.mxu0 0
      %1841 = vmatpush1.bf16.msra.mxu0 %v1355
      %1842 = vmatprep.subr.bf16.mxu0 0
      %1843 = vmatpush1.bf16.msra.mxu0 %v1354
      %1844 = vmatprep.subr.bf16.mxu0 0
      %1845 = vmatpush1.bf16.msra.mxu0 %v1353
      %1846 = vmatprep.subr.bf16.mxu0 0
      %1847 = vmatpush1.bf16.msra.mxu0 %v1352
      %1848 = vmatprep.subr.bf16.mxu0 0
      %1849 = vmatpush2.bf16.msra.mxu0 %v1367
      %1850 = vmatprep.subr.bf16.mxu0 0
      %1851 = vmatpush2.bf16.msra.mxu0 %v1366
      %1852 = vmatprep.subr.bf16.mxu0 0
      %1853 = vmatpush2.bf16.msra.mxu0 %v1365
      %1854 = vmatprep.subr.bf16.mxu0 0
      %1855 = vmatpush2.bf16.msra.mxu0 %v1364
      %1856 = vmatprep.subr.bf16.mxu0 0
      %1857 = vmatpush2.bf16.msra.mxu0 %v1363
      %1858 = vmatprep.subr.bf16.mxu0 0
      %1859 = vmatpush2.bf16.msra.mxu0 %v1362
      %1860 = vmatprep.subr.bf16.mxu0 0
      %1861 = vmatpush2.bf16.msra.mxu0 %v1361
      %1862 = vmatprep.subr.bf16.mxu0 0
      %1863 = vmatpush2.bf16.msra.mxu0 %v1360
      %1864 = vmatprep.mubr.bf16.mxu0 %v629
      %1865 = vmatmul.mubr.bf16.gmra.mxu0 %v628
      %v1866 = vpop.f32.mrf.mxu0
      %v1867 = vadd.f32 %v1827, %v1866
      %v1868 = vpop.f32.mrf.mxu0
      %v1869 = vpop.f32.mrf.mxu0
      %v1870 = vpop.f32.mrf.mxu0
      %1871 = vdwg.mxu0
      %v1872 = vadd.f32 %v287, %v1867
      %1873 = vst [vmem:[#allocation2] sm:$0xff] %v1872
      %p1874 = scmp.eq.s32.totalorder %s21, 3
      // Predicated region
      $region45: #{convnet_forward.3} parent=39 // pred_check
        %p1875 = pneg %p1874
      $region46: #{convnet_forward.3} parent=39 // pred_check_branch
        %1877 = sbr.rel (%p1875) target = $region48
      $region47: #{convnet_forward.3} parent=39 // pred_region
        %v1878 = vld [vmem:[#allocation2] sm:$0xff]
        %v1879 = vmax.f32 %v1878, 0.0
        %v1880 = vpack.c.bf16 %v1879, %v1879
        %v1881 = vld [vmem:[%s3] sm:$0xf]
        %v1882 = vld [vmem:[%s3 + $0x4] sm:$0xf]
        %v1883 = vld [vmem:[%s3 + $0x8] sm:$0xf]
        %v1884 = vld [vmem:[%s3 + $0xc] sm:$0xf]
        %v1885 = vld [vmem:[%s3 + $0x10] sm:$0xf]
        %v1886 = vld [vmem:[%s3 + $0x14] sm:$0xf]
        %v1887 = vld [vmem:[%s3 + $0x18] sm:$0xf]
        %v1888 = vld [vmem:[%s3 + $0x1c] sm:$0xf]
        %v1889 = vld [vmem:[%s3 + $0x20] sm:$0xf]
        %v1890 = vld [vmem:[%s3 + $0x24] sm:$0xf]
        %v1891 = vld [vmem:[%s3 + $0x28] sm:$0xf]
        %v1892 = vld [vmem:[%s3 + $0x2c] sm:$0xf]
        %v1893 = vld [vmem:[%s3 + $0x30] sm:$0xf]
        %v1894 = vld [vmem:[%s3 + $0x34] sm:$0xf]
        %v1895 = vld [vmem:[%s3 + $0x38] sm:$0xf]
        %v1896 = vld [vmem:[%s3 + $0x3c] sm:$0xf]
        %v1897 = vld [vmem:[%s4] sm:$0x1]
        %v1899 = vlaneseq
        %v1900 = vshrl.u32 %v1899, 7
        %v1901 = vsub.s32 0, %v1900
        %v1902 = vrot.slane %v1897, %v1901
        %v1920 = vunpack.c.l.b16 %v1881
        %v1921 = vunpack.c.l.b16 %v1882
        %v1922 = vunpack.c.l.b16 %v1883
        %v1923 = vunpack.c.l.b16 %v1884
        %v1924 = vunpack.c.l.b16 %v1885
        %v1925 = vunpack.c.l.b16 %v1886
        %v1926 = vunpack.c.l.b16 %v1887
        %v1927 = vunpack.c.l.b16 %v1888
        %v1928 = vunpack.c.l.b16 %v1889
        %v1929 = vunpack.c.l.b16 %v1890
        %v1930 = vunpack.c.l.b16 %v1891
        %v1931 = vunpack.c.l.b16 %v1892
        %v1932 = vunpack.c.l.b16 %v1893
        %v1933 = vunpack.c.l.b16 %v1894
        %v1934 = vunpack.c.l.b16 %v1895
        %v1935 = vunpack.c.l.b16 %v1896
        %v1936 = vpack.c.b16 %v1921, %v1920
        %v1937 = vpack.c.b16 %v1923, %v1922
        %v1938 = vpack.c.b16 %v1925, %v1924
        %v1939 = vpack.c.b16 %v1927, %v1926
        %v1940 = vpack.c.b16 %v1929, %v1928
        %v1941 = vpack.c.b16 %v1931, %v1930
        %v1942 = vpack.c.b16 %v1933, %v1932
        %v1943 = vpack.c.b16 %v1935, %v1934
        %1952 = vmatprep.subr.bf16.mxu0 0
        %1953 = vmatpush1.bf16.msra.mxu0 %v1943
        %1954 = vmatprep.subr.bf16.mxu0 0
        %1955 = vmatpush1.bf16.msra.mxu0 %v1942
        %1956 = vmatprep.subr.bf16.mxu0 0
        %1957 = vmatpush1.bf16.msra.mxu0 %v1941
        %1958 = vmatprep.subr.bf16.mxu0 0
        %1959 = vmatpush1.bf16.msra.mxu0 %v1940
        %1960 = vmatprep.subr.bf16.mxu0 0
        %1961 = vmatpush1.bf16.msra.mxu0 %v1939
        %1962 = vmatprep.subr.bf16.mxu0 0
        %1963 = vmatpush1.bf16.msra.mxu0 %v1938
        %1964 = vmatprep.subr.bf16.mxu0 0
        %1965 = vmatpush1.bf16.msra.mxu0 %v1937
        %1966 = vmatprep.subr.bf16.mxu0 0
        %1967 = vmatpush1.bf16.msra.mxu0 %v1936
        %1968 = vmatprep.subr.bf16.mxu0 0
        %1969 = vmatpush2.bf16.msra.mxu0 0
        %1970 = vmatprep.subr.bf16.mxu0 0
        %1971 = vmatpush2.bf16.msra.mxu0 0
        %1972 = vmatprep.subr.bf16.mxu0 0
        %1973 = vmatpush2.bf16.msra.mxu0 0
        %1974 = vmatprep.subr.bf16.mxu0 0
        %1975 = vmatpush2.bf16.msra.mxu0 0
        %1976 = vmatprep.subr.bf16.mxu0 0
        %1977 = vmatpush2.bf16.msra.mxu0 0
        %1978 = vmatprep.subr.bf16.mxu0 0
        %1979 = vmatpush2.bf16.msra.mxu0 0
        %1980 = vmatprep.subr.bf16.mxu0 0
        %1981 = vmatpush2.bf16.msra.mxu0 0
        %1982 = vmatprep.subr.bf16.mxu0 0
        %1983 = vmatpush2.bf16.msra.mxu0 0
        %1984 = vmatprep.mubr.bf16.mxu0 0
        %1985 = vmatmul.mubr.bf16.gmra.mxu0 %v1880
        %v1986 = vpop.f32.mrf.mxu0
        %v1987 = vadd.f32 %v1902, %v1986
        %v1988 = vpop.f32.mrf.mxu0
        %v1989 = vpop.f32.mrf.mxu0
        %v1990 = vpop.f32.mrf.mxu0
        %1991 = vdwg.mxu0
        %1992 = vst [vmem:[%s272] sm:$0xff] %v1987
      $region48: #{convnet_forward.3} parent=39 // pred_fallthru
        _
      %p1993 = scmp.lt.s32.totalorder %s20, 0
      %s1994 = scalar_select %p1993, %s20, 0
      %s1995 = smul.addr %s1994, 8
      %s1996 = scalar_lea.vmem %s5, %s1995
      // Predicated region
      $region49: #{convnet_forward.3} parent=39 // pred_check
        %p1997 = pneg %p163
      $region50: #{convnet_forward.3} parent=39 // pred_check_branch
        %1999 = sbr.rel (%p1997) target = $region52
      $region51: #{convnet_forward.3} parent=39 // pred_region
        _
      $region52: #{convnet_forward.3} parent=39 // pred_fallthru
        _
      // Predicated region
      $region53: #{convnet_forward.3} parent=39 // pred_check
        %p2000 = pneg %p163
      $region54: #{convnet_forward.3} parent=39 // pred_check_branch
        %2002 = sbr.rel (%p2000) target = $region56
      $region55: #{convnet_forward.3} parent=39 // pred_region
        %p2003 = scmp.lt.s32.totalorder %s20, 0
        %s2004 = scalar_select %p2003, %s20, 0
        %s2005 = smul.addr %s2004, 8
        %s2006 = scalar_lea.vmem %s5, %s2005
      $region56: #{convnet_forward.3} parent=39 // pred_fallthru
        _
    $region40: #{convnet_forward.3} parent=5 // pred_fallthru
      _
    %p2007 = scmp.le.s32.totalorder 2, %s11
    // Predicated region
    $region57: #{convnet_forward.3} parent=5 // pred_check
      %p2008 = pneg %p2007
    $region58: #{convnet_forward.3} parent=5 // pred_check_branch
      %2010 = sbr.rel (%p2008) target = $region60
    $region59: #{convnet_forward.3} parent=5 // pred_region
      %s2011 = ssub.s32 %s11, 2
    $region60: #{convnet_forward.3} parent=5 // pred_fallthru
      _
  $region6: #{convnet_forward.3} parent=0 // loop_footer
    %s15 = sadd.s32 1, %s11
  $region7: #{convnet_forward.3} parent=0 // loop_footer_branch
    %10 = sbr.rel target = $region3
  $region8: #{convnet_forward.3} parent=0 // loop_exit
    _

// kernel: convnet_forward.2
$region0: #{convnet_forward.2}
  #allocation0 [shape = 'u32[]', space=smem, size = 0x4, offset = 0x4, fixed_abs, tag = 'smem constant byte address 0x4 - core index']
  #allocation1 [shape = 'u32[144,128]{1,0:T(1,128)}', space=vmem, size = 0x12000, scoped, tag = 'internal scratch']
  #allocation2 [shape = 'f32[624,96]{1,0:T(8,128)}', space=vmem, size = 0x4e000, scoped, tag = 'scratch operand']
  #allocation3 [shape = 'f32[24,24,64]{2,1,0:T(8,128)}', space=vmem, size = 0x48000, scoped, tag = 'scratch operand']
  %s0 = inlined_call_operand.vmem [shape: bf16[2,624,15], index: 0, kind: input, shape index: {}]
  %s1 = inlined_call_operand.hbm [shape: bf16[15,96], index: 1, kind: input, shape index: {}]
  %s2 = inlined_call_operand.hbm [shape: f32[1,96], index: 2, kind: input, shape index: {}]
  %s3 = inlined_call_operand.vmem [shape: bf16[3,96,64], index: 3, kind: input, shape index: {}]
  %s4 = inlined_call_operand.hbm [shape: f32[1,1,64], index: 4, kind: input, shape index: {}]
  %s5 = inlined_call_operand.vmem [shape: bf16[2,12,12,64], index: 5, kind: output, shape index: {}]
  %s6 = sld [smem:[#allocation0]]
  $region65: #{convnet_forward.2} parent=0
    _
  %s8 = ssub.s32 1, %s6
  %s9 = scalar_select 0, %s8, %s6
  $region1: #{convnet_forward.2} parent=0
    #allocation4 [shape = 'u8[4096]{0}', space=vmem, size = 0x1000, scoped, tag = 'input window, operand 1, single buffered']
    #allocation5 [shape = 's32[2]{0}', space=sflag, size = 0x8, scoped, tag = 'scoped memory for convnet_forward.2']
    #allocation6 [shape = 'u8[512]{0}', space=vmem, size = 0x400, scoped, tag = 'input window, operand 2, single buffered']
    #allocation7 [shape = 's32[1]{0}', space=sflag, size = 0x4, scoped, tag = 'scoped memory for convnet_forward.2']
    #allocation8 [shape = 'u8[512]{0}', space=vmem, size = 0x400, scoped, tag = 'input window, operand 4, single buffered']
    %10 = vsyncpa [#allocation5], 0
    %11 = vsyncpa [#allocation7], 0
    loop: start=0, step=1, limit=4
    $region2: #{convnet_forward.2} parent=1 // loop_pre_header
      _
    $region3: #{convnet_forward.2} parent=1 // loop_header
      %s13 = sphi 0, %s17
      %p14 = scmp.ge.s32.totalorder %s13, 4
      %s23 = sphi 0, %s25
      %s26 = sphi 0, %s23
      %s27 = sphi 0, %s26
      %s43 = sphi 0, %s27
      %s47 = sphi 0, %s47
      %s49 = sphi 0, %s47
      %s50 = sphi 0, %s49
      %s64 = sphi 0, %s50
      %s68 = sphi 0, %s68
      %s70 = sphi 0, %s68
      %s71 = sphi 0, %s70
      %s85 = sphi 0, %s71
      %s89 = sphi 0, %s89
      %s91 = sphi 0, %s89
      %s92 = sphi 0, %s91
      %s106 = sphi 0, %s92
      %s110 = sphi 0, %s110
      %s112 = sphi 0, %s110
      %s113 = sphi 0, %s112
      %s127 = sphi 0, %s113
      %s133 = sphi 0, %s135
      %s136 = sphi 0, %s133
      %s137 = sphi 0, %s136
      %s153 = sphi 0, %s137
    $region4: #{convnet_forward.2} parent=1 // loop_header_branch
      %16 = sbr.rel (%p14) target = $region8
    $region5: #{convnet_forward.2} parent=1 // loop_body
      %s18 = ssub.s32 %s13, 1
      %s19 = ssub.s32 %s13, 2
      %s20 = sadd.s32 %s13, 1
      %s21 = ssub.s32 %s13, %s20
      %p22 = scmp.eq.s32.totalorder %s21, 0
      %s24 = sadd.s32 %s23, 1
      %s25 = scalar_select %p22, %s23, %s24
      %p28 = pneg %p22
      %p29 = scmp.eq.s32.totalorder %s13, 1
      %p30 = por %p28, %p29
      %p31 = scmp.ne.s32.totalorder %s23, %s26
      %p32 = scmp.eq.s32.totalorder %s13, 0
      %p33 = por %p31, %p32
      %p34 = scmp.ne.s32.totalorder %s23, %s26
      %p35 = scmp.eq.s32.totalorder %s18, 1
      %p36 = por %p34, %p35
      %p37 = scmp.ne.s32.totalorder %s26, %s27
      %p38 = scmp.eq.s32.totalorder %s18, 0
      %p39 = por %p37, %p38
      %p40 = scmp.ne.s32.totalorder %s26, %s27
      %p41 = scmp.eq.s32.totalorder %s19, 1
      %p42 = por %p40, %p41
      %p44 = scmp.ne.s32.totalorder %s27, %s43
      %p45 = scmp.eq.s32.totalorder %s19, 0
      %p46 = por %p44, %p45
      %s48 = sadd.s32 %s47, 1
      %p51 = scmp.eq.s32.totalorder %s13, 1
      %p52 = scmp.ne.s32.totalorder %s47, %s49
      %p53 = scmp.eq.s32.totalorder %s13, 0
      %p54 = por %p52, %p53
      %p55 = scmp.ne.s32.totalorder %s47, %s49
      %p56 = scmp.eq.s32.totalorder %s18, 1
      %p57 = por %p55, %p56
      %p58 = scmp.ne.s32.totalorder %s49, %s50
      %p59 = scmp.eq.s32.totalorder %s18, 0
      %p60 = por %p58, %p59
      %p61 = scmp.ne.s32.totalorder %s49, %s50
      %p62 = scmp.eq.s32.totalorder %s19, 1
      %p63 = por %p61, %p62
      %p65 = scmp.ne.s32.totalorder %s50, %s64
      %p66 = scmp.eq.s32.totalorder %s19, 0
      %p67 = por %p65, %p66
      %s69 = sadd.s32 %s68, 1
      %p72 = scmp.eq.s32.totalorder %s13, 1
      %p73 = scmp.ne.s32.totalorder %s68, %s70
      %p74 = scmp.eq.s32.totalorder %s13, 0
      %p75 = por %p73, %p74
      %p76 = scmp.ne.s32.totalorder %s68, %s70
      %p77 = scmp.eq.s32.totalorder %s18, 1
      %p78 = por %p76, %p77
      %p79 = scmp.ne.s32.totalorder %s70, %s71
      %p80 = scmp.eq.s32.totalorder %s18, 0
      %p81 = por %p79, %p80
      %p82 = scmp.ne.s32.totalorder %s70, %s71
      %p83 = scmp.eq.s32.totalorder %s19, 1
      %p84 = por %p82, %p83
      %p86 = scmp.ne.s32.totalorder %s71, %s85
      %p87 = scmp.eq.s32.totalorder %s19, 0
      %p88 = por %p86, %p87
      %s90 = sadd.s32 %s89, 1
      %p93 = scmp.eq.s32.totalorder %s13, 1
      %p94 = scmp.ne.s32.totalorder %s89, %s91
      %p95 = scmp.eq.s32.totalorder %s13, 0
      %p96 = por %p94, %p95
      %p97 = scmp.ne.s32.totalorder %s89, %s91
      %p98 = scmp.eq.s32.totalorder %s18, 1
      %p99 = por %p97, %p98
      %p100 = scmp.ne.s32.totalorder %s91, %s92
      %p101 = scmp.eq.s32.totalorder %s18, 0
      %p102 = por %p100, %p101
      %p103 = scmp.ne.s32.totalorder %s91, %s92
      %p104 = scmp.eq.s32.totalorder %s19, 1
      %p105 = por %p103, %p104
      %p107 = scmp.ne.s32.totalorder %s92, %s106
      %p108 = scmp.eq.s32.totalorder %s19, 0
      %p109 = por %p107, %p108
      %s111 = sadd.s32 %s110, 1
      %p114 = scmp.eq.s32.totalorder %s13, 1
      %p115 = scmp.ne.s32.totalorder %s110, %s112
      %p116 = scmp.eq.s32.totalorder %s13, 0
      %p117 = por %p115, %p116
      %p118 = scmp.ne.s32.totalorder %s110, %s112
      %p119 = scmp.eq.s32.totalorder %s18, 1
      %p120 = por %p118, %p119
      %p121 = scmp.ne.s32.totalorder %s112, %s113
      %p122 = scmp.eq.s32.totalorder %s18, 0
      %p123 = por %p121, %p122
      %p124 = scmp.ne.s32.totalorder %s112, %s113
      %p125 = scmp.eq.s32.totalorder %s19, 1
      %p126 = por %p124, %p125
      %p128 = scmp.ne.s32.totalorder %s113, %s127
      %p129 = scmp.eq.s32.totalorder %s19, 0
      %p130 = por %p128, %p129
      %s131 = ssub.s32 %s13, %s20
      %p132 = scmp.eq.s32.totalorder %s131, 0
      %s134 = sadd.s32 %s133, 1
      %s135 = scalar_select %p132, %s133, %s134
      %p138 = pneg %p132
      %p139 = scmp.eq.s32.totalorder %s13, 1
      %p140 = por %p138, %p139
      %p141 = scmp.ne.s32.totalorder %s133, %s136
      %p142 = scmp.eq.s32.totalorder %s13, 0
      %p143 = por %p141, %p142
      %p144 = scmp.ne.s32.totalorder %s133, %s136
      %p145 = scmp.eq.s32.totalorder %s18, 1
      %p146 = por %p144, %p145
      %p147 = scmp.ne.s32.totalorder %s136, %s137
      %p148 = scmp.eq.s32.totalorder %s18, 0
      %p149 = por %p147, %p148
      %p150 = scmp.ne.s32.totalorder %s136, %s137
      %p151 = scmp.eq.s32.totalorder %s19, 1
      %p152 = por %p150, %p151
      %p154 = scmp.ne.s32.totalorder %s137, %s153
      %p155 = scmp.eq.s32.totalorder %s19, 0
      %p156 = por %p154, %p155
      %p157 = scmp.le.s32.totalorder 1, %s13
      %p158 = scmp.lt.s32.totalorder %s13, 3
      %p159 = pnand %p157, %p158
      %p160 = pneg %p159
      // Predicated region
      $region9: #{convnet_forward.2} parent=5 // pred_check
        _
      $region10: #{convnet_forward.2} parent=5 // pred_check_branch
        %162 = sbr.rel (%p159) target = $region12
      $region11: #{convnet_forward.2} parent=5 // pred_region
        %s163 = ssub.s32 %s13, 1
        // Predicated region
        $region13: #{convnet_forward.2} parent=11 // pred_check
          %p164 = pneg %p60
        $region14: #{convnet_forward.2} parent=11 // pred_check_branch
          %166 = sbr.rel (%p164) target = $region16
        $region15: #{convnet_forward.2} parent=11 // pred_region
          %s168 = ssub.s32 128, 128
          %169 = vsyncadd [#allocation5], %s168
          %s170 = sshll.u32 [#allocation4], 4
          %s171 = int_to_ptr.vmem [resolvable:$true] %s170
          %176 = dma.hbm_to_vmem [thread:$0]  %s1, 128, %s171, [#allocation5], 64, 64, 4
        $region16: #{convnet_forward.2} parent=11 // pred_fallthru
          _
        // Predicated region
        $region17: #{convnet_forward.2} parent=11 // pred_check
          %p177 = pneg %p81
        $region18: #{convnet_forward.2} parent=11 // pred_check_branch
          %179 = sbr.rel (%p177) target = $region20
        $region19: #{convnet_forward.2} parent=11 // pred_region
          %s181 = ssub.s32 16, 16
          %182 = vsyncadd [#allocation7], %s181
          %s184 = sshll.u32 [#allocation6], 4
          %s185 = int_to_ptr.vmem [resolvable:$true] %s184
          %187 = dma.hbm_to_vmem [thread:$0]  %s2, 16, %s185, [#allocation7]
        $region20: #{convnet_forward.2} parent=11 // pred_fallthru
          _
        // Predicated region
        $region21: #{convnet_forward.2} parent=11 // pred_check
          %p188 = pneg %p102
        $region22: #{convnet_forward.2} parent=11 // pred_check_branch
          %190 = sbr.rel (%p188) target = $region24
        $region23: #{convnet_forward.2} parent=11 // pred_region
          _
        $region24: #{convnet_forward.2} parent=11 // pred_fallthru
          _
        // Predicated region
        $region25: #{convnet_forward.2} parent=11 // pred_check
          %p191 = pneg %p123
        $region26: #{convnet_forward.2} parent=11 // pred_check_branch
          %193 = sbr.rel (%p191) target = $region28
        $region27: #{convnet_forward.2} parent=11 // pred_region
          %s195 = ssub.s32 16, 16
          %196 = vsyncadd [#allocation7], %s195
          %s198 = sshll.u32 [#allocation8], 4
          %s199 = int_to_ptr.vmem [resolvable:$true] %s198
          %201 = dma.hbm_to_vmem [thread:$0]  %s4, 16, %s199, [#allocation7]
        $region28: #{convnet_forward.2} parent=11 // pred_fallthru
          _
      $region12: #{convnet_forward.2} parent=5 // pred_fallthru
        _
      %p202 = scmp.lt.s32.totalorder %s13, 2
      // Predicated region
      $region29: #{convnet_forward.2} parent=5 // pred_check
        %p203 = pneg %p202
      $region30: #{convnet_forward.2} parent=5 // pred_check_branch
        %205 = sbr.rel (%p203) target = $region32
      $region31: #{convnet_forward.2} parent=5 // pred_region
        // Predicated region
        $region33: #{convnet_forward.2} parent=31 // pred_check
          %p206 = pneg %p33
        $region34: #{convnet_forward.2} parent=31 // pred_check_branch
          %208 = sbr.rel (%p206) target = $region36
        $region35: #{convnet_forward.2} parent=31 // pred_region
          %p209 = scmp.lt.s32.totalorder %s13, 1
          %s210 = scalar_select %p209, %s13, 1
          %s211 = smul.addr %s210, 78
          %s212 = smul.addr %s211, 4
          %s213 = scalar_lea.vmem %s0, %s212
        $region36: #{convnet_forward.2} parent=31 // pred_fallthru
          _
      $region32: #{convnet_forward.2} parent=5 // pred_fallthru
        _
      %p214 = scmp.le.s32.totalorder 1, %s13
      %p215 = scmp.lt.s32.totalorder %s13, 3
      %p216 = pnand %p214, %p215
      %p217 = pneg %p216
      // Predicated region
      $region37: #{convnet_forward.2} parent=5 // pred_check
        _
      $region38: #{convnet_forward.2} parent=5 // pred_check_branch
        %219 = sbr.rel (%p216) target = $region40
      $region39: #{convnet_forward.2} parent=5 // pred_region
        %s220 = ssub.s32 %s13, 1
        // Predicated region
        $region41: #{convnet_forward.2} parent=39 // pred_check
          %p221 = pneg %p60
        $region42: #{convnet_forward.2} parent=39 // pred_check_branch
          %223 = sbr.rel (%p221) target = $region44
        $region43: #{convnet_forward.2} parent=39 // pred_region
          %224 = dma.done [#allocation5], 128
        $region44: #{convnet_forward.2} parent=39 // pred_fallthru
          _
        // Predicated region
        $region45: #{convnet_forward.2} parent=39 // pred_check
          %p225 = pneg %p81
        $region46: #{convnet_forward.2} parent=39 // pred_check_branch
          %227 = sbr.rel (%p225) target = $region48
        $region47: #{convnet_forward.2} parent=39 // pred_region
          %228 = dma.done [#allocation7], 16
        $region48: #{convnet_forward.2} parent=39 // pred_fallthru
          _
        // Predicated region
        $region49: #{convnet_forward.2} parent=39 // pred_check
          %p229 = pneg %p123
        $region50: #{convnet_forward.2} parent=39 // pred_check_branch
          %231 = sbr.rel (%p229) target = $region52
        $region51: #{convnet_forward.2} parent=39 // pred_region
          %232 = dma.done [#allocation7], 16
        $region52: #{convnet_forward.2} parent=39 // pred_fallthru
          _
        %p233 = scmp.lt.s32.totalorder %s18, 1
        %s234 = scalar_select %p233, %s18, 1
        %s235 = smul.addr %s234, 78
        %s236 = smul.addr %s235, 4
        %s237 = scalar_lea.vmem %s0, %s236
        %p238 = pneg %p39
        %p239 = pneg %p36
        %p240 = pneg %p60
        %p241 = pneg %p57
        %p242 = pneg %p81
        %p243 = pneg %p78
        %p244 = pneg %p102
        %p245 = pneg %p99
        %p246 = pneg %p123
        %p247 = pneg %p120
        %p248 = pneg %p149
        %p249 = pneg %p146
        %p250 = scmp.lt.s32.totalorder %s18, 1
        %s251 = scalar_select %p250, %s18, 1
        %s252 = smul.addr %s251, 24
        %s253 = smul.addr %s252, 4
        %s254 = scalar_lea.vmem %s5, %s253
        %p255 = scmp.lt.s32.totalorder %s18, 1
        %s256 = scalar_select %p255, %s18, 1
        %s257 = smul.addr %s256, 78
        %s258 = smul.addr %s257, 4
        %s259 = scalar_lea.vmem %s0, %s258
        %p260 = scmp.lt.s32.totalorder %s18, 1
        %s261 = scalar_select %p260, %s18, 1
        %s262 = smul.addr %s261, 24
        %s263 = smul.addr %s262, 4
        %s264 = scalar_lea.vmem %s5, %s263
        %v266 = vld [vmem:[#allocation4] sm:$0xf]
        %v267 = vld [vmem:[#allocation4 + $0x4] sm:$0xf]
        %v268 = vld [vmem:[#allocation6] sm:$0x1]
        %v269 = vld [vmem:[#allocation8] sm:$0x1]
        %v270 = vld [vmem:[%s259] sm:$0xf]
        %v271 = vld [vmem:[%s259 + $0x4] sm:$0xf]
        %v272 = vld [vmem:[%s259 + $0x8] sm:$0xf]
        %v273 = vld [vmem:[%s259 + $0xc] sm:$0xf]
        %v274 = vld [vmem:[%s259 + $0x10] sm:$0xf]
        %v275 = vld [vmem:[%s259 + $0x14] sm:$0xf]
        %v276 = vld [vmem:[%s259 + $0x18] sm:$0xf]
        %v277 = vld [vmem:[%s259 + $0x1c] sm:$0xf]
        %v278 = vld [vmem:[%s259 + $0x20] sm:$0xf]
        %v279 = vld [vmem:[%s259 + $0x24] sm:$0xf]
        %v280 = vld [vmem:[%s259 + $0x28] sm:$0xf]
        %v281 = vld [vmem:[%s259 + $0x2c] sm:$0xf]
        %v282 = vld [vmem:[%s259 + $0x30] sm:$0xf]
        %v283 = vld [vmem:[%s259 + $0x34] sm:$0xf]
        %v284 = vld [vmem:[%s259 + $0x38] sm:$0xf]
        %v285 = vld [vmem:[%s259 + $0x3c] sm:$0xf]
        %v286 = vld [vmem:[%s259 + $0x40] sm:$0xf]
        %v287 = vld [vmem:[%s259 + $0x44] sm:$0xf]
        %v288 = vld [vmem:[%s259 + $0x48] sm:$0xf]
        %v289 = vld [vmem:[%s259 + $0x4c] sm:$0xf]
        %v290 = vld [vmem:[%s259 + $0x50] sm:$0xf]
        %v291 = vld [vmem:[%s259 + $0x54] sm:$0xf]
        %v292 = vld [vmem:[%s259 + $0x58] sm:$0xf]
        %v293 = vld [vmem:[%s259 + $0x5c] sm:$0xf]
        %v294 = vld [vmem:[%s259 + $0x60] sm:$0xf]
        %v295 = vld [vmem:[%s259 + $0x64] sm:$0xf]
        %v296 = vld [vmem:[%s259 + $0x68] sm:$0xf]
        %v297 = vld [vmem:[%s259 + $0x6c] sm:$0xf]
        %v298 = vld [vmem:[%s259 + $0x70] sm:$0xf]
        %v299 = vld [vmem:[%s259 + $0x74] sm:$0xf]
        %v300 = vld [vmem:[%s259 + $0x78] sm:$0xf]
        %v301 = vld [vmem:[%s259 + $0x7c] sm:$0xf]
        %v302 = vld [vmem:[%s259 + $0x80] sm:$0xf]
        %v303 = vld [vmem:[%s259 + $0x84] sm:$0xf]
        %v304 = vld [vmem:[%s259 + $0x88] sm:$0xf]
        %v305 = vld [vmem:[%s259 + $0x8c] sm:$0xf]
        %v306 = vld [vmem:[%s259 + $0x90] sm:$0xf]
        %v307 = vld [vmem:[%s259 + $0x94] sm:$0xf]
        %v308 = vld [vmem:[%s259 + $0x98] sm:$0xf]
        %v309 = vld [vmem:[%s259 + $0x9c] sm:$0xf]
        %v310 = vld [vmem:[%s259 + $0xa0] sm:$0xf]
        %v311 = vld [vmem:[%s259 + $0xa4] sm:$0xf]
        %v312 = vld [vmem:[%s259 + $0xa8] sm:$0xf]
        %v313 = vld [vmem:[%s259 + $0xac] sm:$0xf]
        %v314 = vld [vmem:[%s259 + $0xb0] sm:$0xf]
        %v315 = vld [vmem:[%s259 + $0xb4] sm:$0xf]
        %v316 = vld [vmem:[%s259 + $0xb8] sm:$0xf]
        %v317 = vld [vmem:[%s259 + $0xbc] sm:$0xf]
        %v318 = vld [vmem:[%s259 + $0xc0] sm:$0xf]
        %v319 = vld [vmem:[%s259 + $0xc4] sm:$0xf]
        %v320 = vld [vmem:[%s259 + $0xc8] sm:$0xf]
        %v321 = vld [vmem:[%s259 + $0xcc] sm:$0xf]
        %v322 = vld [vmem:[%s259 + $0xd0] sm:$0xf]
        %v323 = vld [vmem:[%s259 + $0xd4] sm:$0xf]
        %v324 = vld [vmem:[%s259 + $0xd8] sm:$0xf]
        %v325 = vld [vmem:[%s259 + $0xdc] sm:$0xf]
        %v326 = vld [vmem:[%s259 + $0xe0] sm:$0xf]
        %v327 = vld [vmem:[%s259 + $0xe4] sm:$0xf]
        %v328 = vld [vmem:[%s259 + $0xe8] sm:$0xf]
        %v329 = vld [vmem:[%s259 + $0xec] sm:$0xf]
        %v330 = vld [vmem:[%s259 + $0xf0] sm:$0xf]
        %v331 = vld [vmem:[%s259 + $0xf4] sm:$0xf]
        %v332 = vld [vmem:[%s259 + $0xf8] sm:$0xf]
        %v333 = vld [vmem:[%s259 + $0xfc] sm:$0xf]
        %v334 = vld [vmem:[%s259 + $0x100] sm:$0xf]
        %v335 = vld [vmem:[%s259 + $0x104] sm:$0xf]
        %v336 = vld [vmem:[%s259 + $0x108] sm:$0xf]
        %v337 = vld [vmem:[%s259 + $0x10c] sm:$0xf]
        %v338 = vld [vmem:[%s259 + $0x110] sm:$0xf]
        %v339 = vld [vmem:[%s259 + $0x114] sm:$0xf]
        %v340 = vld [vmem:[%s259 + $0x118] sm:$0xf]
        %v341 = vld [vmem:[%s259 + $0x11c] sm:$0xf]
        %v342 = vld [vmem:[%s259 + $0x120] sm:$0xf]
        %v343 = vld [vmem:[%s259 + $0x124] sm:$0xf]
        %v344 = vld [vmem:[%s259 + $0x128] sm:$0xf]
        %v345 = vld [vmem:[%s259 + $0x12c] sm:$0xf]
        %v346 = vld [vmem:[%s259 + $0x130] sm:$0xf]
        %v347 = vld [vmem:[%s259 + $0x134] sm:$0xf]
        %v349 = vlaneseq
        %v350 = vshrl.u32 %v349, 7
        %v351 = vsub.s32 0, %v350
        %v352 = vrot.slane %v268, %v351
        %v432 = vunpack.c.l.b16 %v270
        %v433 = vunpack.c.l.b16 %v271
        %v434 = vunpack.c.l.b16 %v272
        %v435 = vunpack.c.l.b16 %v273
        %v436 = vunpack.c.l.b16 %v274
        %v437 = vunpack.c.l.b16 %v275
        %v438 = vunpack.c.l.b16 %v276
        %v439 = vunpack.c.l.b16 %v277
        %v440 = vunpack.c.l.b16 %v278
        %v441 = vunpack.c.l.b16 %v279
        %v442 = vunpack.c.l.b16 %v280
        %v443 = vunpack.c.l.b16 %v281
        %v444 = vunpack.c.l.b16 %v282
        %v445 = vunpack.c.l.b16 %v283
        %v446 = vunpack.c.l.b16 %v284
        %v447 = vunpack.c.l.b16 %v285
        %v448 = vunpack.c.l.b16 %v286
        %v449 = vunpack.c.l.b16 %v287
        %v450 = vunpack.c.l.b16 %v288
        %v451 = vunpack.c.l.b16 %v289
        %v452 = vunpack.c.l.b16 %v290
        %v453 = vunpack.c.l.b16 %v291
        %v454 = vunpack.c.l.b16 %v292
        %v455 = vunpack.c.l.b16 %v293
        %v456 = vunpack.c.l.b16 %v294
        %v457 = vunpack.c.l.b16 %v295
        %v458 = vunpack.c.l.b16 %v296
        %v459 = vunpack.c.l.b16 %v297
        %v460 = vunpack.c.l.b16 %v298
        %v461 = vunpack.c.l.b16 %v299
        %v462 = vunpack.c.l.b16 %v300
        %v463 = vunpack.c.l.b16 %v301
        %v464 = vunpack.c.l.b16 %v302
        %v465 = vunpack.c.l.b16 %v303
        %v466 = vunpack.c.l.b16 %v304
        %v467 = vunpack.c.l.b16 %v305
        %v468 = vunpack.c.l.b16 %v306
        %v469 = vunpack.c.l.b16 %v307
        %v470 = vunpack.c.l.b16 %v308
        %v471 = vunpack.c.l.b16 %v309
        %v472 = vunpack.c.l.b16 %v310
        %v473 = vunpack.c.l.b16 %v311
        %v474 = vunpack.c.l.b16 %v312
        %v475 = vunpack.c.l.b16 %v313
        %v476 = vunpack.c.l.b16 %v314
        %v477 = vunpack.c.l.b16 %v315
        %v478 = vunpack.c.l.b16 %v316
        %v479 = vunpack.c.l.b16 %v317
        %v480 = vunpack.c.l.b16 %v318
        %v481 = vunpack.c.l.b16 %v319
        %v482 = vunpack.c.l.b16 %v320
        %v483 = vunpack.c.l.b16 %v321
        %v484 = vunpack.c.l.b16 %v322
        %v485 = vunpack.c.l.b16 %v323
        %v486 = vunpack.c.l.b16 %v324
        %v487 = vunpack.c.l.b16 %v325
        %v488 = vunpack.c.l.b16 %v326
        %v489 = vunpack.c.l.b16 %v327
        %v490 = vunpack.c.l.b16 %v328
        %v491 = vunpack.c.l.b16 %v329
        %v492 = vunpack.c.l.b16 %v330
        %v493 = vunpack.c.l.b16 %v331
        %v494 = vunpack.c.l.b16 %v332
        %v495 = vunpack.c.l.b16 %v333
        %v496 = vunpack.c.l.b16 %v334
        %v497 = vunpack.c.l.b16 %v335
        %v498 = vunpack.c.l.b16 %v336
        %v499 = vunpack.c.l.b16 %v337
        %v500 = vunpack.c.l.b16 %v338
        %v501 = vunpack.c.l.b16 %v339
        %v502 = vunpack.c.l.b16 %v340
        %v503 = vunpack.c.l.b16 %v341
        %v504 = vunpack.c.l.b16 %v342
        %v505 = vunpack.c.l.b16 %v343
        %v506 = vunpack.c.l.b16 %v344
        %v507 = vunpack.c.l.b16 %v345
        %v508 = vunpack.c.l.b16 %v346
        %v509 = vunpack.c.l.b16 %v347
        %v510 = vpack.c.b16 %v433, %v432
        %v511 = vpack.c.b16 %v435, %v434
        %v512 = vpack.c.b16 %v437, %v436
        %v513 = vpack.c.b16 %v439, %v438
        %v514 = vpack.c.b16 %v441, %v440
        %v515 = vpack.c.b16 %v443, %v442
        %v516 = vpack.c.b16 %v445, %v444
        %v517 = vpack.c.b16 %v447, %v446
        %v518 = vpack.c.b16 %v449, %v448
        %v519 = vpack.c.b16 %v451, %v450
        %v520 = vpack.c.b16 %v453, %v452
        %v521 = vpack.c.b16 %v455, %v454
        %v522 = vpack.c.b16 %v457, %v456
        %v523 = vpack.c.b16 %v459, %v458
        %v524 = vpack.c.b16 %v461, %v460
        %v525 = vpack.c.b16 %v463, %v462
        %v526 = vpack.c.b16 %v465, %v464
        %v527 = vpack.c.b16 %v467, %v466
        %v528 = vpack.c.b16 %v469, %v468
        %v529 = vpack.c.b16 %v471, %v470
        %v530 = vpack.c.b16 %v473, %v472
        %v531 = vpack.c.b16 %v475, %v474
        %v532 = vpack.c.b16 %v477, %v476
        %v533 = vpack.c.b16 %v479, %v478
        %v534 = vpack.c.b16 %v481, %v480
        %v535 = vpack.c.b16 %v483, %v482
        %v536 = vpack.c.b16 %v485, %v484
        %v537 = vpack.c.b16 %v487, %v486
        %v538 = vpack.c.b16 %v489, %v488
        %v539 = vpack.c.b16 %v491, %v490
        %v540 = vpack.c.b16 %v493, %v492
        %v541 = vpack.c.b16 %v495, %v494
        %v542 = vpack.c.b16 %v497, %v496
        %v543 = vpack.c.b16 %v499, %v498
        %v544 = vpack.c.b16 %v501, %v500
        %v545 = vpack.c.b16 %v503, %v502
        %v546 = vpack.c.b16 %v505, %v504
        %v547 = vpack.c.b16 %v507, %v506
        %v548 = vpack.c.b16 %v509, %v508
        %v551 = vunpack.c.l.b16 %v266
        %v552 = vunpack.c.l.b16 %v267
        %v553 = vpack.c.b16 %v552, %v551
        %vm554 = vcmask 121856
        %v556 = vsel %vm554, %v510, 0
        %v559 = vsel %vm554, %v511, 0
        %v562 = vsel %vm554, %v512, 0
        %v565 = vsel %vm554, %v513, 0
        %v568 = vsel %vm554, %v514, 0
        %v571 = vsel %vm554, %v515, 0
        %v574 = vsel %vm554, %v516, 0
        %v577 = vsel %vm554, %v517, 0
        %v580 = vsel %vm554, %v518, 0
        %v583 = vsel %vm554, %v519, 0
        %v586 = vsel %vm554, %v520, 0
        %v589 = vsel %vm554, %v521, 0
        %v592 = vsel %vm554, %v522, 0
        %v595 = vsel %vm554, %v523, 0
        %v598 = vsel %vm554, %v524, 0
        %v601 = vsel %vm554, %v525, 0
        %v604 = vsel %vm554, %v526, 0
        %v607 = vsel %vm554, %v527, 0
        %v610 = vsel %vm554, %v528, 0
        %v613 = vsel %vm554, %v529, 0
        %v616 = vsel %vm554, %v530, 0
        %v619 = vsel %vm554, %v531, 0
        %v622 = vsel %vm554, %v532, 0
        %v625 = vsel %vm554, %v533, 0
        %v628 = vsel %vm554, %v534, 0
        %v631 = vsel %vm554, %v535, 0
        %v634 = vsel %vm554, %v536, 0
        %v637 = vsel %vm554, %v537, 0
        %v640 = vsel %vm554, %v538, 0
        %v643 = vsel %vm554, %v539, 0
        %v646 = vsel %vm554, %v540, 0
        %v649 = vsel %vm554, %v541, 0
        %v652 = vsel %vm554, %v542, 0
        %v655 = vsel %vm554, %v543, 0
        %v658 = vsel %vm554, %v544, 0
        %v661 = vsel %vm554, %v545, 0
        %v664 = vsel %vm554, %v546, 0
        %v667 = vsel %vm554, %v547, 0
        %v670 = vsel %vm554, %v548, 0
        %vm672 = vcmask 1046528
        %vm673 = vcmask 1047552
        %v674 = vsel %vm672, 4294967295, 65535
        %v675 = vsel %vm673, %v674, 0
        %v677 = vand.u32 %v553, %v675
        %679 = vmatprep.subr.bf16.mxu0 0
        %680 = vmatpush1.bf16.msra.mxu0 0
        %681 = vmatprep.subr.bf16.mxu0 0
        %682 = vmatpush1.bf16.msra.mxu0 0
        %683 = vmatprep.subr.bf16.mxu0 0
        %684 = vmatpush1.bf16.msra.mxu0 0
        %685 = vmatprep.subr.bf16.mxu0 0
        %686 = vmatpush1.bf16.msra.mxu0 0
        %687 = vmatprep.subr.bf16.mxu0 0
        %688 = vmatpush1.bf16.msra.mxu0 0
        %689 = vmatprep.subr.bf16.mxu0 0
        %690 = vmatpush1.bf16.msra.mxu0 0
        %691 = vmatprep.subr.bf16.mxu0 0
        %692 = vmatpush1.bf16.msra.mxu0 0
        %693 = vmatprep.subr.bf16.mxu0 0
        %694 = vmatpush1.bf16.msra.mxu0 %v677
        %695 = vmatprep.subr.bf16.mxu0 0
        %696 = vmatpush2.bf16.msra.mxu0 0
        %697 = vmatprep.subr.bf16.mxu0 0
        %698 = vmatpush2.bf16.msra.mxu0 0
        %699 = vmatprep.subr.bf16.mxu0 0
        %700 = vmatpush2.bf16.msra.mxu0 0
        %701 = vmatprep.subr.bf16.mxu0 0
        %702 = vmatpush2.bf16.msra.mxu0 0
        %703 = vmatprep.subr.bf16.mxu0 0
        %704 = vmatpush2.bf16.msra.mxu0 0
        %705 = vmatprep.subr.bf16.mxu0 0
        %706 = vmatpush2.bf16.msra.mxu0 0
        %707 = vmatprep.subr.bf16.mxu0 0
        %708 = vmatpush2.bf16.msra.mxu0 0
        %709 = vmatprep.subr.bf16.mxu0 0
        %710 = vmatpush2.bf16.msra.mxu0 0
        %711 = vmatprep.mubr.bf16.mxu0 0
        %712 = vmatmul.mubr.bf16.gmra.mxu0 %v556
        %v713 = vpop.f32.mrf.mxu0
        %v714 = vadd.f32 %v352, %v713
        %v715 = vpop.f32.mrf.mxu0
        %v716 = vpop.f32.mrf.mxu0
        %v717 = vadd.f32 %v352, %v716
        %v718 = vpop.f32.mrf.mxu0
        %719 = vmatprep.mubr.bf16.mxu0 0
        %720 = vmatmul.mubr.bf16.gmra.mxu0 %v559
        %v721 = vpop.f32.mrf.mxu0
        %v722 = vadd.f32 %v352, %v721
        %v723 = vpop.f32.mrf.mxu0
        %v724 = vpop.f32.mrf.mxu0
        %v725 = vadd.f32 %v352, %v724
        %v726 = vpop.f32.mrf.mxu0
        %727 = vmatprep.mubr.bf16.mxu0 0
        %728 = vmatmul.mubr.bf16.gmra.mxu0 %v562
        %v729 = vpop.f32.mrf.mxu0
        %v730 = vadd.f32 %v352, %v729
        %v731 = vpop.f32.mrf.mxu0
        %v732 = vpop.f32.mrf.mxu0
        %v733 = vadd.f32 %v352, %v732
        %v734 = vpop.f32.mrf.mxu0
        %735 = vmatprep.mubr.bf16.mxu0 0
        %736 = vmatmul.mubr.bf16.gmra.mxu0 %v565
        %v737 = vpop.f32.mrf.mxu0
        %v738 = vadd.f32 %v352, %v737
        %v739 = vpop.f32.mrf.mxu0
        %v740 = vpop.f32.mrf.mxu0
        %v741 = vadd.f32 %v352, %v740
        %v742 = vpop.f32.mrf.mxu0
        %743 = vmatprep.mubr.bf16.mxu0 0
        %744 = vmatmul.mubr.bf16.gmra.mxu0 %v568
        %v745 = vpop.f32.mrf.mxu0
        %v746 = vadd.f32 %v352, %v745
        %v747 = vpop.f32.mrf.mxu0
        %v748 = vpop.f32.mrf.mxu0
        %v749 = vadd.f32 %v352, %v748
        %v750 = vpop.f32.mrf.mxu0
        %751 = vmatprep.mubr.bf16.mxu0 0
        %752 = vmatmul.mubr.bf16.gmra.mxu0 %v571
        %v753 = vpop.f32.mrf.mxu0
        %v754 = vadd.f32 %v352, %v753
        %v755 = vpop.f32.mrf.mxu0
        %v756 = vpop.f32.mrf.mxu0
        %v757 = vadd.f32 %v352, %v756
        %v758 = vpop.f32.mrf.mxu0
        %759 = vmatprep.mubr.bf16.mxu0 0
        %760 = vmatmul.mubr.bf16.gmra.mxu0 %v574
        %v761 = vpop.f32.mrf.mxu0
        %v762 = vadd.f32 %v352, %v761
        %v763 = vpop.f32.mrf.mxu0
        %v764 = vpop.f32.mrf.mxu0
        %v765 = vadd.f32 %v352, %v764
        %v766 = vpop.f32.mrf.mxu0
        %767 = vmatprep.mubr.bf16.mxu0 0
        %768 = vmatmul.mubr.bf16.gmra.mxu0 %v577
        %v769 = vpop.f32.mrf.mxu0
        %v770 = vadd.f32 %v352, %v769
        %v771 = vpop.f32.mrf.mxu0
        %v772 = vpop.f32.mrf.mxu0
        %v773 = vadd.f32 %v352, %v772
        %v774 = vpop.f32.mrf.mxu0
        %775 = vmatprep.mubr.bf16.mxu0 0
        %776 = vmatmul.mubr.bf16.gmra.mxu0 %v580
        %v777 = vpop.f32.mrf.mxu0
        %v778 = vadd.f32 %v352, %v777
        %v779 = vpop.f32.mrf.mxu0
        %v780 = vpop.f32.mrf.mxu0
        %v781 = vadd.f32 %v352, %v780
        %v782 = vpop.f32.mrf.mxu0
        %783 = vmatprep.mubr.bf16.mxu0 0
        %784 = vmatmul.mubr.bf16.gmra.mxu0 %v583
        %v785 = vpop.f32.mrf.mxu0
        %v786 = vadd.f32 %v352, %v785
        %v787 = vpop.f32.mrf.mxu0
        %v788 = vpop.f32.mrf.mxu0
        %v789 = vadd.f32 %v352, %v788
        %v790 = vpop.f32.mrf.mxu0
        %791 = vmatprep.mubr.bf16.mxu0 0
        %792 = vmatmul.mubr.bf16.gmra.mxu0 %v586
        %v793 = vpop.f32.mrf.mxu0
        %v794 = vadd.f32 %v352, %v793
        %v795 = vpop.f32.mrf.mxu0
        %v796 = vpop.f32.mrf.mxu0
        %v797 = vadd.f32 %v352, %v796
        %v798 = vpop.f32.mrf.mxu0
        %799 = vmatprep.mubr.bf16.mxu0 0
        %800 = vmatmul.mubr.bf16.gmra.mxu0 %v589
        %v801 = vpop.f32.mrf.mxu0
        %v802 = vadd.f32 %v352, %v801
        %v803 = vpop.f32.mrf.mxu0
        %v804 = vpop.f32.mrf.mxu0
        %v805 = vadd.f32 %v352, %v804
        %v806 = vpop.f32.mrf.mxu0
        %807 = vmatprep.mubr.bf16.mxu0 0
        %808 = vmatmul.mubr.bf16.gmra.mxu0 %v592
        %v809 = vpop.f32.mrf.mxu0
        %v810 = vadd.f32 %v352, %v809
        %v811 = vpop.f32.mrf.mxu0
        %v812 = vpop.f32.mrf.mxu0
        %v813 = vadd.f32 %v352, %v812
        %v814 = vpop.f32.mrf.mxu0
        %815 = vmatprep.mubr.bf16.mxu0 0
        %816 = vmatmul.mubr.bf16.gmra.mxu0 %v595
        %v817 = vpop.f32.mrf.mxu0
        %v818 = vadd.f32 %v352, %v817
        %v819 = vpop.f32.mrf.mxu0
        %v820 = vpop.f32.mrf.mxu0
        %v821 = vadd.f32 %v352, %v820
        %v822 = vpop.f32.mrf.mxu0
        %823 = vmatprep.mubr.bf16.mxu0 0
        %824 = vmatmul.mubr.bf16.gmra.mxu0 %v598
        %v825 = vpop.f32.mrf.mxu0
        %v826 = vadd.f32 %v352, %v825
        %v827 = vpop.f32.mrf.mxu0
        %v828 = vpop.f32.mrf.mxu0
        %v829 = vadd.f32 %v352, %v828
        %v830 = vpop.f32.mrf.mxu0
        %831 = vmatprep.mubr.bf16.mxu0 0
        %832 = vmatmul.mubr.bf16.gmra.mxu0 %v601
        %v833 = vpop.f32.mrf.mxu0
        %v834 = vadd.f32 %v352, %v833
        %v835 = vpop.f32.mrf.mxu0
        %v836 = vpop.f32.mrf.mxu0
        %v837 = vadd.f32 %v352, %v836
        %v838 = vpop.f32.mrf.mxu0
        %839 = vmatprep.mubr.bf16.mxu0 0
        %840 = vmatmul.mubr.bf16.gmra.mxu0 %v604
        %v841 = vpop.f32.mrf.mxu0
        %v842 = vadd.f32 %v352, %v841
        %v843 = vpop.f32.mrf.mxu0
        %v844 = vpop.f32.mrf.mxu0
        %v845 = vadd.f32 %v352, %v844
        %v846 = vpop.f32.mrf.mxu0
        %847 = vmatprep.mubr.bf16.mxu0 0
        %848 = vmatmul.mubr.bf16.gmra.mxu0 %v607
        %v849 = vpop.f32.mrf.mxu0
        %v850 = vadd.f32 %v352, %v849
        %v851 = vpop.f32.mrf.mxu0
        %v852 = vpop.f32.mrf.mxu0
        %v853 = vadd.f32 %v352, %v852
        %v854 = vpop.f32.mrf.mxu0
        %855 = vmatprep.mubr.bf16.mxu0 0
        %856 = vmatmul.mubr.bf16.gmra.mxu0 %v610
        %v857 = vpop.f32.mrf.mxu0
        %v858 = vadd.f32 %v352, %v857
        %v859 = vpop.f32.mrf.mxu0
        %v860 = vpop.f32.mrf.mxu0
        %v861 = vadd.f32 %v352, %v860
        %v862 = vpop.f32.mrf.mxu0
        %863 = vmatprep.mubr.bf16.mxu0 0
        %864 = vmatmul.mubr.bf16.gmra.mxu0 %v613
        %v865 = vpop.f32.mrf.mxu0
        %v866 = vadd.f32 %v352, %v865
        %v867 = vpop.f32.mrf.mxu0
        %v868 = vpop.f32.mrf.mxu0
        %v869 = vadd.f32 %v352, %v868
        %v870 = vpop.f32.mrf.mxu0
        %871 = vmatprep.mubr.bf16.mxu0 0
        %872 = vmatmul.mubr.bf16.gmra.mxu0 %v616
        %v873 = vpop.f32.mrf.mxu0
        %v874 = vadd.f32 %v352, %v873
        %v875 = vpop.f32.mrf.mxu0
        %v876 = vpop.f32.mrf.mxu0
        %v877 = vadd.f32 %v352, %v876
        %v878 = vpop.f32.mrf.mxu0
        %879 = vmatprep.mubr.bf16.mxu0 0
        %880 = vmatmul.mubr.bf16.gmra.mxu0 %v619
        %v881 = vpop.f32.mrf.mxu0
        %v882 = vadd.f32 %v352, %v881
        %v883 = vpop.f32.mrf.mxu0
        %v884 = vpop.f32.mrf.mxu0
        %v885 = vadd.f32 %v352, %v884
        %v886 = vpop.f32.mrf.mxu0
        %887 = vmatprep.mubr.bf16.mxu0 0
        %888 = vmatmul.mubr.bf16.gmra.mxu0 %v622
        %v889 = vpop.f32.mrf.mxu0
        %v890 = vadd.f32 %v352, %v889
        %v891 = vpop.f32.mrf.mxu0
        %v892 = vpop.f32.mrf.mxu0
        %v893 = vadd.f32 %v352, %v892
        %v894 = vpop.f32.mrf.mxu0
        %895 = vmatprep.mubr.bf16.mxu0 0
        %896 = vmatmul.mubr.bf16.gmra.mxu0 %v625
        %v897 = vpop.f32.mrf.mxu0
        %v898 = vadd.f32 %v352, %v897
        %v899 = vpop.f32.mrf.mxu0
        %v900 = vpop.f32.mrf.mxu0
        %v901 = vadd.f32 %v352, %v900
        %v902 = vpop.f32.mrf.mxu0
        %903 = vmatprep.mubr.bf16.mxu0 0
        %904 = vmatmul.mubr.bf16.gmra.mxu0 %v628
        %v905 = vpop.f32.mrf.mxu0
        %v906 = vadd.f32 %v352, %v905
        %v907 = vpop.f32.mrf.mxu0
        %v908 = vpop.f32.mrf.mxu0
        %v909 = vadd.f32 %v352, %v908
        %v910 = vpop.f32.mrf.mxu0
        %911 = vmatprep.mubr.bf16.mxu0 0
        %912 = vmatmul.mubr.bf16.gmra.mxu0 %v631
        %v913 = vpop.f32.mrf.mxu0
        %v914 = vadd.f32 %v352, %v913
        %v915 = vpop.f32.mrf.mxu0
        %v916 = vpop.f32.mrf.mxu0
        %v917 = vadd.f32 %v352, %v916
        %v918 = vpop.f32.mrf.mxu0
        %919 = vmatprep.mubr.bf16.mxu0 0
        %920 = vmatmul.mubr.bf16.gmra.mxu0 %v634
        %v921 = vpop.f32.mrf.mxu0
        %v922 = vadd.f32 %v352, %v921
        %v923 = vpop.f32.mrf.mxu0
        %v924 = vpop.f32.mrf.mxu0
        %v925 = vadd.f32 %v352, %v924
        %v926 = vpop.f32.mrf.mxu0
        %927 = vmatprep.mubr.bf16.mxu0 0
        %928 = vmatmul.mubr.bf16.gmra.mxu0 %v637
        %v929 = vpop.f32.mrf.mxu0
        %v930 = vadd.f32 %v352, %v929
        %v931 = vpop.f32.mrf.mxu0
        %v932 = vpop.f32.mrf.mxu0
        %v933 = vadd.f32 %v352, %v932
        %v934 = vpop.f32.mrf.mxu0
        %935 = vmatprep.mubr.bf16.mxu0 0
        %936 = vmatmul.mubr.bf16.gmra.mxu0 %v640
        %v937 = vpop.f32.mrf.mxu0
        %v938 = vadd.f32 %v352, %v937
        %v939 = vpop.f32.mrf.mxu0
        %v940 = vpop.f32.mrf.mxu0
        %v941 = vadd.f32 %v352, %v940
        %v942 = vpop.f32.mrf.mxu0
        %943 = vmatprep.mubr.bf16.mxu0 0
        %944 = vmatmul.mubr.bf16.gmra.mxu0 %v643
        %v945 = vpop.f32.mrf.mxu0
        %v946 = vadd.f32 %v352, %v945
        %v947 = vpop.f32.mrf.mxu0
        %v948 = vpop.f32.mrf.mxu0
        %v949 = vadd.f32 %v352, %v948
        %v950 = vpop.f32.mrf.mxu0
        %951 = vmatprep.mubr.bf16.mxu0 0
        %952 = vmatmul.mubr.bf16.gmra.mxu0 %v646
        %v953 = vpop.f32.mrf.mxu0
        %v954 = vadd.f32 %v352, %v953
        %v955 = vpop.f32.mrf.mxu0
        %v956 = vpop.f32.mrf.mxu0
        %v957 = vadd.f32 %v352, %v956
        %v958 = vpop.f32.mrf.mxu0
        %959 = vmatprep.mubr.bf16.mxu0 0
        %960 = vmatmul.mubr.bf16.gmra.mxu0 %v649
        %v961 = vpop.f32.mrf.mxu0
        %v962 = vadd.f32 %v352, %v961
        %v963 = vpop.f32.mrf.mxu0
        %v964 = vpop.f32.mrf.mxu0
        %v965 = vadd.f32 %v352, %v964
        %v966 = vpop.f32.mrf.mxu0
        %967 = vmatprep.mubr.bf16.mxu0 0
        %968 = vmatmul.mubr.bf16.gmra.mxu0 %v652
        %v969 = vpop.f32.mrf.mxu0
        %v970 = vadd.f32 %v352, %v969
        %v971 = vpop.f32.mrf.mxu0
        %v972 = vpop.f32.mrf.mxu0
        %v973 = vadd.f32 %v352, %v972
        %v974 = vpop.f32.mrf.mxu0
        %975 = vmatprep.mubr.bf16.mxu0 0
        %976 = vmatmul.mubr.bf16.gmra.mxu0 %v655
        %v977 = vpop.f32.mrf.mxu0
        %v978 = vadd.f32 %v352, %v977
        %v979 = vpop.f32.mrf.mxu0
        %v980 = vpop.f32.mrf.mxu0
        %v981 = vadd.f32 %v352, %v980
        %v982 = vpop.f32.mrf.mxu0
        %983 = vmatprep.mubr.bf16.mxu0 0
        %984 = vmatmul.mubr.bf16.gmra.mxu0 %v658
        %v985 = vpop.f32.mrf.mxu0
        %v986 = vadd.f32 %v352, %v985
        %v987 = vpop.f32.mrf.mxu0
        %v988 = vpop.f32.mrf.mxu0
        %v989 = vadd.f32 %v352, %v988
        %v990 = vpop.f32.mrf.mxu0
        %991 = vmatprep.mubr.bf16.mxu0 0
        %992 = vmatmul.mubr.bf16.gmra.mxu0 %v661
        %v993 = vpop.f32.mrf.mxu0
        %v994 = vadd.f32 %v352, %v993
        %v995 = vpop.f32.mrf.mxu0
        %v996 = vpop.f32.mrf.mxu0
        %v997 = vadd.f32 %v352, %v996
        %v998 = vpop.f32.mrf.mxu0
        %999 = vmatprep.mubr.bf16.mxu0 0
        %1000 = vmatmul.mubr.bf16.gmra.mxu0 %v664
        %v1001 = vpop.f32.mrf.mxu0
        %v1002 = vadd.f32 %v352, %v1001
        %v1003 = vpop.f32.mrf.mxu0
        %v1004 = vpop.f32.mrf.mxu0
        %v1005 = vadd.f32 %v352, %v1004
        %v1006 = vpop.f32.mrf.mxu0
        %1007 = vmatprep.mubr.bf16.mxu0 0
        %1008 = vmatmul.mubr.bf16.gmra.mxu0 %v667
        %v1009 = vpop.f32.mrf.mxu0
        %v1010 = vadd.f32 %v352, %v1009
        %v1011 = vpop.f32.mrf.mxu0
        %v1012 = vpop.f32.mrf.mxu0
        %v1013 = vadd.f32 %v352, %v1012
        %v1014 = vpop.f32.mrf.mxu0
        %1015 = vmatprep.mubr.bf16.mxu0 0
        %1016 = vmatmul.mubr.bf16.gmra.mxu0 %v670
        %v1017 = vpop.f32.mrf.mxu0
        %v1018 = vadd.f32 %v352, %v1017
        %v1019 = vpop.f32.mrf.mxu0
        %v1020 = vpop.f32.mrf.mxu0
        %v1021 = vadd.f32 %v352, %v1020
        %v1022 = vpop.f32.mrf.mxu0
        %1023 = vdwg.mxu0
        %v1024 = vmax.f32 %v714, 0.0
        %v1025 = vmax.f32 %v717, 0.0
        %v1026 = vmax.f32 %v722, 0.0
        %v1027 = vmax.f32 %v725, 0.0
        %v1028 = vmax.f32 %v730, 0.0
        %v1029 = vmax.f32 %v733, 0.0
        %v1030 = vmax.f32 %v738, 0.0
        %v1031 = vmax.f32 %v741, 0.0
        %v1032 = vmax.f32 %v746, 0.0
        %v1033 = vmax.f32 %v749, 0.0
        %v1034 = vmax.f32 %v754, 0.0
        %v1035 = vmax.f32 %v757, 0.0
        %v1036 = vmax.f32 %v762, 0.0
        %v1037 = vmax.f32 %v765, 0.0
        %v1038 = vmax.f32 %v770, 0.0
        %v1039 = vmax.f32 %v773, 0.0
        %v1040 = vmax.f32 %v778, 0.0
        %v1041 = vmax.f32 %v781, 0.0
        %v1042 = vmax.f32 %v786, 0.0
        %v1043 = vmax.f32 %v789, 0.0
        %v1044 = vmax.f32 %v794, 0.0
        %v1045 = vmax.f32 %v797, 0.0
        %v1046 = vmax.f32 %v802, 0.0
        %v1047 = vmax.f32 %v805, 0.0
        %v1048 = vmax.f32 %v810, 0.0
        %v1049 = vmax.f32 %v813, 0.0
        %v1050 = vmax.f32 %v818, 0.0
        %v1051 = vmax.f32 %v821, 0.0
        %v1052 = vmax.f32 %v826, 0.0
        %v1053 = vmax.f32 %v829, 0.0
        %v1054 = vmax.f32 %v834, 0.0
        %v1055 = vmax.f32 %v837, 0.0
        %v1056 = vmax.f32 %v842, 0.0
        %v1057 = vmax.f32 %v845, 0.0
        %v1058 = vmax.f32 %v850, 0.0
        %v1059 = vmax.f32 %v853, 0.0
        %v1060 = vmax.f32 %v858, 0.0
        %v1061 = vmax.f32 %v861, 0.0
        %v1062 = vmax.f32 %v866, 0.0
        %v1063 = vmax.f32 %v869, 0.0
        %v1064 = vmax.f32 %v874, 0.0
        %v1065 = vmax.f32 %v877, 0.0
        %v1066 = vmax.f32 %v882, 0.0
        %v1067 = vmax.f32 %v885, 0.0
        %v1068 = vmax.f32 %v890, 0.0
        %v1069 = vmax.f32 %v893, 0.0
        %v1070 = vmax.f32 %v898, 0.0
        %v1071 = vmax.f32 %v901, 0.0
        %v1072 = vmax.f32 %v906, 0.0
        %v1073 = vmax.f32 %v909, 0.0
        %v1074 = vmax.f32 %v914, 0.0
        %v1075 = vmax.f32 %v917, 0.0
        %v1076 = vmax.f32 %v922, 0.0
        %v1077 = vmax.f32 %v925, 0.0
        %v1078 = vmax.f32 %v930, 0.0
        %v1079 = vmax.f32 %v933, 0.0
        %v1080 = vmax.f32 %v938, 0.0
        %v1081 = vmax.f32 %v941, 0.0
        %v1082 = vmax.f32 %v946, 0.0
        %v1083 = vmax.f32 %v949, 0.0
        %v1084 = vmax.f32 %v954, 0.0
        %v1085 = vmax.f32 %v957, 0.0
        %v1086 = vmax.f32 %v962, 0.0
        %v1087 = vmax.f32 %v965, 0.0
        %v1088 = vmax.f32 %v970, 0.0
        %v1089 = vmax.f32 %v973, 0.0
        %v1090 = vmax.f32 %v978, 0.0
        %v1091 = vmax.f32 %v981, 0.0
        %v1092 = vmax.f32 %v986, 0.0
        %v1093 = vmax.f32 %v989, 0.0
        %v1094 = vmax.f32 %v994, 0.0
        %v1095 = vmax.f32 %v997, 0.0
        %v1096 = vmax.f32 %v1002, 0.0
        %v1097 = vmax.f32 %v1005, 0.0
        %v1098 = vmax.f32 %v1010, 0.0
        %v1099 = vmax.f32 %v1013, 0.0
        %v1100 = vmax.f32 %v1018, 0.0
        %v1101 = vmax.f32 %v1021, 0.0
        %vm1102 = vcmask 785408
        %1103 = vst.msk [vmem:[#allocation2] sm:$0xff] %vm1102, %v1024
        %1104 = vst.msk [vmem:[#allocation2 + $0x8] sm:$0xff] %vm1102, %v1025
        %1105 = vst.msk [vmem:[#allocation2 + $0x10] sm:$0xff] %vm1102, %v1026
        %1106 = vst.msk [vmem:[#allocation2 + $0x18] sm:$0xff] %vm1102, %v1027
        %1107 = vst.msk [vmem:[#allocation2 + $0x20] sm:$0xff] %vm1102, %v1028
        %1108 = vst.msk [vmem:[#allocation2 + $0x28] sm:$0xff] %vm1102, %v1029
        %1109 = vst.msk [vmem:[#allocation2 + $0x30] sm:$0xff] %vm1102, %v1030
        %1110 = vst.msk [vmem:[#allocation2 + $0x38] sm:$0xff] %vm1102, %v1031
        %1111 = vst.msk [vmem:[#allocation2 + $0x40] sm:$0xff] %vm1102, %v1032
        %1112 = vst.msk [vmem:[#allocation2 + $0x48] sm:$0xff] %vm1102, %v1033
        %1113 = vst.msk [vmem:[#allocation2 + $0x50] sm:$0xff] %vm1102, %v1034
        %1114 = vst.msk [vmem:[#allocation2 + $0x58] sm:$0xff] %vm1102, %v1035
        %1115 = vst.msk [vmem:[#allocation2 + $0x60] sm:$0xff] %vm1102, %v1036
        %1116 = vst.msk [vmem:[#allocation2 + $0x68] sm:$0xff] %vm1102, %v1037
        %1117 = vst.msk [vmem:[#allocation2 + $0x70] sm:$0xff] %vm1102, %v1038
        %1118 = vst.msk [vmem:[#allocation2 + $0x78] sm:$0xff] %vm1102, %v1039
        %1119 = vst.msk [vmem:[#allocation2 + $0x80] sm:$0xff] %vm1102, %v1040
        %1120 = vst.msk [vmem:[#allocation2 + $0x88] sm:$0xff] %vm1102, %v1041
        %1121 = vst.msk [vmem:[#allocation2 + $0x90] sm:$0xff] %vm1102, %v1042
        %1122 = vst.msk [vmem:[#allocation2 + $0x98] sm:$0xff] %vm1102, %v1043
        %1123 = vst.msk [vmem:[#allocation2 + $0xa0] sm:$0xff] %vm1102, %v1044
        %1124 = vst.msk [vmem:[#allocation2 + $0xa8] sm:$0xff] %vm1102, %v1045
        %1125 = vst.msk [vmem:[#allocation2 + $0xb0] sm:$0xff] %vm1102, %v1046
        %1126 = vst.msk [vmem:[#allocation2 + $0xb8] sm:$0xff] %vm1102, %v1047
        %1127 = vst.msk [vmem:[#allocation2 + $0xc0] sm:$0xff] %vm1102, %v1048
        %1128 = vst.msk [vmem:[#allocation2 + $0xc8] sm:$0xff] %vm1102, %v1049
        %1129 = vst.msk [vmem:[#allocation2 + $0xd0] sm:$0xff] %vm1102, %v1050
        %1130 = vst.msk [vmem:[#allocation2 + $0xd8] sm:$0xff] %vm1102, %v1051
        %1131 = vst.msk [vmem:[#allocation2 + $0xe0] sm:$0xff] %vm1102, %v1052
        %1132 = vst.msk [vmem:[#allocation2 + $0xe8] sm:$0xff] %vm1102, %v1053
        %1133 = vst.msk [vmem:[#allocation2 + $0xf0] sm:$0xff] %vm1102, %v1054
        %1134 = vst.msk [vmem:[#allocation2 + $0xf8] sm:$0xff] %vm1102, %v1055
        %1135 = vst.msk [vmem:[#allocation2 + $0x100] sm:$0xff] %vm1102, %v1056
        %1136 = vst.msk [vmem:[#allocation2 + $0x108] sm:$0xff] %vm1102, %v1057
        %1137 = vst.msk [vmem:[#allocation2 + $0x110] sm:$0xff] %vm1102, %v1058
        %1138 = vst.msk [vmem:[#allocation2 + $0x118] sm:$0xff] %vm1102, %v1059
        %1139 = vst.msk [vmem:[#allocation2 + $0x120] sm:$0xff] %vm1102, %v1060
        %1140 = vst.msk [vmem:[#allocation2 + $0x128] sm:$0xff] %vm1102, %v1061
        %1141 = vst.msk [vmem:[#allocation2 + $0x130] sm:$0xff] %vm1102, %v1062
        %1142 = vst.msk [vmem:[#allocation2 + $0x138] sm:$0xff] %vm1102, %v1063
        %1143 = vst.msk [vmem:[#allocation2 + $0x140] sm:$0xff] %vm1102, %v1064
        %1144 = vst.msk [vmem:[#allocation2 + $0x148] sm:$0xff] %vm1102, %v1065
        %1145 = vst.msk [vmem:[#allocation2 + $0x150] sm:$0xff] %vm1102, %v1066
        %1146 = vst.msk [vmem:[#allocation2 + $0x158] sm:$0xff] %vm1102, %v1067
        %1147 = vst.msk [vmem:[#allocation2 + $0x160] sm:$0xff] %vm1102, %v1068
        %1148 = vst.msk [vmem:[#allocation2 + $0x168] sm:$0xff] %vm1102, %v1069
        %1149 = vst.msk [vmem:[#allocation2 + $0x170] sm:$0xff] %vm1102, %v1070
        %1150 = vst.msk [vmem:[#allocation2 + $0x178] sm:$0xff] %vm1102, %v1071
        %1151 = vst.msk [vmem:[#allocation2 + $0x180] sm:$0xff] %vm1102, %v1072
        %1152 = vst.msk [vmem:[#allocation2 + $0x188] sm:$0xff] %vm1102, %v1073
        %1153 = vst.msk [vmem:[#allocation2 + $0x190] sm:$0xff] %vm1102, %v1074
        %1154 = vst.msk [vmem:[#allocation2 + $0x198] sm:$0xff] %vm1102, %v1075
        %1155 = vst.msk [vmem:[#allocation2 + $0x1a0] sm:$0xff] %vm1102, %v1076
        %1156 = vst.msk [vmem:[#allocation2 + $0x1a8] sm:$0xff] %vm1102, %v1077
        %1157 = vst.msk [vmem:[#allocation2 + $0x1b0] sm:$0xff] %vm1102, %v1078
        %1158 = vst.msk [vmem:[#allocation2 + $0x1b8] sm:$0xff] %vm1102, %v1079
        %1159 = vst.msk [vmem:[#allocation2 + $0x1c0] sm:$0xff] %vm1102, %v1080
        %1160 = vst.msk [vmem:[#allocation2 + $0x1c8] sm:$0xff] %vm1102, %v1081
        %1161 = vst.msk [vmem:[#allocation2 + $0x1d0] sm:$0xff] %vm1102, %v1082
        %1162 = vst.msk [vmem:[#allocation2 + $0x1d8] sm:$0xff] %vm1102, %v1083
        %1163 = vst.msk [vmem:[#allocation2 + $0x1e0] sm:$0xff] %vm1102, %v1084
        %1164 = vst.msk [vmem:[#allocation2 + $0x1e8] sm:$0xff] %vm1102, %v1085
        %1165 = vst.msk [vmem:[#allocation2 + $0x1f0] sm:$0xff] %vm1102, %v1086
        %1166 = vst.msk [vmem:[#allocation2 + $0x1f8] sm:$0xff] %vm1102, %v1087
        %1167 = vst.msk [vmem:[#allocation2 + $0x200] sm:$0xff] %vm1102, %v1088
        %1168 = vst.msk [vmem:[#allocation2 + $0x208] sm:$0xff] %vm1102, %v1089
        %1169 = vst.msk [vmem:[#allocation2 + $0x210] sm:$0xff] %vm1102, %v1090
        %1170 = vst.msk [vmem:[#allocation2 + $0x218] sm:$0xff] %vm1102, %v1091
        %1171 = vst.msk [vmem:[#allocation2 + $0x220] sm:$0xff] %vm1102, %v1092
        %1172 = vst.msk [vmem:[#allocation2 + $0x228] sm:$0xff] %vm1102, %v1093
        %1173 = vst.msk [vmem:[#allocation2 + $0x230] sm:$0xff] %vm1102, %v1094
        %1174 = vst.msk [vmem:[#allocation2 + $0x238] sm:$0xff] %vm1102, %v1095
        %1175 = vst.msk [vmem:[#allocation2 + $0x240] sm:$0xff] %vm1102, %v1096
        %1176 = vst.msk [vmem:[#allocation2 + $0x248] sm:$0xff] %vm1102, %v1097
        %1177 = vst.msk [vmem:[#allocation2 + $0x250] sm:$0xff] %vm1102, %v1098
        %1178 = vst.msk [vmem:[#allocation2 + $0x258] sm:$0xff] %vm1102, %v1099
        %1179 = vst.msk [vmem:[#allocation2 + $0x260] sm:$0xff] %vm1102, %v1100
        %1180 = vst.msk [vmem:[#allocation2 + $0x268] sm:$0xff] %vm1102, %v1101
        %v1182 = vlaneseq
        %v1183 = vshrl.u32 %v1182, 7
        %v1184 = vsub.s32 0, %v1183
        %v1185 = vrot.slane %v269, %v1184
        %v1187 = vadd.f32 %v1185, 0.0
        %vm1188 = vcmask 523264
        %1189 = vst.msk [vmem:[#allocation3] sm:$0xff] %vm1188, %v1187
        %1190 = vst.msk [vmem:[#allocation3 + $0x8] sm:$0xff] %vm1188, %v1187
        %1191 = vst.msk [vmem:[#allocation3 + $0x10] sm:$0xff] %vm1188, %v1187
        %1192 = vst.msk [vmem:[#allocation3 + $0x18] sm:$0xff] %vm1188, %v1187
        %1193 = vst.msk [vmem:[#allocation3 + $0x20] sm:$0xff] %vm1188, %v1187
        %1194 = vst.msk [vmem:[#allocation3 + $0x28] sm:$0xff] %vm1188, %v1187
        %1195 = vst.msk [vmem:[#allocation3 + $0x30] sm:$0xff] %vm1188, %v1187
        %1196 = vst.msk [vmem:[#allocation3 + $0x38] sm:$0xff] %vm1188, %v1187
        %1197 = vst.msk [vmem:[#allocation3 + $0x40] sm:$0xff] %vm1188, %v1187
        %1198 = vst.msk [vmem:[#allocation3 + $0x48] sm:$0xff] %vm1188, %v1187
        %1199 = vst.msk [vmem:[#allocation3 + $0x50] sm:$0xff] %vm1188, %v1187
        %1200 = vst.msk [vmem:[#allocation3 + $0x58] sm:$0xff] %vm1188, %v1187
        %1201 = vst.msk [vmem:[#allocation3 + $0x60] sm:$0xff] %vm1188, %v1187
        %1202 = vst.msk [vmem:[#allocation3 + $0x68] sm:$0xff] %vm1188, %v1187
        %1203 = vst.msk [vmem:[#allocation3 + $0x70] sm:$0xff] %vm1188, %v1187
        %1204 = vst.msk [vmem:[#allocation3 + $0x78] sm:$0xff] %vm1188, %v1187
        %1205 = vst.msk [vmem:[#allocation3 + $0x80] sm:$0xff] %vm1188, %v1187
        %1206 = vst.msk [vmem:[#allocation3 + $0x88] sm:$0xff] %vm1188, %v1187
        %1207 = vst.msk [vmem:[#allocation3 + $0x90] sm:$0xff] %vm1188, %v1187
        %1208 = vst.msk [vmem:[#allocation3 + $0x98] sm:$0xff] %vm1188, %v1187
        %1209 = vst.msk [vmem:[#allocation3 + $0xa0] sm:$0xff] %vm1188, %v1187
        %1210 = vst.msk [vmem:[#allocation3 + $0xa8] sm:$0xff] %vm1188, %v1187
        %1211 = vst.msk [vmem:[#allocation3 + $0xb0] sm:$0xff] %vm1188, %v1187
        %1212 = vst.msk [vmem:[#allocation3 + $0xb8] sm:$0xff] %vm1188, %v1187
        %1213 = vst.msk [vmem:[#allocation3 + $0xc0] sm:$0xff] %vm1188, %v1187
        %1214 = vst.msk [vmem:[#allocation3 + $0xc8] sm:$0xff] %vm1188, %v1187
        %1215 = vst.msk [vmem:[#allocation3 + $0xd0] sm:$0xff] %vm1188, %v1187
        %1216 = vst.msk [vmem:[#allocation3 + $0xd8] sm:$0xff] %vm1188, %v1187
        %1217 = vst.msk [vmem:[#allocation3 + $0xe0] sm:$0xff] %vm1188, %v1187
        %1218 = vst.msk [vmem:[#allocation3 + $0xe8] sm:$0xff] %vm1188, %v1187
        %1219 = vst.msk [vmem:[#allocation3 + $0xf0] sm:$0xff] %vm1188, %v1187
        %1220 = vst.msk [vmem:[#allocation3 + $0xf8] sm:$0xff] %vm1188, %v1187
        %1221 = vst.msk [vmem:[#allocation3 + $0x100] sm:$0xff] %vm1188, %v1187
        %1222 = vst.msk [vmem:[#allocation3 + $0x108] sm:$0xff] %vm1188, %v1187
        %1223 = vst.msk [vmem:[#allocation3 + $0x110] sm:$0xff] %vm1188, %v1187
        %1224 = vst.msk [vmem:[#allocation3 + $0x118] sm:$0xff] %vm1188, %v1187
        %1225 = vst.msk [vmem:[#allocation3 + $0x120] sm:$0xff] %vm1188, %v1187
        %1226 = vst.msk [vmem:[#allocation3 + $0x128] sm:$0xff] %vm1188, %v1187
        %1227 = vst.msk [vmem:[#allocation3 + $0x130] sm:$0xff] %vm1188, %v1187
        %1228 = vst.msk [vmem:[#allocation3 + $0x138] sm:$0xff] %vm1188, %v1187
        %1229 = vst.msk [vmem:[#allocation3 + $0x140] sm:$0xff] %vm1188, %v1187
        %1230 = vst.msk [vmem:[#allocation3 + $0x148] sm:$0xff] %vm1188, %v1187
        %1231 = vst.msk [vmem:[#allocation3 + $0x150] sm:$0xff] %vm1188, %v1187
        %1232 = vst.msk [vmem:[#allocation3 + $0x158] sm:$0xff] %vm1188, %v1187
        %1233 = vst.msk [vmem:[#allocation3 + $0x160] sm:$0xff] %vm1188, %v1187
        %1234 = vst.msk [vmem:[#allocation3 + $0x168] sm:$0xff] %vm1188, %v1187
        %1235 = vst.msk [vmem:[#allocation3 + $0x170] sm:$0xff] %vm1188, %v1187
        %1236 = vst.msk [vmem:[#allocation3 + $0x178] sm:$0xff] %vm1188, %v1187
        %1237 = vst.msk [vmem:[#allocation3 + $0x180] sm:$0xff] %vm1188, %v1187
        %1238 = vst.msk [vmem:[#allocation3 + $0x188] sm:$0xff] %vm1188, %v1187
        %1239 = vst.msk [vmem:[#allocation3 + $0x190] sm:$0xff] %vm1188, %v1187
        %1240 = vst.msk [vmem:[#allocation3 + $0x198] sm:$0xff] %vm1188, %v1187
        %1241 = vst.msk [vmem:[#allocation3 + $0x1a0] sm:$0xff] %vm1188, %v1187
        %1242 = vst.msk [vmem:[#allocation3 + $0x1a8] sm:$0xff] %vm1188, %v1187
        %1243 = vst.msk [vmem:[#allocation3 + $0x1b0] sm:$0xff] %vm1188, %v1187
        %1244 = vst.msk [vmem:[#allocation3 + $0x1b8] sm:$0xff] %vm1188, %v1187
        %1245 = vst.msk [vmem:[#allocation3 + $0x1c0] sm:$0xff] %vm1188, %v1187
        %1246 = vst.msk [vmem:[#allocation3 + $0x1c8] sm:$0xff] %vm1188, %v1187
        %1247 = vst.msk [vmem:[#allocation3 + $0x1d0] sm:$0xff] %vm1188, %v1187
        %1248 = vst.msk [vmem:[#allocation3 + $0x1d8] sm:$0xff] %vm1188, %v1187
        %1249 = vst.msk [vmem:[#allocation3 + $0x1e0] sm:$0xff] %vm1188, %v1187
        %1250 = vst.msk [vmem:[#allocation3 + $0x1e8] sm:$0xff] %vm1188, %v1187
        %1251 = vst.msk [vmem:[#allocation3 + $0x1f0] sm:$0xff] %vm1188, %v1187
        %1252 = vst.msk [vmem:[#allocation3 + $0x1f8] sm:$0xff] %vm1188, %v1187
        %1253 = vst.msk [vmem:[#allocation3 + $0x200] sm:$0xff] %vm1188, %v1187
        %1254 = vst.msk [vmem:[#allocation3 + $0x208] sm:$0xff] %vm1188, %v1187
        %1255 = vst.msk [vmem:[#allocation3 + $0x210] sm:$0xff] %vm1188, %v1187
        %1256 = vst.msk [vmem:[#allocation3 + $0x218] sm:$0xff] %vm1188, %v1187
        %1257 = vst.msk [vmem:[#allocation3 + $0x220] sm:$0xff] %vm1188, %v1187
        %1258 = vst.msk [vmem:[#allocation3 + $0x228] sm:$0xff] %vm1188, %v1187
        %1259 = vst.msk [vmem:[#allocation3 + $0x230] sm:$0xff] %vm1188, %v1187
        %1260 = vst.msk [vmem:[#allocation3 + $0x238] sm:$0xff] %vm1188, %v1187
        %v1261 = vld [vmem:[#allocation2] sm:$0xff]
        %v1262 = vld [vmem:[#allocation2 + $0x8] sm:$0xff]
        %v1263 = vld [vmem:[#allocation2 + $0x10] sm:$0xff]
        %v1264 = vld [vmem:[#allocation2 + $0x18] sm:$0xff]
        %v1265 = vld [vmem:[#allocation2 + $0x20] sm:$0xff]
        %v1266 = vld [vmem:[#allocation2 + $0x28] sm:$0xff]
        %v1267 = vld [vmem:[#allocation2 + $0x30] sm:$0xff]
        %v1268 = vld [vmem:[#allocation2 + $0x38] sm:$0xff]
        %v1269 = vld [vmem:[#allocation2 + $0x40] sm:$0xff]
        %v1270 = vld [vmem:[#allocation2 + $0x48] sm:$0xff]
        %v1271 = vld [vmem:[#allocation2 + $0x50] sm:$0xff]
        %v1272 = vld [vmem:[#allocation2 + $0x58] sm:$0xff]
        %v1273 = vld [vmem:[#allocation2 + $0x60] sm:$0xff]
        %v1274 = vld [vmem:[#allocation2 + $0x68] sm:$0xff]
        %v1275 = vld [vmem:[#allocation2 + $0x70] sm:$0xff]
        %v1276 = vld [vmem:[#allocation2 + $0x78] sm:$0xff]
        %v1277 = vld [vmem:[#allocation2 + $0x80] sm:$0xff]
        %v1278 = vld [vmem:[#allocation2 + $0x88] sm:$0xff]
        %v1279 = vld [vmem:[#allocation2 + $0x90] sm:$0xff]
        %v1280 = vld [vmem:[#allocation2 + $0x98] sm:$0xff]
        %v1281 = vld [vmem:[#allocation2 + $0xa0] sm:$0xff]
        %v1282 = vld [vmem:[#allocation2 + $0xa8] sm:$0xff]
        %v1283 = vld [vmem:[#allocation2 + $0xb0] sm:$0xff]
        %v1284 = vld [vmem:[#allocation2 + $0xb8] sm:$0xff]
        %v1285 = vld [vmem:[#allocation2 + $0xc0] sm:$0xff]
        %v1286 = vld [vmem:[#allocation2 + $0xc8] sm:$0xff]
        %v1287 = vld [vmem:[#allocation2 + $0xd0] sm:$0xff]
        %v1288 = vld [vmem:[#allocation2 + $0xd8] sm:$0xff]
        %v1289 = vld [vmem:[#allocation2 + $0xe0] sm:$0xff]
        %v1290 = vld [vmem:[#allocation2 + $0xe8] sm:$0xff]
        %v1291 = vld [vmem:[#allocation2 + $0xf0] sm:$0xff]
        %v1292 = vld [vmem:[#allocation2 + $0xf8] sm:$0xff]
        %v1293 = vld [vmem:[#allocation2 + $0x100] sm:$0xff]
        %v1294 = vld [vmem:[#allocation2 + $0x108] sm:$0xff]
        %v1295 = vld [vmem:[#allocation2 + $0x110] sm:$0xff]
        %v1296 = vld [vmem:[#allocation2 + $0x118] sm:$0xff]
        %v1297 = vld [vmem:[#allocation2 + $0x120] sm:$0xff]
        %v1298 = vld [vmem:[#allocation2 + $0x128] sm:$0xff]
        %v1299 = vld [vmem:[#allocation2 + $0x130] sm:$0xff]
        %v1300 = vld [vmem:[#allocation2 + $0x138] sm:$0xff]
        %v1301 = vld [vmem:[#allocation2 + $0x140] sm:$0xff]
        %v1302 = vld [vmem:[#allocation2 + $0x148] sm:$0xff]
        %v1303 = vld [vmem:[#allocation2 + $0x150] sm:$0xff]
        %v1304 = vld [vmem:[#allocation2 + $0x158] sm:$0xff]
        %v1305 = vld [vmem:[#allocation2 + $0x160] sm:$0xff]
        %v1306 = vld [vmem:[#allocation2 + $0x168] sm:$0xff]
        %v1307 = vld [vmem:[#allocation2 + $0x170] sm:$0xff]
        %v1308 = vld [vmem:[#allocation2 + $0x178] sm:$0xff]
        %v1309 = vld [vmem:[#allocation2 + $0x180] sm:$0xff]
        %v1310 = vld [vmem:[#allocation2 + $0x188] sm:$0xff]
        %v1311 = vld [vmem:[#allocation2 + $0x190] sm:$0xff]
        %v1312 = vld [vmem:[#allocation2 + $0x198] sm:$0xff]
        %v1313 = vld [vmem:[#allocation2 + $0x1a0] sm:$0xff]
        %v1314 = vld [vmem:[#allocation2 + $0x1a8] sm:$0xff]
        %v1315 = vld [vmem:[#allocation2 + $0x1b0] sm:$0xff]
        %v1316 = vld [vmem:[#allocation2 + $0x1b8] sm:$0xff]
        %v1317 = vld [vmem:[#allocation2 + $0x1c0] sm:$0xff]
        %v1318 = vld [vmem:[#allocation2 + $0x1c8] sm:$0xff]
        %v1319 = vld [vmem:[#allocation2 + $0x1d0] sm:$0xff]
        %v1320 = vld [vmem:[#allocation2 + $0x1d8] sm:$0xff]
        %v1321 = vld [vmem:[#allocation2 + $0x1e0] sm:$0xff]
        %v1322 = vld [vmem:[#allocation2 + $0x1e8] sm:$0xff]
        %v1323 = vld [vmem:[#allocation2 + $0x1f0] sm:$0xff]
        %v1324 = vld [vmem:[#allocation2 + $0x1f8] sm:$0xff]
        %v1325 = vld [vmem:[#allocation2 + $0x200] sm:$0xff]
        %v1326 = vld [vmem:[#allocation2 + $0x208] sm:$0xff]
        %v1327 = vld [vmem:[#allocation2 + $0x210] sm:$0xff]
        %v1328 = vld [vmem:[#allocation2 + $0x218] sm:$0xff]
        %v1329 = vld [vmem:[#allocation2 + $0x220] sm:$0xff]
        %v1330 = vld [vmem:[#allocation2 + $0x228] sm:$0xff]
        %v1331 = vld [vmem:[#allocation2 + $0x230] sm:$0xff]
        %v1332 = vld [vmem:[#allocation2 + $0x238] sm:$0xff]
        %v1333 = vpack.c.bf16 %v1262, %v1261
        %v1334 = vpack.c.bf16 %v1264, %v1263
        %v1335 = vpack.c.bf16 %v1266, %v1265
        %v1336 = vpack.c.bf16 %v1268, %v1267
        %v1337 = vpack.c.bf16 %v1270, %v1269
        %v1338 = vpack.c.bf16 %v1272, %v1271
        %v1339 = vpack.c.bf16 %v1274, %v1273
        %v1340 = vpack.c.bf16 %v1276, %v1275
        %v1341 = vpack.c.bf16 %v1278, %v1277
        %v1342 = vpack.c.bf16 %v1280, %v1279
        %v1343 = vpack.c.bf16 %v1282, %v1281
        %v1344 = vpack.c.bf16 %v1284, %v1283
        %v1345 = vpack.c.bf16 %v1286, %v1285
        %v1346 = vpack.c.bf16 %v1288, %v1287
        %v1347 = vpack.c.bf16 %v1290, %v1289
        %v1348 = vpack.c.bf16 %v1292, %v1291
        %v1349 = vpack.c.bf16 %v1294, %v1293
        %v1350 = vpack.c.bf16 %v1296, %v1295
        %v1351 = vpack.c.bf16 %v1298, %v1297
        %v1352 = vpack.c.bf16 %v1300, %v1299
        %v1353 = vpack.c.bf16 %v1302, %v1301
        %v1354 = vpack.c.bf16 %v1304, %v1303
        %v1355 = vpack.c.bf16 %v1306, %v1305
        %v1356 = vpack.c.bf16 %v1308, %v1307
        %v1357 = vpack.c.bf16 %v1310, %v1309
        %v1358 = vpack.c.bf16 %v1312, %v1311
        %v1359 = vpack.c.bf16 %v1314, %v1313
        %v1360 = vpack.c.bf16 %v1316, %v1315
        %v1361 = vpack.c.bf16 %v1318, %v1317
        %v1362 = vpack.c.bf16 %v1320, %v1319
        %v1363 = vpack.c.bf16 %v1322, %v1321
        %v1364 = vpack.c.bf16 %v1324, %v1323
        %v1365 = vpack.c.bf16 %v1326, %v1325
        %v1366 = vpack.c.bf16 %v1328, %v1327
        %v1367 = vpack.c.bf16 %v1330, %v1329
        %v1368 = vpack.c.bf16 %v1332, %v1331
        %v1369 = vld [vmem:[#allocation3] sm:$0xff]
        %v1370 = vld [vmem:[#allocation3 + $0x8] sm:$0xff]
        %v1371 = vld [vmem:[#allocation3 + $0x10] sm:$0xff]
        %v1372 = vld [vmem:[#allocation3 + $0x18] sm:$0xff]
        %v1373 = vld [vmem:[#allocation3 + $0x20] sm:$0xff]
        %v1374 = vld [vmem:[#allocation3 + $0x28] sm:$0xff]
        %v1375 = vld [vmem:[#allocation3 + $0x30] sm:$0xff]
        %v1376 = vld [vmem:[#allocation3 + $0x38] sm:$0xff]
        %v1377 = vld [vmem:[#allocation3 + $0x40] sm:$0xff]
        %v1378 = vld [vmem:[#allocation3 + $0x48] sm:$0xff]
        %v1379 = vld [vmem:[#allocation3 + $0x50] sm:$0xff]
        %v1380 = vld [vmem:[#allocation3 + $0x58] sm:$0xff]
        %v1381 = vld [vmem:[#allocation3 + $0x60] sm:$0xff]
        %v1382 = vld [vmem:[#allocation3 + $0x68] sm:$0xff]
        %v1383 = vld [vmem:[#allocation3 + $0x70] sm:$0xff]
        %v1384 = vld [vmem:[#allocation3 + $0x78] sm:$0xff]
        %v1385 = vld [vmem:[#allocation3 + $0x80] sm:$0xff]
        %v1386 = vld [vmem:[#allocation3 + $0x88] sm:$0xff]
        %v1387 = vld [vmem:[#allocation3 + $0x90] sm:$0xff]
        %v1388 = vld [vmem:[#allocation3 + $0x98] sm:$0xff]
        %v1389 = vld [vmem:[#allocation3 + $0xa0] sm:$0xff]
        %v1390 = vld [vmem:[#allocation3 + $0xa8] sm:$0xff]
        %v1391 = vld [vmem:[#allocation3 + $0xb0] sm:$0xff]
        %v1392 = vld [vmem:[#allocation3 + $0xb8] sm:$0xff]
        %v1393 = vld [vmem:[#allocation3 + $0xc0] sm:$0xff]
        %v1394 = vld [vmem:[#allocation3 + $0xc8] sm:$0xff]
        %v1395 = vld [vmem:[#allocation3 + $0xd0] sm:$0xff]
        %v1396 = vld [vmem:[#allocation3 + $0xd8] sm:$0xff]
        %v1397 = vld [vmem:[#allocation3 + $0xe0] sm:$0xff]
        %v1398 = vld [vmem:[#allocation3 + $0xe8] sm:$0xff]
        %v1399 = vld [vmem:[#allocation3 + $0xf0] sm:$0xff]
        %v1400 = vld [vmem:[#allocation3 + $0xf8] sm:$0xff]
        %v1401 = vld [vmem:[#allocation3 + $0x100] sm:$0xff]
        %v1402 = vld [vmem:[#allocation3 + $0x108] sm:$0xff]
        %v1403 = vld [vmem:[#allocation3 + $0x110] sm:$0xff]
        %v1404 = vld [vmem:[#allocation3 + $0x118] sm:$0xff]
        %v1405 = vld [vmem:[#allocation3 + $0x120] sm:$0xff]
        %v1406 = vld [vmem:[#allocation3 + $0x128] sm:$0xff]
        %v1407 = vld [vmem:[#allocation3 + $0x130] sm:$0xff]
        %v1408 = vld [vmem:[#allocation3 + $0x138] sm:$0xff]
        %v1409 = vld [vmem:[#allocation3 + $0x140] sm:$0xff]
        %v1410 = vld [vmem:[#allocation3 + $0x148] sm:$0xff]
        %v1411 = vld [vmem:[#allocation3 + $0x150] sm:$0xff]
        %v1412 = vld [vmem:[#allocation3 + $0x158] sm:$0xff]
        %v1413 = vld [vmem:[#allocation3 + $0x160] sm:$0xff]
        %v1414 = vld [vmem:[#allocation3 + $0x168] sm:$0xff]
        %v1415 = vld [vmem:[#allocation3 + $0x170] sm:$0xff]
        %v1416 = vld [vmem:[#allocation3 + $0x178] sm:$0xff]
        %v1417 = vld [vmem:[#allocation3 + $0x180] sm:$0xff]
        %v1418 = vld [vmem:[#allocation3 + $0x188] sm:$0xff]
        %v1419 = vld [vmem:[#allocation3 + $0x190] sm:$0xff]
        %v1420 = vld [vmem:[#allocation3 + $0x198] sm:$0xff]
        %v1421 = vld [vmem:[#allocation3 + $0x1a0] sm:$0xff]
        %v1422 = vld [vmem:[#allocation3 + $0x1a8] sm:$0xff]
        %v1423 = vld [vmem:[#allocation3 + $0x1b0] sm:$0xff]
        %v1424 = vld [vmem:[#allocation3 + $0x1b8] sm:$0xff]
        %v1425 = vld [vmem:[#allocation3 + $0x1c0] sm:$0xff]
        %v1426 = vld [vmem:[#allocation3 + $0x1c8] sm:$0xff]
        %v1427 = vld [vmem:[#allocation3 + $0x1d0] sm:$0xff]
        %v1428 = vld [vmem:[#allocation3 + $0x1d8] sm:$0xff]
        %v1429 = vld [vmem:[#allocation3 + $0x1e0] sm:$0xff]
        %v1430 = vld [vmem:[#allocation3 + $0x1e8] sm:$0xff]
        %v1431 = vld [vmem:[#allocation3 + $0x1f0] sm:$0xff]
        %v1432 = vld [vmem:[#allocation3 + $0x1f8] sm:$0xff]
        %v1433 = vld [vmem:[#allocation3 + $0x200] sm:$0xff]
        %v1434 = vld [vmem:[#allocation3 + $0x208] sm:$0xff]
        %v1435 = vld [vmem:[#allocation3 + $0x210] sm:$0xff]
        %v1436 = vld [vmem:[#allocation3 + $0x218] sm:$0xff]
        %v1437 = vld [vmem:[#allocation3 + $0x220] sm:$0xff]
        %v1438 = vld [vmem:[#allocation3 + $0x228] sm:$0xff]
        %v1439 = vld [vmem:[#allocation3 + $0x230] sm:$0xff]
        %v1440 = vld [vmem:[#allocation3 + $0x238] sm:$0xff]
        %v1441 = vld [vmem:[%s3] sm:$0xf]
        %v1442 = vld [vmem:[%s3 + $0x4] sm:$0xf]
        %v1443 = vld [vmem:[%s3 + $0x8] sm:$0xf]
        %v1444 = vld [vmem:[%s3 + $0xc] sm:$0xf]
        %v1445 = vld [vmem:[%s3 + $0x10] sm:$0xf]
        %v1446 = vld [vmem:[%s3 + $0x14] sm:$0xf]
        %v1447 = vld [vmem:[%s3 + $0x18] sm:$0xf]
        %v1448 = vld [vmem:[%s3 + $0x1c] sm:$0xf]
        %v1449 = vld [vmem:[%s3 + $0x20] sm:$0xf]
        %v1450 = vld [vmem:[%s3 + $0x24] sm:$0xf]
        %v1451 = vld [vmem:[%s3 + $0x28] sm:$0xf]
        %v1452 = vld [vmem:[%s3 + $0x2c] sm:$0xf]
        %v1465 = vunpack.c.l.b16 %v1441
        %v1466 = vunpack.c.l.b16 %v1442
        %v1467 = vunpack.c.l.b16 %v1443
        %v1468 = vunpack.c.l.b16 %v1444
        %v1469 = vunpack.c.l.b16 %v1445
        %v1470 = vunpack.c.l.b16 %v1446
        %v1471 = vunpack.c.l.b16 %v1447
        %v1472 = vunpack.c.l.b16 %v1448
        %v1473 = vunpack.c.l.b16 %v1449
        %v1474 = vunpack.c.l.b16 %v1450
        %v1475 = vunpack.c.l.b16 %v1451
        %v1476 = vunpack.c.l.b16 %v1452
        %v1477 = vpack.c.b16 %v1466, %v1465
        %v1478 = vpack.c.b16 %v1468, %v1467
        %v1479 = vpack.c.b16 %v1470, %v1469
        %v1480 = vpack.c.b16 %v1472, %v1471
        %v1481 = vpack.c.b16 %v1474, %v1473
        %v1482 = vpack.c.b16 %v1476, %v1475
        %v1490 = vsel %vm1102, %v1333, 0
        %v1493 = vsel %vm1102, %v1334, 0
        %v1496 = vsel %vm1102, %v1335, 0
        %v1499 = vsel %vm1102, %v1336, 0
        %v1502 = vsel %vm1102, %v1337, 0
        %v1505 = vsel %vm1102, %v1338, 0
        %v1508 = vsel %vm1102, %v1339, 0
        %v1511 = vsel %vm1102, %v1340, 0
        %v1514 = vsel %vm1102, %v1341, 0
        %v1517 = vsel %vm1102, %v1342, 0
        %v1520 = vsel %vm1102, %v1343, 0
        %v1523 = vsel %vm1102, %v1344, 0
        %v1526 = vsel %vm1102, %v1345, 0
        %v1529 = vsel %vm1102, %v1346, 0
        %v1532 = vsel %vm1102, %v1347, 0
        %v1535 = vsel %vm1102, %v1348, 0
        %v1538 = vsel %vm1102, %v1349, 0
        %v1541 = vsel %vm1102, %v1350, 0
        %v1544 = vsel %vm1102, %v1351, 0
        %v1547 = vsel %vm1102, %v1352, 0
        %v1550 = vsel %vm1102, %v1353, 0
        %v1553 = vsel %vm1102, %v1354, 0
        %v1556 = vsel %vm1102, %v1355, 0
        %v1559 = vsel %vm1102, %v1356, 0
        %v1562 = vsel %vm1102, %v1357, 0
        %v1565 = vsel %vm1102, %v1358, 0
        %v1568 = vsel %vm1102, %v1359, 0
        %v1571 = vsel %vm1102, %v1360, 0
        %v1574 = vsel %vm1102, %v1361, 0
        %v1577 = vsel %vm1102, %v1362, 0
        %v1580 = vsel %vm1102, %v1363, 0
        %v1583 = vsel %vm1102, %v1364, 0
        %v1586 = vsel %vm1102, %v1365, 0
        %v1589 = vsel %vm1102, %v1366, 0
        %v1592 = vsel %vm1102, %v1367, 0
        %v1595 = vsel %vm1102, %v1368, 0
        %1597 = vmatprep.subr.bf16.mxu0 0
        %1598 = vmatpush1.bf16.msra.mxu0 0
        %1599 = vmatprep.subr.bf16.mxu0 0
        %1600 = vmatpush1.bf16.msra.mxu0 0
        %1601 = vmatprep.subr.bf16.mxu0 0
        %1602 = vmatpush1.bf16.msra.mxu0 %v1482
        %1603 = vmatprep.subr.bf16.mxu0 0
        %1604 = vmatpush1.bf16.msra.mxu0 %v1481
        %1605 = vmatprep.subr.bf16.mxu0 0
        %1606 = vmatpush1.bf16.msra.mxu0 %v1480
        %1607 = vmatprep.subr.bf16.mxu0 0
        %1608 = vmatpush1.bf16.msra.mxu0 %v1479
        %1609 = vmatprep.subr.bf16.mxu0 0
        %1610 = vmatpush1.bf16.msra.mxu0 %v1478
        %1611 = vmatprep.subr.bf16.mxu0 0
        %1612 = vmatpush1.bf16.msra.mxu0 %v1477
        %1613 = vmatprep.subr.bf16.mxu0 0
        %1614 = vmatpush2.bf16.msra.mxu0 0
        %1615 = vmatprep.subr.bf16.mxu0 0
        %1616 = vmatpush2.bf16.msra.mxu0 0
        %1617 = vmatprep.subr.bf16.mxu0 0
        %1618 = vmatpush2.bf16.msra.mxu0 0
        %1619 = vmatprep.subr.bf16.mxu0 0
        %1620 = vmatpush2.bf16.msra.mxu0 0
        %1621 = vmatprep.subr.bf16.mxu0 0
        %1622 = vmatpush2.bf16.msra.mxu0 0
        %1623 = vmatprep.subr.bf16.mxu0 0
        %1624 = vmatpush2.bf16.msra.mxu0 0
        %1625 = vmatprep.subr.bf16.mxu0 0
        %1626 = vmatpush2.bf16.msra.mxu0 0
        %1627 = vmatprep.subr.bf16.mxu0 0
        %1628 = vmatpush2.bf16.msra.mxu0 0
        %1629 = vmatprep.mubr.bf16.mxu0 0
        %1630 = vmatmul.mubr.bf16.gmra.mxu0 %v1490
        %v1631 = vpop.f32.mrf.mxu0
        %v1632 = vadd.f32 0.0, %v1631
        %v1633 = vpop.f32.mrf.mxu0
        %v1634 = vpop.f32.mrf.mxu0
        %v1635 = vadd.f32 0.0, %v1634
        %v1636 = vpop.f32.mrf.mxu0
        %1637 = vmatprep.mubr.bf16.mxu0 0
        %1638 = vmatmul.mubr.bf16.gmra.mxu0 %v1493
        %v1639 = vpop.f32.mrf.mxu0
        %v1640 = vadd.f32 0.0, %v1639
        %v1641 = vpop.f32.mrf.mxu0
        %v1642 = vpop.f32.mrf.mxu0
        %v1643 = vadd.f32 0.0, %v1642
        %v1644 = vpop.f32.mrf.mxu0
        %1645 = vmatprep.mubr.bf16.mxu0 0
        %1646 = vmatmul.mubr.bf16.gmra.mxu0 %v1496
        %v1647 = vpop.f32.mrf.mxu0
        %v1648 = vadd.f32 0.0, %v1647
        %v1649 = vpop.f32.mrf.mxu0
        %v1650 = vpop.f32.mrf.mxu0
        %v1651 = vadd.f32 0.0, %v1650
        %v1652 = vpop.f32.mrf.mxu0
        %1653 = vmatprep.mubr.bf16.mxu0 0
        %1654 = vmatmul.mubr.bf16.gmra.mxu0 %v1499
        %v1655 = vpop.f32.mrf.mxu0
        %v1656 = vadd.f32 0.0, %v1655
        %v1657 = vpop.f32.mrf.mxu0
        %v1658 = vpop.f32.mrf.mxu0
        %v1659 = vadd.f32 0.0, %v1658
        %v1660 = vpop.f32.mrf.mxu0
        %1661 = vmatprep.mubr.bf16.mxu0 0
        %1662 = vmatmul.mubr.bf16.gmra.mxu0 %v1502
        %v1663 = vpop.f32.mrf.mxu0
        %v1664 = vadd.f32 0.0, %v1663
        %v1665 = vpop.f32.mrf.mxu0
        %v1666 = vpop.f32.mrf.mxu0
        %v1667 = vadd.f32 0.0, %v1666
        %v1668 = vpop.f32.mrf.mxu0
        %1669 = vmatprep.mubr.bf16.mxu0 0
        %1670 = vmatmul.mubr.bf16.gmra.mxu0 %v1505
        %v1671 = vpop.f32.mrf.mxu0
        %v1672 = vadd.f32 0.0, %v1671
        %v1673 = vpop.f32.mrf.mxu0
        %v1674 = vpop.f32.mrf.mxu0
        %v1675 = vadd.f32 0.0, %v1674
        %v1676 = vpop.f32.mrf.mxu0
        %1677 = vmatprep.mubr.bf16.mxu0 0
        %1678 = vmatmul.mubr.bf16.gmra.mxu0 %v1508
        %v1679 = vpop.f32.mrf.mxu0
        %v1680 = vadd.f32 0.0, %v1679
        %v1681 = vpop.f32.mrf.mxu0
        %v1682 = vpop.f32.mrf.mxu0
        %v1683 = vadd.f32 0.0, %v1682
        %v1684 = vpop.f32.mrf.mxu0
        %1685 = vmatprep.mubr.bf16.mxu0 0
        %1686 = vmatmul.mubr.bf16.gmra.mxu0 %v1511
        %v1687 = vpop.f32.mrf.mxu0
        %v1688 = vadd.f32 0.0, %v1687
        %v1689 = vpop.f32.mrf.mxu0
        %v1690 = vpop.f32.mrf.mxu0
        %v1691 = vadd.f32 0.0, %v1690
        %v1692 = vpop.f32.mrf.mxu0
        %1693 = vmatprep.mubr.bf16.mxu0 0
        %1694 = vmatmul.mubr.bf16.gmra.mxu0 %v1514
        %v1695 = vpop.f32.mrf.mxu0
        %v1696 = vadd.f32 0.0, %v1695
        %v1697 = vpop.f32.mrf.mxu0
        %v1698 = vpop.f32.mrf.mxu0
        %v1699 = vadd.f32 0.0, %v1698
        %v1700 = vpop.f32.mrf.mxu0
        %1701 = vmatprep.mubr.bf16.mxu0 0
        %1702 = vmatmul.mubr.bf16.gmra.mxu0 %v1517
        %v1703 = vpop.f32.mrf.mxu0
        %v1704 = vadd.f32 0.0, %v1703
        %v1705 = vpop.f32.mrf.mxu0
        %v1706 = vpop.f32.mrf.mxu0
        %v1707 = vadd.f32 0.0, %v1706
        %v1708 = vpop.f32.mrf.mxu0
        %1709 = vmatprep.mubr.bf16.mxu0 0
        %1710 = vmatmul.mubr.bf16.gmra.mxu0 %v1520
        %v1711 = vpop.f32.mrf.mxu0
        %v1712 = vadd.f32 0.0, %v1711
        %v1713 = vpop.f32.mrf.mxu0
        %v1714 = vpop.f32.mrf.mxu0
        %v1715 = vadd.f32 0.0, %v1714
        %v1716 = vpop.f32.mrf.mxu0
        %1717 = vmatprep.mubr.bf16.mxu0 0
        %1718 = vmatmul.mubr.bf16.gmra.mxu0 %v1523
        %v1719 = vpop.f32.mrf.mxu0
        %v1720 = vadd.f32 0.0, %v1719
        %v1721 = vpop.f32.mrf.mxu0
        %v1722 = vpop.f32.mrf.mxu0
        %v1723 = vadd.f32 0.0, %v1722
        %v1724 = vpop.f32.mrf.mxu0
        %1725 = vmatprep.mubr.bf16.mxu0 0
        %1726 = vmatmul.mubr.bf16.gmra.mxu0 %v1526
        %v1727 = vpop.f32.mrf.mxu0
        %v1728 = vadd.f32 0.0, %v1727
        %v1729 = vpop.f32.mrf.mxu0
        %v1730 = vpop.f32.mrf.mxu0
        %v1731 = vadd.f32 0.0, %v1730
        %v1732 = vpop.f32.mrf.mxu0
        %1733 = vmatprep.mubr.bf16.mxu0 0
        %1734 = vmatmul.mubr.bf16.gmra.mxu0 %v1529
        %v1735 = vpop.f32.mrf.mxu0
        %v1736 = vadd.f32 0.0, %v1735
        %v1737 = vpop.f32.mrf.mxu0
        %v1738 = vpop.f32.mrf.mxu0
        %v1739 = vadd.f32 0.0, %v1738
        %v1740 = vpop.f32.mrf.mxu0
        %1741 = vmatprep.mubr.bf16.mxu0 0
        %1742 = vmatmul.mubr.bf16.gmra.mxu0 %v1532
        %v1743 = vpop.f32.mrf.mxu0
        %v1744 = vadd.f32 0.0, %v1743
        %v1745 = vpop.f32.mrf.mxu0
        %v1746 = vpop.f32.mrf.mxu0
        %v1747 = vadd.f32 0.0, %v1746
        %v1748 = vpop.f32.mrf.mxu0
        %1749 = vmatprep.mubr.bf16.mxu0 0
        %1750 = vmatmul.mubr.bf16.gmra.mxu0 %v1535
        %v1751 = vpop.f32.mrf.mxu0
        %v1752 = vadd.f32 0.0, %v1751
        %v1753 = vpop.f32.mrf.mxu0
        %v1754 = vpop.f32.mrf.mxu0
        %v1755 = vadd.f32 0.0, %v1754
        %v1756 = vpop.f32.mrf.mxu0
        %1757 = vmatprep.mubr.bf16.mxu0 0
        %1758 = vmatmul.mubr.bf16.gmra.mxu0 %v1538
        %v1759 = vpop.f32.mrf.mxu0
        %v1760 = vadd.f32 0.0, %v1759
        %v1761 = vpop.f32.mrf.mxu0
        %v1762 = vpop.f32.mrf.mxu0
        %v1763 = vadd.f32 0.0, %v1762
        %v1764 = vpop.f32.mrf.mxu0
        %1765 = vmatprep.mubr.bf16.mxu0 0
        %1766 = vmatmul.mubr.bf16.gmra.mxu0 %v1541
        %v1767 = vpop.f32.mrf.mxu0
        %v1768 = vadd.f32 0.0, %v1767
        %v1769 = vpop.f32.mrf.mxu0
        %v1770 = vpop.f32.mrf.mxu0
        %v1771 = vadd.f32 0.0, %v1770
        %v1772 = vpop.f32.mrf.mxu0
        %1773 = vmatprep.mubr.bf16.mxu0 0
        %1774 = vmatmul.mubr.bf16.gmra.mxu0 %v1544
        %v1775 = vpop.f32.mrf.mxu0
        %v1776 = vadd.f32 0.0, %v1775
        %v1777 = vpop.f32.mrf.mxu0
        %v1778 = vpop.f32.mrf.mxu0
        %v1779 = vadd.f32 0.0, %v1778
        %v1780 = vpop.f32.mrf.mxu0
        %1781 = vmatprep.mubr.bf16.mxu0 0
        %1782 = vmatmul.mubr.bf16.gmra.mxu0 %v1547
        %v1783 = vpop.f32.mrf.mxu0
        %v1784 = vadd.f32 0.0, %v1783
        %v1785 = vpop.f32.mrf.mxu0
        %v1786 = vpop.f32.mrf.mxu0
        %v1787 = vadd.f32 0.0, %v1786
        %v1788 = vpop.f32.mrf.mxu0
        %1789 = vmatprep.mubr.bf16.mxu0 0
        %1790 = vmatmul.mubr.bf16.gmra.mxu0 %v1550
        %v1791 = vpop.f32.mrf.mxu0
        %v1792 = vadd.f32 0.0, %v1791
        %v1793 = vpop.f32.mrf.mxu0
        %v1794 = vpop.f32.mrf.mxu0
        %v1795 = vadd.f32 0.0, %v1794
        %v1796 = vpop.f32.mrf.mxu0
        %1797 = vmatprep.mubr.bf16.mxu0 0
        %1798 = vmatmul.mubr.bf16.gmra.mxu0 %v1553
        %v1799 = vpop.f32.mrf.mxu0
        %v1800 = vadd.f32 0.0, %v1799
        %v1801 = vpop.f32.mrf.mxu0
        %v1802 = vpop.f32.mrf.mxu0
        %v1803 = vadd.f32 0.0, %v1802
        %v1804 = vpop.f32.mrf.mxu0
        %1805 = vmatprep.mubr.bf16.mxu0 0
        %1806 = vmatmul.mubr.bf16.gmra.mxu0 %v1556
        %v1807 = vpop.f32.mrf.mxu0
        %v1808 = vadd.f32 0.0, %v1807
        %v1809 = vpop.f32.mrf.mxu0
        %v1810 = vpop.f32.mrf.mxu0
        %v1811 = vadd.f32 0.0, %v1810
        %v1812 = vpop.f32.mrf.mxu0
        %1813 = vmatprep.mubr.bf16.mxu0 0
        %1814 = vmatmul.mubr.bf16.gmra.mxu0 %v1559
        %v1815 = vpop.f32.mrf.mxu0
        %v1816 = vadd.f32 0.0, %v1815
        %v1817 = vpop.f32.mrf.mxu0
        %v1818 = vpop.f32.mrf.mxu0
        %v1819 = vadd.f32 0.0, %v1818
        %v1820 = vpop.f32.mrf.mxu0
        %1821 = vmatprep.mubr.bf16.mxu0 0
        %1822 = vmatmul.mubr.bf16.gmra.mxu0 %v1562
        %v1823 = vpop.f32.mrf.mxu0
        %v1824 = vadd.f32 0.0, %v1823
        %v1825 = vpop.f32.mrf.mxu0
        %v1826 = vpop.f32.mrf.mxu0
        %v1827 = vadd.f32 0.0, %v1826
        %v1828 = vpop.f32.mrf.mxu0
        %1829 = vmatprep.mubr.bf16.mxu0 0
        %1830 = vmatmul.mubr.bf16.gmra.mxu0 %v1565
        %v1831 = vpop.f32.mrf.mxu0
        %v1832 = vadd.f32 0.0, %v1831
        %v1833 = vpop.f32.mrf.mxu0
        %v1834 = vpop.f32.mrf.mxu0
        %v1835 = vadd.f32 0.0, %v1834
        %v1836 = vpop.f32.mrf.mxu0
        %1837 = vmatprep.mubr.bf16.mxu0 0
        %1838 = vmatmul.mubr.bf16.gmra.mxu0 %v1568
        %v1839 = vpop.f32.mrf.mxu0
        %v1840 = vadd.f32 0.0, %v1839
        %v1841 = vpop.f32.mrf.mxu0
        %v1842 = vpop.f32.mrf.mxu0
        %v1843 = vadd.f32 0.0, %v1842
        %v1844 = vpop.f32.mrf.mxu0
        %1845 = vmatprep.mubr.bf16.mxu0 0
        %1846 = vmatmul.mubr.bf16.gmra.mxu0 %v1571
        %v1847 = vpop.f32.mrf.mxu0
        %v1848 = vadd.f32 0.0, %v1847
        %v1849 = vpop.f32.mrf.mxu0
        %v1850 = vpop.f32.mrf.mxu0
        %v1851 = vadd.f32 0.0, %v1850
        %v1852 = vpop.f32.mrf.mxu0
        %1853 = vmatprep.mubr.bf16.mxu0 0
        %1854 = vmatmul.mubr.bf16.gmra.mxu0 %v1574
        %v1855 = vpop.f32.mrf.mxu0
        %v1856 = vadd.f32 0.0, %v1855
        %v1857 = vpop.f32.mrf.mxu0
        %v1858 = vpop.f32.mrf.mxu0
        %v1859 = vadd.f32 0.0, %v1858
        %v1860 = vpop.f32.mrf.mxu0
        %1861 = vmatprep.mubr.bf16.mxu0 0
        %1862 = vmatmul.mubr.bf16.gmra.mxu0 %v1577
        %v1863 = vpop.f32.mrf.mxu0
        %v1864 = vadd.f32 0.0, %v1863
        %v1865 = vpop.f32.mrf.mxu0
        %v1866 = vpop.f32.mrf.mxu0
        %v1867 = vadd.f32 0.0, %v1866
        %v1868 = vpop.f32.mrf.mxu0
        %1869 = vmatprep.mubr.bf16.mxu0 0
        %1870 = vmatmul.mubr.bf16.gmra.mxu0 %v1580
        %v1871 = vpop.f32.mrf.mxu0
        %v1872 = vadd.f32 0.0, %v1871
        %v1873 = vpop.f32.mrf.mxu0
        %v1874 = vpop.f32.mrf.mxu0
        %v1875 = vadd.f32 0.0, %v1874
        %v1876 = vpop.f32.mrf.mxu0
        %1877 = vmatprep.mubr.bf16.mxu0 0
        %1878 = vmatmul.mubr.bf16.gmra.mxu0 %v1583
        %v1879 = vpop.f32.mrf.mxu0
        %v1880 = vadd.f32 0.0, %v1879
        %v1881 = vpop.f32.mrf.mxu0
        %v1882 = vpop.f32.mrf.mxu0
        %v1883 = vadd.f32 0.0, %v1882
        %v1884 = vpop.f32.mrf.mxu0
        %1885 = vmatprep.mubr.bf16.mxu0 0
        %1886 = vmatmul.mubr.bf16.gmra.mxu0 %v1586
        %v1887 = vpop.f32.mrf.mxu0
        %v1888 = vadd.f32 0.0, %v1887
        %v1889 = vpop.f32.mrf.mxu0
        %v1890 = vpop.f32.mrf.mxu0
        %v1891 = vadd.f32 0.0, %v1890
        %v1892 = vpop.f32.mrf.mxu0
        %1893 = vmatprep.mubr.bf16.mxu0 0
        %1894 = vmatmul.mubr.bf16.gmra.mxu0 %v1589
        %v1895 = vpop.f32.mrf.mxu0
        %v1896 = vadd.f32 0.0, %v1895
        %v1897 = vpop.f32.mrf.mxu0
        %v1898 = vpop.f32.mrf.mxu0
        %v1899 = vadd.f32 0.0, %v1898
        %v1900 = vpop.f32.mrf.mxu0
        %1901 = vmatprep.mubr.bf16.mxu0 0
        %1902 = vmatmul.mubr.bf16.gmra.mxu0 %v1592
        %v1903 = vpop.f32.mrf.mxu0
        %v1904 = vadd.f32 0.0, %v1903
        %v1905 = vpop.f32.mrf.mxu0
        %v1906 = vpop.f32.mrf.mxu0
        %v1907 = vadd.f32 0.0, %v1906
        %v1908 = vpop.f32.mrf.mxu0
        %1909 = vmatprep.mubr.bf16.mxu0 0
        %1910 = vmatmul.mubr.bf16.gmra.mxu0 %v1595
        %v1911 = vpop.f32.mrf.mxu0
        %v1912 = vadd.f32 0.0, %v1911
        %v1913 = vpop.f32.mrf.mxu0
        %v1914 = vpop.f32.mrf.mxu0
        %v1915 = vadd.f32 0.0, %v1914
        %v1916 = vpop.f32.mrf.mxu0
        %1917 = vdwg.mxu0
        %v1918 = vadd.f32 %v1369, %v1632
        %v1919 = vadd.f32 %v1370, %v1635
        %v1920 = vadd.f32 %v1371, %v1640
        %v1921 = vadd.f32 %v1372, %v1643
        %v1922 = vadd.f32 %v1373, %v1648
        %v1923 = vadd.f32 %v1374, %v1651
        %v1924 = vadd.f32 %v1375, %v1656
        %v1925 = vadd.f32 %v1376, %v1659
        %v1926 = vadd.f32 %v1377, %v1664
        %v1927 = vadd.f32 %v1378, %v1667
        %v1928 = vadd.f32 %v1379, %v1672
        %v1929 = vadd.f32 %v1380, %v1675
        %v1930 = vadd.f32 %v1381, %v1680
        %v1931 = vadd.f32 %v1382, %v1683
        %v1932 = vadd.f32 %v1383, %v1688
        %v1933 = vadd.f32 %v1384, %v1691
        %v1934 = vadd.f32 %v1385, %v1696
        %v1935 = vadd.f32 %v1386, %v1699
        %v1936 = vadd.f32 %v1387, %v1704
        %v1937 = vadd.f32 %v1388, %v1707
        %v1938 = vadd.f32 %v1389, %v1712
        %v1939 = vadd.f32 %v1390, %v1715
        %v1940 = vadd.f32 %v1391, %v1720
        %v1941 = vadd.f32 %v1392, %v1723
        %v1942 = vadd.f32 %v1393, %v1728
        %v1943 = vadd.f32 %v1394, %v1731
        %v1944 = vadd.f32 %v1395, %v1736
        %v1945 = vadd.f32 %v1396, %v1739
        %v1946 = vadd.f32 %v1397, %v1744
        %v1947 = vadd.f32 %v1398, %v1747
        %v1948 = vadd.f32 %v1399, %v1752
        %v1949 = vadd.f32 %v1400, %v1755
        %v1950 = vadd.f32 %v1401, %v1760
        %v1951 = vadd.f32 %v1402, %v1763
        %v1952 = vadd.f32 %v1403, %v1768
        %v1953 = vadd.f32 %v1404, %v1771
        %v1954 = vadd.f32 %v1405, %v1776
        %v1955 = vadd.f32 %v1406, %v1779
        %v1956 = vadd.f32 %v1407, %v1784
        %v1957 = vadd.f32 %v1408, %v1787
        %v1958 = vadd.f32 %v1409, %v1792
        %v1959 = vadd.f32 %v1410, %v1795
        %v1960 = vadd.f32 %v1411, %v1800
        %v1961 = vadd.f32 %v1412, %v1803
        %v1962 = vadd.f32 %v1413, %v1808
        %v1963 = vadd.f32 %v1414, %v1811
        %v1964 = vadd.f32 %v1415, %v1816
        %v1965 = vadd.f32 %v1416, %v1819
        %v1966 = vadd.f32 %v1417, %v1824
        %v1967 = vadd.f32 %v1418, %v1827
        %v1968 = vadd.f32 %v1419, %v1832
        %v1969 = vadd.f32 %v1420, %v1835
        %v1970 = vadd.f32 %v1421, %v1840
        %v1971 = vadd.f32 %v1422, %v1843
        %v1972 = vadd.f32 %v1423, %v1848
        %v1973 = vadd.f32 %v1424, %v1851
        %v1974 = vadd.f32 %v1425, %v1856
        %v1975 = vadd.f32 %v1426, %v1859
        %v1976 = vadd.f32 %v1427, %v1864
        %v1977 = vadd.f32 %v1428, %v1867
        %v1978 = vadd.f32 %v1429, %v1872
        %v1979 = vadd.f32 %v1430, %v1875
        %v1980 = vadd.f32 %v1431, %v1880
        %v1981 = vadd.f32 %v1432, %v1883
        %v1982 = vadd.f32 %v1433, %v1888
        %v1983 = vadd.f32 %v1434, %v1891
        %v1984 = vadd.f32 %v1435, %v1896
        %v1985 = vadd.f32 %v1436, %v1899
        %v1986 = vadd.f32 %v1437, %v1904
        %v1987 = vadd.f32 %v1438, %v1907
        %v1988 = vadd.f32 %v1439, %v1912
        %v1989 = vadd.f32 %v1440, %v1915
        %1990 = vst.msk [vmem:[#allocation3] sm:$0xff] %vm1188, %v1918
        %1991 = vst.msk [vmem:[#allocation3 + $0x8] sm:$0xff] %vm1188, %v1919
        %1992 = vst.msk [vmem:[#allocation3 + $0x10] sm:$0xff] %vm1188, %v1920
        %1993 = vst.msk [vmem:[#allocation3 + $0x18] sm:$0xff] %vm1188, %v1921
        %1994 = vst.msk [vmem:[#allocation3 + $0x20] sm:$0xff] %vm1188, %v1922
        %1995 = vst.msk [vmem:[#allocation3 + $0x28] sm:$0xff] %vm1188, %v1923
        %1996 = vst.msk [vmem:[#allocation3 + $0x30] sm:$0xff] %vm1188, %v1924
        %1997 = vst.msk [vmem:[#allocation3 + $0x38] sm:$0xff] %vm1188, %v1925
        %1998 = vst.msk [vmem:[#allocation3 + $0x40] sm:$0xff] %vm1188, %v1926
        %1999 = vst.msk [vmem:[#allocation3 + $0x48] sm:$0xff] %vm1188, %v1927
        %2000 = vst.msk [vmem:[#allocation3 + $0x50] sm:$0xff] %vm1188, %v1928
        %2001 = vst.msk [vmem:[#allocation3 + $0x58] sm:$0xff] %vm1188, %v1929
        %2002 = vst.msk [vmem:[#allocation3 + $0x60] sm:$0xff] %vm1188, %v1930
        %2003 = vst.msk [vmem:[#allocation3 + $0x68] sm:$0xff] %vm1188, %v1931
        %2004 = vst.msk [vmem:[#allocation3 + $0x70] sm:$0xff] %vm1188, %v1932
        %2005 = vst.msk [vmem:[#allocation3 + $0x78] sm:$0xff] %vm1188, %v1933
        %2006 = vst.msk [vmem:[#allocation3 + $0x80] sm:$0xff] %vm1188, %v1934
        %2007 = vst.msk [vmem:[#allocation3 + $0x88] sm:$0xff] %vm1188, %v1935
        %2008 = vst.msk [vmem:[#allocation3 + $0x90] sm:$0xff] %vm1188, %v1936
        %2009 = vst.msk [vmem:[#allocation3 + $0x98] sm:$0xff] %vm1188, %v1937
        %2010 = vst.msk [vmem:[#allocation3 + $0xa0] sm:$0xff] %vm1188, %v1938
        %2011 = vst.msk [vmem:[#allocation3 + $0xa8] sm:$0xff] %vm1188, %v1939
        %2012 = vst.msk [vmem:[#allocation3 + $0xb0] sm:$0xff] %vm1188, %v1940
        %2013 = vst.msk [vmem:[#allocation3 + $0xb8] sm:$0xff] %vm1188, %v1941
        %2014 = vst.msk [vmem:[#allocation3 + $0xc0] sm:$0xff] %vm1188, %v1942
        %2015 = vst.msk [vmem:[#allocation3 + $0xc8] sm:$0xff] %vm1188, %v1943
        %2016 = vst.msk [vmem:[#allocation3 + $0xd0] sm:$0xff] %vm1188, %v1944
        %2017 = vst.msk [vmem:[#allocation3 + $0xd8] sm:$0xff] %vm1188, %v1945
        %2018 = vst.msk [vmem:[#allocation3 + $0xe0] sm:$0xff] %vm1188, %v1946
        %2019 = vst.msk [vmem:[#allocation3 + $0xe8] sm:$0xff] %vm1188, %v1947
        %2020 = vst.msk [vmem:[#allocation3 + $0xf0] sm:$0xff] %vm1188, %v1948
        %2021 = vst.msk [vmem:[#allocation3 + $0xf8] sm:$0xff] %vm1188, %v1949
        %2022 = vst.msk [vmem:[#allocation3 + $0x100] sm:$0xff] %vm1188, %v1950
        %2023 = vst.msk [vmem:[#allocation3 + $0x108] sm:$0xff] %vm1188, %v1951
        %2024 = vst.msk [vmem:[#allocation3 + $0x110] sm:$0xff] %vm1188, %v1952
        %2025 = vst.msk [vmem:[#allocation3 + $0x118] sm:$0xff] %vm1188, %v1953
        %2026 = vst.msk [vmem:[#allocation3 + $0x120] sm:$0xff] %vm1188, %v1954
        %2027 = vst.msk [vmem:[#allocation3 + $0x128] sm:$0xff] %vm1188, %v1955
        %2028 = vst.msk [vmem:[#allocation3 + $0x130] sm:$0xff] %vm1188, %v1956
        %2029 = vst.msk [vmem:[#allocation3 + $0x138] sm:$0xff] %vm1188, %v1957
        %2030 = vst.msk [vmem:[#allocation3 + $0x140] sm:$0xff] %vm1188, %v1958
        %2031 = vst.msk [vmem:[#allocation3 + $0x148] sm:$0xff] %vm1188, %v1959
        %2032 = vst.msk [vmem:[#allocation3 + $0x150] sm:$0xff] %vm1188, %v1960
        %2033 = vst.msk [vmem:[#allocation3 + $0x158] sm:$0xff] %vm1188, %v1961
        %2034 = vst.msk [vmem:[#allocation3 + $0x160] sm:$0xff] %vm1188, %v1962
        %2035 = vst.msk [vmem:[#allocation3 + $0x168] sm:$0xff] %vm1188, %v1963
        %2036 = vst.msk [vmem:[#allocation3 + $0x170] sm:$0xff] %vm1188, %v1964
        %2037 = vst.msk [vmem:[#allocation3 + $0x178] sm:$0xff] %vm1188, %v1965
        %2038 = vst.msk [vmem:[#allocation3 + $0x180] sm:$0xff] %vm1188, %v1966
        %2039 = vst.msk [vmem:[#allocation3 + $0x188] sm:$0xff] %vm1188, %v1967
        %2040 = vst.msk [vmem:[#allocation3 + $0x190] sm:$0xff] %vm1188, %v1968
        %2041 = vst.msk [vmem:[#allocation3 + $0x198] sm:$0xff] %vm1188, %v1969
        %2042 = vst.msk [vmem:[#allocation3 + $0x1a0] sm:$0xff] %vm1188, %v1970
        %2043 = vst.msk [vmem:[#allocation3 + $0x1a8] sm:$0xff] %vm1188, %v1971
        %2044 = vst.msk [vmem:[#allocation3 + $0x1b0] sm:$0xff] %vm1188, %v1972
        %2045 = vst.msk [vmem:[#allocation3 + $0x1b8] sm:$0xff] %vm1188, %v1973
        %2046 = vst.msk [vmem:[#allocation3 + $0x1c0] sm:$0xff] %vm1188, %v1974
        %2047 = vst.msk [vmem:[#allocation3 + $0x1c8] sm:$0xff] %vm1188, %v1975
        %2048 = vst.msk [vmem:[#allocation3 + $0x1d0] sm:$0xff] %vm1188, %v1976
        %2049 = vst.msk [vmem:[#allocation3 + $0x1d8] sm:$0xff] %vm1188, %v1977
        %2050 = vst.msk [vmem:[#allocation3 + $0x1e0] sm:$0xff] %vm1188, %v1978
        %2051 = vst.msk [vmem:[#allocation3 + $0x1e8] sm:$0xff] %vm1188, %v1979
        %2052 = vst.msk [vmem:[#allocation3 + $0x1f0] sm:$0xff] %vm1188, %v1980
        %2053 = vst.msk [vmem:[#allocation3 + $0x1f8] sm:$0xff] %vm1188, %v1981
        %2054 = vst.msk [vmem:[#allocation3 + $0x200] sm:$0xff] %vm1188, %v1982
        %2055 = vst.msk [vmem:[#allocation3 + $0x208] sm:$0xff] %vm1188, %v1983
        %2056 = vst.msk [vmem:[#allocation3 + $0x210] sm:$0xff] %vm1188, %v1984
        %2057 = vst.msk [vmem:[#allocation3 + $0x218] sm:$0xff] %vm1188, %v1985
        %2058 = vst.msk [vmem:[#allocation3 + $0x220] sm:$0xff] %vm1188, %v1986
        %2059 = vst.msk [vmem:[#allocation3 + $0x228] sm:$0xff] %vm1188, %v1987
        %2060 = vst.msk [vmem:[#allocation3 + $0x230] sm:$0xff] %vm1188, %v1988
        %2061 = vst.msk [vmem:[#allocation3 + $0x238] sm:$0xff] %vm1188, %v1989
        %v2062 = vld [vmem:[#allocation2 + $0x18] sm:$0xff]
        %v2063 = vld [vmem:[#allocation2 + $0x20] sm:$0xff]
        %v2064 = vld [vmem:[#allocation2 + $0x28] sm:$0xff]
        %v2065 = vld [vmem:[#allocation2 + $0x30] sm:$0xff]
        %v2066 = vld [vmem:[#allocation2 + $0x38] sm:$0xff]
        %v2067 = vld [vmem:[#allocation2 + $0x40] sm:$0xff]
        %v2068 = vld [vmem:[#allocation2 + $0x48] sm:$0xff]
        %v2069 = vld [vmem:[#allocation2 + $0x50] sm:$0xff]
        %v2070 = vld [vmem:[#allocation2 + $0x58] sm:$0xff]
        %v2071 = vld [vmem:[#allocation2 + $0x60] sm:$0xff]
        %v2072 = vld [vmem:[#allocation2 + $0x68] sm:$0xff]
        %v2073 = vld [vmem:[#allocation2 + $0x70] sm:$0xff]
        %v2074 = vld [vmem:[#allocation2 + $0x78] sm:$0xff]
        %v2075 = vld [vmem:[#allocation2 + $0x80] sm:$0xff]
        %v2076 = vld [vmem:[#allocation2 + $0x88] sm:$0xff]
        %v2077 = vld [vmem:[#allocation2 + $0x90] sm:$0xff]
        %v2078 = vld [vmem:[#allocation2 + $0x98] sm:$0xff]
        %v2079 = vld [vmem:[#allocation2 + $0xa0] sm:$0xff]
        %v2080 = vld [vmem:[#allocation2 + $0xa8] sm:$0xff]
        %v2081 = vld [vmem:[#allocation2 + $0xb0] sm:$0xff]
        %v2082 = vld [vmem:[#allocation2 + $0xb8] sm:$0xff]
        %v2083 = vld [vmem:[#allocation2 + $0xc0] sm:$0xff]
        %v2084 = vld [vmem:[#allocation2 + $0xc8] sm:$0xff]
        %v2085 = vld [vmem:[#allocation2 + $0xd0] sm:$0xff]
        %v2086 = vld [vmem:[#allocation2 + $0xd8] sm:$0xff]
        %v2087 = vld [vmem:[#allocation2 + $0xe0] sm:$0xff]
        %v2088 = vld [vmem:[#allocation2 + $0xe8] sm:$0xff]
        %v2089 = vld [vmem:[#allocation2 + $0xf0] sm:$0xff]
        %v2090 = vld [vmem:[#allocation2 + $0xf8] sm:$0xff]
        %v2091 = vld [vmem:[#allocation2 + $0x100] sm:$0xff]
        %v2092 = vld [vmem:[#allocation2 + $0x108] sm:$0xff]
        %v2093 = vld [vmem:[#allocation2 + $0x110] sm:$0xff]
        %v2094 = vld [vmem:[#allocation2 + $0x118] sm:$0xff]
        %v2095 = vld [vmem:[#allocation2 + $0x120] sm:$0xff]
        %v2096 = vld [vmem:[#allocation2 + $0x128] sm:$0xff]
        %v2097 = vld [vmem:[#allocation2 + $0x130] sm:$0xff]
        %v2098 = vld [vmem:[#allocation2 + $0x138] sm:$0xff]
        %v2099 = vld [vmem:[#allocation2 + $0x140] sm:$0xff]
        %v2100 = vld [vmem:[#allocation2 + $0x148] sm:$0xff]
        %v2101 = vld [vmem:[#allocation2 + $0x150] sm:$0xff]
        %v2102 = vld [vmem:[#allocation2 + $0x158] sm:$0xff]
        %v2103 = vld [vmem:[#allocation2 + $0x160] sm:$0xff]
        %v2104 = vld [vmem:[#allocation2 + $0x168] sm:$0xff]
        %v2105 = vld [vmem:[#allocation2 + $0x170] sm:$0xff]
        %v2106 = vld [vmem:[#allocation2 + $0x178] sm:$0xff]
        %v2107 = vld [vmem:[#allocation2 + $0x180] sm:$0xff]
        %v2108 = vld [vmem:[#allocation2 + $0x188] sm:$0xff]
        %v2109 = vld [vmem:[#allocation2 + $0x190] sm:$0xff]
        %v2110 = vld [vmem:[#allocation2 + $0x198] sm:$0xff]
        %v2111 = vld [vmem:[#allocation2 + $0x1a0] sm:$0xff]
        %v2112 = vld [vmem:[#allocation2 + $0x1a8] sm:$0xff]
        %v2113 = vld [vmem:[#allocation2 + $0x1b0] sm:$0xff]
        %v2114 = vld [vmem:[#allocation2 + $0x1b8] sm:$0xff]
        %v2115 = vld [vmem:[#allocation2 + $0x1c0] sm:$0xff]
        %v2116 = vld [vmem:[#allocation2 + $0x1c8] sm:$0xff]
        %v2117 = vld [vmem:[#allocation2 + $0x1d0] sm:$0xff]
        %v2118 = vld [vmem:[#allocation2 + $0x1d8] sm:$0xff]
        %v2119 = vld [vmem:[#allocation2 + $0x1e0] sm:$0xff]
        %v2120 = vld [vmem:[#allocation2 + $0x1e8] sm:$0xff]
        %v2121 = vld [vmem:[#allocation2 + $0x1f0] sm:$0xff]
        %v2122 = vld [vmem:[#allocation2 + $0x1f8] sm:$0xff]
        %v2123 = vld [vmem:[#allocation2 + $0x200] sm:$0xff]
        %v2124 = vld [vmem:[#allocation2 + $0x208] sm:$0xff]
        %v2125 = vld [vmem:[#allocation2 + $0x210] sm:$0xff]
        %v2126 = vld [vmem:[#allocation2 + $0x218] sm:$0xff]
        %v2127 = vld [vmem:[#allocation2 + $0x220] sm:$0xff]
        %v2128 = vld [vmem:[#allocation2 + $0x228] sm:$0xff]
        %v2129 = vld [vmem:[#allocation2 + $0x230] sm:$0xff]
        %v2130 = vld [vmem:[#allocation2 + $0x238] sm:$0xff]
        %v2131 = vld [vmem:[#allocation2 + $0x240] sm:$0xff]
        %v2132 = vld [vmem:[#allocation2 + $0x248] sm:$0xff]
        %v2133 = vld [vmem:[#allocation2 + $0x250] sm:$0xff]
        %v2134 = vpack.c.bf16 %v2063, %v2062
        %v2135 = vpack.c.bf16 %v2065, %v2064
        %v2136 = vpack.c.bf16 %v2067, %v2066
        %v2137 = vpack.c.bf16 %v2069, %v2068
        %v2138 = vpack.c.bf16 %v2071, %v2070
        %v2139 = vpack.c.bf16 %v2073, %v2072
        %v2140 = vpack.c.bf16 %v2075, %v2074
        %v2141 = vpack.c.bf16 %v2077, %v2076
        %v2142 = vpack.c.bf16 %v2079, %v2078
        %v2143 = vpack.c.bf16 %v2081, %v2080
        %v2144 = vpack.c.bf16 %v2083, %v2082
        %v2145 = vpack.c.bf16 %v2085, %v2084
        %v2146 = vpack.c.bf16 %v2087, %v2086
        %v2147 = vpack.c.bf16 %v2089, %v2088
        %v2148 = vpack.c.bf16 %v2091, %v2090
        %v2149 = vpack.c.bf16 %v2093, %v2092
        %v2150 = vpack.c.bf16 %v2095, %v2094
        %v2151 = vpack.c.bf16 %v2097, %v2096
        %v2152 = vpack.c.bf16 %v2099, %v2098
        %v2153 = vpack.c.bf16 %v2101, %v2100
        %v2154 = vpack.c.bf16 %v2103, %v2102
        %v2155 = vpack.c.bf16 %v2105, %v2104
        %v2156 = vpack.c.bf16 %v2107, %v2106
        %v2157 = vpack.c.bf16 %v2109, %v2108
        %v2158 = vpack.c.bf16 %v2111, %v2110
        %v2159 = vpack.c.bf16 %v2113, %v2112
        %v2160 = vpack.c.bf16 %v2115, %v2114
        %v2161 = vpack.c.bf16 %v2117, %v2116
        %v2162 = vpack.c.bf16 %v2119, %v2118
        %v2163 = vpack.c.bf16 %v2121, %v2120
        %v2164 = vpack.c.bf16 %v2123, %v2122
        %v2165 = vpack.c.bf16 %v2125, %v2124
        %v2166 = vpack.c.bf16 %v2127, %v2126
        %v2167 = vpack.c.bf16 %v2129, %v2128
        %v2168 = vpack.c.bf16 %v2131, %v2130
        %v2169 = vpack.c.bf16 %v2133, %v2132
        %v2170 = vld [vmem:[#allocation3] sm:$0xff]
        %v2171 = vld [vmem:[#allocation3 + $0x8] sm:$0xff]
        %v2172 = vld [vmem:[#allocation3 + $0x10] sm:$0xff]
        %v2173 = vld [vmem:[#allocation3 + $0x18] sm:$0xff]
        %v2174 = vld [vmem:[#allocation3 + $0x20] sm:$0xff]
        %v2175 = vld [vmem:[#allocation3 + $0x28] sm:$0xff]
        %v2176 = vld [vmem:[#allocation3 + $0x30] sm:$0xff]
        %v2177 = vld [vmem:[#allocation3 + $0x38] sm:$0xff]
        %v2178 = vld [vmem:[#allocation3 + $0x40] sm:$0xff]
        %v2179 = vld [vmem:[#allocation3 + $0x48] sm:$0xff]
        %v2180 = vld [vmem:[#allocation3 + $0x50] sm:$0xff]
        %v2181 = vld [vmem:[#allocation3 + $0x58] sm:$0xff]
        %v2182 = vld [vmem:[#allocation3 + $0x60] sm:$0xff]
        %v2183 = vld [vmem:[#allocation3 + $0x68] sm:$0xff]
        %v2184 = vld [vmem:[#allocation3 + $0x70] sm:$0xff]
        %v2185 = vld [vmem:[#allocation3 + $0x78] sm:$0xff]
        %v2186 = vld [vmem:[#allocation3 + $0x80] sm:$0xff]
        %v2187 = vld [vmem:[#allocation3 + $0x88] sm:$0xff]
        %v2188 = vld [vmem:[#allocation3 + $0x90] sm:$0xff]
        %v2189 = vld [vmem:[#allocation3 + $0x98] sm:$0xff]
        %v2190 = vld [vmem:[#allocation3 + $0xa0] sm:$0xff]
        %v2191 = vld [vmem:[#allocation3 + $0xa8] sm:$0xff]
        %v2192 = vld [vmem:[#allocation3 + $0xb0] sm:$0xff]
        %v2193 = vld [vmem:[#allocation3 + $0xb8] sm:$0xff]
        %v2194 = vld [vmem:[#allocation3 + $0xc0] sm:$0xff]
        %v2195 = vld [vmem:[#allocation3 + $0xc8] sm:$0xff]
        %v2196 = vld [vmem:[#allocation3 + $0xd0] sm:$0xff]
        %v2197 = vld [vmem:[#allocation3 + $0xd8] sm:$0xff]
        %v2198 = vld [vmem:[#allocation3 + $0xe0] sm:$0xff]
        %v2199 = vld [vmem:[#allocation3 + $0xe8] sm:$0xff]
        %v2200 = vld [vmem:[#allocation3 + $0xf0] sm:$0xff]
        %v2201 = vld [vmem:[#allocation3 + $0xf8] sm:$0xff]
        %v2202 = vld [vmem:[#allocation3 + $0x100] sm:$0xff]
        %v2203 = vld [vmem:[#allocation3 + $0x108] sm:$0xff]
        %v2204 = vld [vmem:[#allocation3 + $0x110] sm:$0xff]
        %v2205 = vld [vmem:[#allocation3 + $0x118] sm:$0xff]
        %v2206 = vld [vmem:[#allocation3 + $0x120] sm:$0xff]
        %v2207 = vld [vmem:[#allocation3 + $0x128] sm:$0xff]
        %v2208 = vld [vmem:[#allocation3 + $0x130] sm:$0xff]
        %v2209 = vld [vmem:[#allocation3 + $0x138] sm:$0xff]
        %v2210 = vld [vmem:[#allocation3 + $0x140] sm:$0xff]
        %v2211 = vld [vmem:[#allocation3 + $0x148] sm:$0xff]
        %v2212 = vld [vmem:[#allocation3 + $0x150] sm:$0xff]
        %v2213 = vld [vmem:[#allocation3 + $0x158] sm:$0xff]
        %v2214 = vld [vmem:[#allocation3 + $0x160] sm:$0xff]
        %v2215 = vld [vmem:[#allocation3 + $0x168] sm:$0xff]
        %v2216 = vld [vmem:[#allocation3 + $0x170] sm:$0xff]
        %v2217 = vld [vmem:[#allocation3 + $0x178] sm:$0xff]
        %v2218 = vld [vmem:[#allocation3 + $0x180] sm:$0xff]
        %v2219 = vld [vmem:[#allocation3 + $0x188] sm:$0xff]
        %v2220 = vld [vmem:[#allocation3 + $0x190] sm:$0xff]
        %v2221 = vld [vmem:[#allocation3 + $0x198] sm:$0xff]
        %v2222 = vld [vmem:[#allocation3 + $0x1a0] sm:$0xff]
        %v2223 = vld [vmem:[#allocation3 + $0x1a8] sm:$0xff]
        %v2224 = vld [vmem:[#allocation3 + $0x1b0] sm:$0xff]
        %v2225 = vld [vmem:[#allocation3 + $0x1b8] sm:$0xff]
        %v2226 = vld [vmem:[#allocation3 + $0x1c0] sm:$0xff]
        %v2227 = vld [vmem:[#allocation3 + $0x1c8] sm:$0xff]
        %v2228 = vld [vmem:[#allocation3 + $0x1d0] sm:$0xff]
        %v2229 = vld [vmem:[#allocation3 + $0x1d8] sm:$0xff]
        %v2230 = vld [vmem:[#allocation3 + $0x1e0] sm:$0xff]
        %v2231 = vld [vmem:[#allocation3 + $0x1e8] sm:$0xff]
        %v2232 = vld [vmem:[#allocation3 + $0x1f0] sm:$0xff]
        %v2233 = vld [vmem:[#allocation3 + $0x1f8] sm:$0xff]
        %v2234 = vld [vmem:[#allocation3 + $0x200] sm:$0xff]
        %v2235 = vld [vmem:[#allocation3 + $0x208] sm:$0xff]
        %v2236 = vld [vmem:[#allocation3 + $0x210] sm:$0xff]
        %v2237 = vld [vmem:[#allocation3 + $0x218] sm:$0xff]
        %v2238 = vld [vmem:[#allocation3 + $0x220] sm:$0xff]
        %v2239 = vld [vmem:[#allocation3 + $0x228] sm:$0xff]
        %v2240 = vld [vmem:[#allocation3 + $0x230] sm:$0xff]
        %v2241 = vld [vmem:[#allocation3 + $0x238] sm:$0xff]
        %s2242 = scalar_lea.vmem %s3, 48
        %v2243 = vld [vmem:[%s2242] sm:$0xf]
        %v2244 = vld [vmem:[%s2242 + $0x4] sm:$0xf]
        %v2245 = vld [vmem:[%s2242 + $0x8] sm:$0xf]
        %v2246 = vld [vmem:[%s2242 + $0xc] sm:$0xf]
        %v2247 = vld [vmem:[%s2242 + $0x10] sm:$0xf]
        %v2248 = vld [vmem:[%s2242 + $0x14] sm:$0xf]
        %v2249 = vld [vmem:[%s2242 + $0x18] sm:$0xf]
        %v2250 = vld [vmem:[%s2242 + $0x1c] sm:$0xf]
        %v2251 = vld [vmem:[%s2242 + $0x20] sm:$0xf]
        %v2252 = vld [vmem:[%s2242 + $0x24] sm:$0xf]
        %v2253 = vld [vmem:[%s2242 + $0x28] sm:$0xf]
        %v2254 = vld [vmem:[%s2242 + $0x2c] sm:$0xf]
        %v2267 = vunpack.c.l.b16 %v2243
        %v2268 = vunpack.c.l.b16 %v2244
        %v2269 = vunpack.c.l.b16 %v2245
        %v2270 = vunpack.c.l.b16 %v2246
        %v2271 = vunpack.c.l.b16 %v2247
        %v2272 = vunpack.c.l.b16 %v2248
        %v2273 = vunpack.c.l.b16 %v2249
        %v2274 = vunpack.c.l.b16 %v2250
        %v2275 = vunpack.c.l.b16 %v2251
        %v2276 = vunpack.c.l.b16 %v2252
        %v2277 = vunpack.c.l.b16 %v2253
        %v2278 = vunpack.c.l.b16 %v2254
        %v2279 = vpack.c.b16 %v2268, %v2267
        %v2280 = vpack.c.b16 %v2270, %v2269
        %v2281 = vpack.c.b16 %v2272, %v2271
        %v2282 = vpack.c.b16 %v2274, %v2273
        %v2283 = vpack.c.b16 %v2276, %v2275
        %v2284 = vpack.c.b16 %v2278, %v2277
        %v2292 = vsel %vm1102, %v2134, 0
        %v2295 = vsel %vm1102, %v2135, 0
        %v2298 = vsel %vm1102, %v2136, 0
        %v2301 = vsel %vm1102, %v2137, 0
        %v2304 = vsel %vm1102, %v2138, 0
        %v2307 = vsel %vm1102, %v2139, 0
        %v2310 = vsel %vm1102, %v2140, 0
        %v2313 = vsel %vm1102, %v2141, 0
        %v2316 = vsel %vm1102, %v2142, 0
        %v2319 = vsel %vm1102, %v2143, 0
        %v2322 = vsel %vm1102, %v2144, 0
        %v2325 = vsel %vm1102, %v2145, 0
        %v2328 = vsel %vm1102, %v2146, 0
        %v2331 = vsel %vm1102, %v2147, 0
        %v2334 = vsel %vm1102, %v2148, 0
        %v2337 = vsel %vm1102, %v2149, 0
        %v2340 = vsel %vm1102, %v2150, 0
        %v2343 = vsel %vm1102, %v2151, 0
        %v2346 = vsel %vm1102, %v2152, 0
        %v2349 = vsel %vm1102, %v2153, 0
        %v2352 = vsel %vm1102, %v2154, 0
        %v2355 = vsel %vm1102, %v2155, 0
        %v2358 = vsel %vm1102, %v2156, 0
        %v2361 = vsel %vm1102, %v2157, 0
        %v2364 = vsel %vm1102, %v2158, 0
        %v2367 = vsel %vm1102, %v2159, 0
        %v2370 = vsel %vm1102, %v2160, 0
        %v2373 = vsel %vm1102, %v2161, 0
        %v2376 = vsel %vm1102, %v2162, 0
        %v2379 = vsel %vm1102, %v2163, 0
        %v2382 = vsel %vm1102, %v2164, 0
        %v2385 = vsel %vm1102, %v2165, 0
        %v2388 = vsel %vm1102, %v2166, 0
        %v2391 = vsel %vm1102, %v2167, 0
        %v2394 = vsel %vm1102, %v2168, 0
        %v2397 = vsel %vm1102, %v2169, 0
        %2399 = vmatprep.subr.bf16.mxu0 0
        %2400 = vmatpush1.bf16.msra.mxu0 0
        %2401 = vmatprep.subr.bf16.mxu0 0
        %2402 = vmatpush1.bf16.msra.mxu0 0
        %2403 = vmatprep.subr.bf16.mxu0 0
        %2404 = vmatpush1.bf16.msra.mxu0 %v2284
        %2405 = vmatprep.subr.bf16.mxu0 0
        %2406 = vmatpush1.bf16.msra.mxu0 %v2283
        %2407 = vmatprep.subr.bf16.mxu0 0
        %2408 = vmatpush1.bf16.msra.mxu0 %v2282
        %2409 = vmatprep.subr.bf16.mxu0 0
        %2410 = vmatpush1.bf16.msra.mxu0 %v2281
        %2411 = vmatprep.subr.bf16.mxu0 0
        %2412 = vmatpush1.bf16.msra.mxu0 %v2280
        %2413 = vmatprep.subr.bf16.mxu0 0
        %2414 = vmatpush1.bf16.msra.mxu0 %v2279
        %2415 = vmatprep.subr.bf16.mxu0 0
        %2416 = vmatpush2.bf16.msra.mxu0 0
        %2417 = vmatprep.subr.bf16.mxu0 0
        %2418 = vmatpush2.bf16.msra.mxu0 0
        %2419 = vmatprep.subr.bf16.mxu0 0
        %2420 = vmatpush2.bf16.msra.mxu0 0
        %2421 = vmatprep.subr.bf16.mxu0 0
        %2422 = vmatpush2.bf16.msra.mxu0 0
        %2423 = vmatprep.subr.bf16.mxu0 0
        %2424 = vmatpush2.bf16.msra.mxu0 0
        %2425 = vmatprep.subr.bf16.mxu0 0
        %2426 = vmatpush2.bf16.msra.mxu0 0
        %2427 = vmatprep.subr.bf16.mxu0 0
        %2428 = vmatpush2.bf16.msra.mxu0 0
        %2429 = vmatprep.subr.bf16.mxu0 0
        %2430 = vmatpush2.bf16.msra.mxu0 0
        %2431 = vmatprep.mubr.bf16.mxu0 0
        %2432 = vmatmul.mubr.bf16.gmra.mxu0 %v2292
        %v2433 = vpop.f32.mrf.mxu0
        %v2434 = vadd.f32 0.0, %v2433
        %v2435 = vpop.f32.mrf.mxu0
        %v2436 = vpop.f32.mrf.mxu0
        %v2437 = vadd.f32 0.0, %v2436
        %v2438 = vpop.f32.mrf.mxu0
        %2439 = vmatprep.mubr.bf16.mxu0 0
        %2440 = vmatmul.mubr.bf16.gmra.mxu0 %v2295
        %v2441 = vpop.f32.mrf.mxu0
        %v2442 = vadd.f32 0.0, %v2441
        %v2443 = vpop.f32.mrf.mxu0
        %v2444 = vpop.f32.mrf.mxu0
        %v2445 = vadd.f32 0.0, %v2444
        %v2446 = vpop.f32.mrf.mxu0
        %2447 = vmatprep.mubr.bf16.mxu0 0
        %2448 = vmatmul.mubr.bf16.gmra.mxu0 %v2298
        %v2449 = vpop.f32.mrf.mxu0
        %v2450 = vadd.f32 0.0, %v2449
        %v2451 = vpop.f32.mrf.mxu0
        %v2452 = vpop.f32.mrf.mxu0
        %v2453 = vadd.f32 0.0, %v2452
        %v2454 = vpop.f32.mrf.mxu0
        %2455 = vmatprep.mubr.bf16.mxu0 0
        %2456 = vmatmul.mubr.bf16.gmra.mxu0 %v2301
        %v2457 = vpop.f32.mrf.mxu0
        %v2458 = vadd.f32 0.0, %v2457
        %v2459 = vpop.f32.mrf.mxu0
        %v2460 = vpop.f32.mrf.mxu0
        %v2461 = vadd.f32 0.0, %v2460
        %v2462 = vpop.f32.mrf.mxu0
        %2463 = vmatprep.mubr.bf16.mxu0 0
        %2464 = vmatmul.mubr.bf16.gmra.mxu0 %v2304
        %v2465 = vpop.f32.mrf.mxu0
        %v2466 = vadd.f32 0.0, %v2465
        %v2467 = vpop.f32.mrf.mxu0
        %v2468 = vpop.f32.mrf.mxu0
        %v2469 = vadd.f32 0.0, %v2468
        %v2470 = vpop.f32.mrf.mxu0
        %2471 = vmatprep.mubr.bf16.mxu0 0
        %2472 = vmatmul.mubr.bf16.gmra.mxu0 %v2307
        %v2473 = vpop.f32.mrf.mxu0
        %v2474 = vadd.f32 0.0, %v2473
        %v2475 = vpop.f32.mrf.mxu0
        %v2476 = vpop.f32.mrf.mxu0
        %v2477 = vadd.f32 0.0, %v2476
        %v2478 = vpop.f32.mrf.mxu0
        %2479 = vmatprep.mubr.bf16.mxu0 0
        %2480 = vmatmul.mubr.bf16.gmra.mxu0 %v2310
        %v2481 = vpop.f32.mrf.mxu0
        %v2482 = vadd.f32 0.0, %v2481
        %v2483 = vpop.f32.mrf.mxu0
        %v2484 = vpop.f32.mrf.mxu0
        %v2485 = vadd.f32 0.0, %v2484
        %v2486 = vpop.f32.mrf.mxu0
        %2487 = vmatprep.mubr.bf16.mxu0 0
        %2488 = vmatmul.mubr.bf16.gmra.mxu0 %v2313
        %v2489 = vpop.f32.mrf.mxu0
        %v2490 = vadd.f32 0.0, %v2489
        %v2491 = vpop.f32.mrf.mxu0
        %v2492 = vpop.f32.mrf.mxu0
        %v2493 = vadd.f32 0.0, %v2492
        %v2494 = vpop.f32.mrf.mxu0
        %2495 = vmatprep.mubr.bf16.mxu0 0
        %2496 = vmatmul.mubr.bf16.gmra.mxu0 %v2316
        %v2497 = vpop.f32.mrf.mxu0
        %v2498 = vadd.f32 0.0, %v2497
        %v2499 = vpop.f32.mrf.mxu0
        %v2500 = vpop.f32.mrf.mxu0
        %v2501 = vadd.f32 0.0, %v2500
        %v2502 = vpop.f32.mrf.mxu0
        %2503 = vmatprep.mubr.bf16.mxu0 0
        %2504 = vmatmul.mubr.bf16.gmra.mxu0 %v2319
        %v2505 = vpop.f32.mrf.mxu0
        %v2506 = vadd.f32 0.0, %v2505
        %v2507 = vpop.f32.mrf.mxu0
        %v2508 = vpop.f32.mrf.mxu0
        %v2509 = vadd.f32 0.0, %v2508
        %v2510 = vpop.f32.mrf.mxu0
        %2511 = vmatprep.mubr.bf16.mxu0 0
        %2512 = vmatmul.mubr.bf16.gmra.mxu0 %v2322
        %v2513 = vpop.f32.mrf.mxu0
        %v2514 = vadd.f32 0.0, %v2513
        %v2515 = vpop.f32.mrf.mxu0
        %v2516 = vpop.f32.mrf.mxu0
        %v2517 = vadd.f32 0.0, %v2516
        %v2518 = vpop.f32.mrf.mxu0
        %2519 = vmatprep.mubr.bf16.mxu0 0
        %2520 = vmatmul.mubr.bf16.gmra.mxu0 %v2325
        %v2521 = vpop.f32.mrf.mxu0
        %v2522 = vadd.f32 0.0, %v2521
        %v2523 = vpop.f32.mrf.mxu0
        %v2524 = vpop.f32.mrf.mxu0
        %v2525 = vadd.f32 0.0, %v2524
        %v2526 = vpop.f32.mrf.mxu0
        %2527 = vmatprep.mubr.bf16.mxu0 0
        %2528 = vmatmul.mubr.bf16.gmra.mxu0 %v2328
        %v2529 = vpop.f32.mrf.mxu0
        %v2530 = vadd.f32 0.0, %v2529
        %v2531 = vpop.f32.mrf.mxu0
        %v2532 = vpop.f32.mrf.mxu0
        %v2533 = vadd.f32 0.0, %v2532
        %v2534 = vpop.f32.mrf.mxu0
        %2535 = vmatprep.mubr.bf16.mxu0 0
        %2536 = vmatmul.mubr.bf16.gmra.mxu0 %v2331
        %v2537 = vpop.f32.mrf.mxu0
        %v2538 = vadd.f32 0.0, %v2537
        %v2539 = vpop.f32.mrf.mxu0
        %v2540 = vpop.f32.mrf.mxu0
        %v2541 = vadd.f32 0.0, %v2540
        %v2542 = vpop.f32.mrf.mxu0
        %2543 = vmatprep.mubr.bf16.mxu0 0
        %2544 = vmatmul.mubr.bf16.gmra.mxu0 %v2334
        %v2545 = vpop.f32.mrf.mxu0
        %v2546 = vadd.f32 0.0, %v2545
        %v2547 = vpop.f32.mrf.mxu0
        %v2548 = vpop.f32.mrf.mxu0
        %v2549 = vadd.f32 0.0, %v2548
        %v2550 = vpop.f32.mrf.mxu0
        %2551 = vmatprep.mubr.bf16.mxu0 0
        %2552 = vmatmul.mubr.bf16.gmra.mxu0 %v2337
        %v2553 = vpop.f32.mrf.mxu0
        %v2554 = vadd.f32 0.0, %v2553
        %v2555 = vpop.f32.mrf.mxu0
        %v2556 = vpop.f32.mrf.mxu0
        %v2557 = vadd.f32 0.0, %v2556
        %v2558 = vpop.f32.mrf.mxu0
        %2559 = vmatprep.mubr.bf16.mxu0 0
        %2560 = vmatmul.mubr.bf16.gmra.mxu0 %v2340
        %v2561 = vpop.f32.mrf.mxu0
        %v2562 = vadd.f32 0.0, %v2561
        %v2563 = vpop.f32.mrf.mxu0
        %v2564 = vpop.f32.mrf.mxu0
        %v2565 = vadd.f32 0.0, %v2564
        %v2566 = vpop.f32.mrf.mxu0
        %2567 = vmatprep.mubr.bf16.mxu0 0
        %2568 = vmatmul.mubr.bf16.gmra.mxu0 %v2343
        %v2569 = vpop.f32.mrf.mxu0
        %v2570 = vadd.f32 0.0, %v2569
        %v2571 = vpop.f32.mrf.mxu0
        %v2572 = vpop.f32.mrf.mxu0
        %v2573 = vadd.f32 0.0, %v2572
        %v2574 = vpop.f32.mrf.mxu0
        %2575 = vmatprep.mubr.bf16.mxu0 0
        %2576 = vmatmul.mubr.bf16.gmra.mxu0 %v2346
        %v2577 = vpop.f32.mrf.mxu0
        %v2578 = vadd.f32 0.0, %v2577
        %v2579 = vpop.f32.mrf.mxu0
        %v2580 = vpop.f32.mrf.mxu0
        %v2581 = vadd.f32 0.0, %v2580
        %v2582 = vpop.f32.mrf.mxu0
        %2583 = vmatprep.mubr.bf16.mxu0 0
        %2584 = vmatmul.mubr.bf16.gmra.mxu0 %v2349
        %v2585 = vpop.f32.mrf.mxu0
        %v2586 = vadd.f32 0.0, %v2585
        %v2587 = vpop.f32.mrf.mxu0
        %v2588 = vpop.f32.mrf.mxu0
        %v2589 = vadd.f32 0.0, %v2588
        %v2590 = vpop.f32.mrf.mxu0
        %2591 = vmatprep.mubr.bf16.mxu0 0
        %2592 = vmatmul.mubr.bf16.gmra.mxu0 %v2352
        %v2593 = vpop.f32.mrf.mxu0
        %v2594 = vadd.f32 0.0, %v2593
        %v2595 = vpop.f32.mrf.mxu0
        %v2596 = vpop.f32.mrf.mxu0
        %v2597 = vadd.f32 0.0, %v2596
        %v2598 = vpop.f32.mrf.mxu0
        %2599 = vmatprep.mubr.bf16.mxu0 0
        %2600 = vmatmul.mubr.bf16.gmra.mxu0 %v2355
        %v2601 = vpop.f32.mrf.mxu0
        %v2602 = vadd.f32 0.0, %v2601
        %v2603 = vpop.f32.mrf.mxu0
        %v2604 = vpop.f32.mrf.mxu0
        %v2605 = vadd.f32 0.0, %v2604
        %v2606 = vpop.f32.mrf.mxu0
        %2607 = vmatprep.mubr.bf16.mxu0 0
        %2608 = vmatmul.mubr.bf16.gmra.mxu0 %v2358
        %v2609 = vpop.f32.mrf.mxu0
        %v2610 = vadd.f32 0.0, %v2609
        %v2611 = vpop.f32.mrf.mxu0
        %v2612 = vpop.f32.mrf.mxu0
        %v2613 = vadd.f32 0.0, %v2612
        %v2614 = vpop.f32.mrf.mxu0
        %2615 = vmatprep.mubr.bf16.mxu0 0
        %2616 = vmatmul.mubr.bf16.gmra.mxu0 %v2361
        %v2617 = vpop.f32.mrf.mxu0
        %v2618 = vadd.f32 0.0, %v2617
        %v2619 = vpop.f32.mrf.mxu0
        %v2620 = vpop.f32.mrf.mxu0
        %v2621 = vadd.f32 0.0, %v2620
        %v2622 = vpop.f32.mrf.mxu0
        %2623 = vmatprep.mubr.bf16.mxu0 0
        %2624 = vmatmul.mubr.bf16.gmra.mxu0 %v2364
        %v2625 = vpop.f32.mrf.mxu0
        %v2626 = vadd.f32 0.0, %v2625
        %v2627 = vpop.f32.mrf.mxu0
        %v2628 = vpop.f32.mrf.mxu0
        %v2629 = vadd.f32 0.0, %v2628
        %v2630 = vpop.f32.mrf.mxu0
        %2631 = vmatprep.mubr.bf16.mxu0 0
        %2632 = vmatmul.mubr.bf16.gmra.mxu0 %v2367
        %v2633 = vpop.f32.mrf.mxu0
        %v2634 = vadd.f32 0.0, %v2633
        %v2635 = vpop.f32.mrf.mxu0
        %v2636 = vpop.f32.mrf.mxu0
        %v2637 = vadd.f32 0.0, %v2636
        %v2638 = vpop.f32.mrf.mxu0
        %2639 = vmatprep.mubr.bf16.mxu0 0
        %2640 = vmatmul.mubr.bf16.gmra.mxu0 %v2370
        %v2641 = vpop.f32.mrf.mxu0
        %v2642 = vadd.f32 0.0, %v2641
        %v2643 = vpop.f32.mrf.mxu0
        %v2644 = vpop.f32.mrf.mxu0
        %v2645 = vadd.f32 0.0, %v2644
        %v2646 = vpop.f32.mrf.mxu0
        %2647 = vmatprep.mubr.bf16.mxu0 0
        %2648 = vmatmul.mubr.bf16.gmra.mxu0 %v2373
        %v2649 = vpop.f32.mrf.mxu0
        %v2650 = vadd.f32 0.0, %v2649
        %v2651 = vpop.f32.mrf.mxu0
        %v2652 = vpop.f32.mrf.mxu0
        %v2653 = vadd.f32 0.0, %v2652
        %v2654 = vpop.f32.mrf.mxu0
        %2655 = vmatprep.mubr.bf16.mxu0 0
        %2656 = vmatmul.mubr.bf16.gmra.mxu0 %v2376
        %v2657 = vpop.f32.mrf.mxu0
        %v2658 = vadd.f32 0.0, %v2657
        %v2659 = vpop.f32.mrf.mxu0
        %v2660 = vpop.f32.mrf.mxu0
        %v2661 = vadd.f32 0.0, %v2660
        %v2662 = vpop.f32.mrf.mxu0
        %2663 = vmatprep.mubr.bf16.mxu0 0
        %2664 = vmatmul.mubr.bf16.gmra.mxu0 %v2379
        %v2665 = vpop.f32.mrf.mxu0
        %v2666 = vadd.f32 0.0, %v2665
        %v2667 = vpop.f32.mrf.mxu0
        %v2668 = vpop.f32.mrf.mxu0
        %v2669 = vadd.f32 0.0, %v2668
        %v2670 = vpop.f32.mrf.mxu0
        %2671 = vmatprep.mubr.bf16.mxu0 0
        %2672 = vmatmul.mubr.bf16.gmra.mxu0 %v2382
        %v2673 = vpop.f32.mrf.mxu0
        %v2674 = vadd.f32 0.0, %v2673
        %v2675 = vpop.f32.mrf.mxu0
        %v2676 = vpop.f32.mrf.mxu0
        %v2677 = vadd.f32 0.0, %v2676
        %v2678 = vpop.f32.mrf.mxu0
        %2679 = vmatprep.mubr.bf16.mxu0 0
        %2680 = vmatmul.mubr.bf16.gmra.mxu0 %v2385
        %v2681 = vpop.f32.mrf.mxu0
        %v2682 = vadd.f32 0.0, %v2681
        %v2683 = vpop.f32.mrf.mxu0
        %v2684 = vpop.f32.mrf.mxu0
        %v2685 = vadd.f32 0.0, %v2684
        %v2686 = vpop.f32.mrf.mxu0
        %2687 = vmatprep.mubr.bf16.mxu0 0
        %2688 = vmatmul.mubr.bf16.gmra.mxu0 %v2388
        %v2689 = vpop.f32.mrf.mxu0
        %v2690 = vadd.f32 0.0, %v2689
        %v2691 = vpop.f32.mrf.mxu0
        %v2692 = vpop.f32.mrf.mxu0
        %v2693 = vadd.f32 0.0, %v2692
        %v2694 = vpop.f32.mrf.mxu0
        %2695 = vmatprep.mubr.bf16.mxu0 0
        %2696 = vmatmul.mubr.bf16.gmra.mxu0 %v2391
        %v2697 = vpop.f32.mrf.mxu0
        %v2698 = vadd.f32 0.0, %v2697
        %v2699 = vpop.f32.mrf.mxu0
        %v2700 = vpop.f32.mrf.mxu0
        %v2701 = vadd.f32 0.0, %v2700
        %v2702 = vpop.f32.mrf.mxu0
        %2703 = vmatprep.mubr.bf16.mxu0 0
        %2704 = vmatmul.mubr.bf16.gmra.mxu0 %v2394
        %v2705 = vpop.f32.mrf.mxu0
        %v2706 = vadd.f32 0.0, %v2705
        %v2707 = vpop.f32.mrf.mxu0
        %v2708 = vpop.f32.mrf.mxu0
        %v2709 = vadd.f32 0.0, %v2708
        %v2710 = vpop.f32.mrf.mxu0
        %2711 = vmatprep.mubr.bf16.mxu0 0
        %2712 = vmatmul.mubr.bf16.gmra.mxu0 %v2397
        %v2713 = vpop.f32.mrf.mxu0
        %v2714 = vadd.f32 0.0, %v2713
        %v2715 = vpop.f32.mrf.mxu0
        %v2716 = vpop.f32.mrf.mxu0
        %v2717 = vadd.f32 0.0, %v2716
        %v2718 = vpop.f32.mrf.mxu0
        %2719 = vdwg.mxu0
        %v2720 = vadd.f32 %v2170, %v2434
        %v2721 = vadd.f32 %v2171, %v2437
        %v2722 = vadd.f32 %v2172, %v2442
        %v2723 = vadd.f32 %v2173, %v2445
        %v2724 = vadd.f32 %v2174, %v2450
        %v2725 = vadd.f32 %v2175, %v2453
        %v2726 = vadd.f32 %v2176, %v2458
        %v2727 = vadd.f32 %v2177, %v2461
        %v2728 = vadd.f32 %v2178, %v2466
        %v2729 = vadd.f32 %v2179, %v2469
        %v2730 = vadd.f32 %v2180, %v2474
        %v2731 = vadd.f32 %v2181, %v2477
        %v2732 = vadd.f32 %v2182, %v2482
        %v2733 = vadd.f32 %v2183, %v2485
        %v2734 = vadd.f32 %v2184, %v2490
        %v2735 = vadd.f32 %v2185, %v2493
        %v2736 = vadd.f32 %v2186, %v2498
        %v2737 = vadd.f32 %v2187, %v2501
        %v2738 = vadd.f32 %v2188, %v2506
        %v2739 = vadd.f32 %v2189, %v2509
        %v2740 = vadd.f32 %v2190, %v2514
        %v2741 = vadd.f32 %v2191, %v2517
        %v2742 = vadd.f32 %v2192, %v2522
        %v2743 = vadd.f32 %v2193, %v2525
        %v2744 = vadd.f32 %v2194, %v2530
        %v2745 = vadd.f32 %v2195, %v2533
        %v2746 = vadd.f32 %v2196, %v2538
        %v2747 = vadd.f32 %v2197, %v2541
        %v2748 = vadd.f32 %v2198, %v2546
        %v2749 = vadd.f32 %v2199, %v2549
        %v2750 = vadd.f32 %v2200, %v2554
        %v2751 = vadd.f32 %v2201, %v2557
        %v2752 = vadd.f32 %v2202, %v2562
        %v2753 = vadd.f32 %v2203, %v2565
        %v2754 = vadd.f32 %v2204, %v2570
        %v2755 = vadd.f32 %v2205, %v2573
        %v2756 = vadd.f32 %v2206, %v2578
        %v2757 = vadd.f32 %v2207, %v2581
        %v2758 = vadd.f32 %v2208, %v2586
        %v2759 = vadd.f32 %v2209, %v2589
        %v2760 = vadd.f32 %v2210, %v2594
        %v2761 = vadd.f32 %v2211, %v2597
        %v2762 = vadd.f32 %v2212, %v2602
        %v2763 = vadd.f32 %v2213, %v2605
        %v2764 = vadd.f32 %v2214, %v2610
        %v2765 = vadd.f32 %v2215, %v2613
        %v2766 = vadd.f32 %v2216, %v2618
        %v2767 = vadd.f32 %v2217, %v2621
        %v2768 = vadd.f32 %v2218, %v2626
        %v2769 = vadd.f32 %v2219, %v2629
        %v2770 = vadd.f32 %v2220, %v2634
        %v2771 = vadd.f32 %v2221, %v2637
        %v2772 = vadd.f32 %v2222, %v2642
        %v2773 = vadd.f32 %v2223, %v2645
        %v2774 = vadd.f32 %v2224, %v2650
        %v2775 = vadd.f32 %v2225, %v2653
        %v2776 = vadd.f32 %v2226, %v2658
        %v2777 = vadd.f32 %v2227, %v2661
        %v2778 = vadd.f32 %v2228, %v2666
        %v2779 = vadd.f32 %v2229, %v2669
        %v2780 = vadd.f32 %v2230, %v2674
        %v2781 = vadd.f32 %v2231, %v2677
        %v2782 = vadd.f32 %v2232, %v2682
        %v2783 = vadd.f32 %v2233, %v2685
        %v2784 = vadd.f32 %v2234, %v2690
        %v2785 = vadd.f32 %v2235, %v2693
        %v2786 = vadd.f32 %v2236, %v2698
        %v2787 = vadd.f32 %v2237, %v2701
        %v2788 = vadd.f32 %v2238, %v2706
        %v2789 = vadd.f32 %v2239, %v2709
        %v2790 = vadd.f32 %v2240, %v2714
        %v2791 = vadd.f32 %v2241, %v2717
        %2792 = vst.msk [vmem:[#allocation3] sm:$0xff] %vm1188, %v2720
        %2793 = vst.msk [vmem:[#allocation3 + $0x8] sm:$0xff] %vm1188, %v2721
        %2794 = vst.msk [vmem:[#allocation3 + $0x10] sm:$0xff] %vm1188, %v2722
        %2795 = vst.msk [vmem:[#allocation3 + $0x18] sm:$0xff] %vm1188, %v2723
        %2796 = vst.msk [vmem:[#allocation3 + $0x20] sm:$0xff] %vm1188, %v2724
        %2797 = vst.msk [vmem:[#allocation3 + $0x28] sm:$0xff] %vm1188, %v2725
        %2798 = vst.msk [vmem:[#allocation3 + $0x30] sm:$0xff] %vm1188, %v2726
        %2799 = vst.msk [vmem:[#allocation3 + $0x38] sm:$0xff] %vm1188, %v2727
        %2800 = vst.msk [vmem:[#allocation3 + $0x40] sm:$0xff] %vm1188, %v2728
        %2801 = vst.msk [vmem:[#allocation3 + $0x48] sm:$0xff] %vm1188, %v2729
        %2802 = vst.msk [vmem:[#allocation3 + $0x50] sm:$0xff] %vm1188, %v2730
        %2803 = vst.msk [vmem:[#allocation3 + $0x58] sm:$0xff] %vm1188, %v2731
        %2804 = vst.msk [vmem:[#allocation3 + $0x60] sm:$0xff] %vm1188, %v2732
        %2805 = vst.msk [vmem:[#allocation3 + $0x68] sm:$0xff] %vm1188, %v2733
        %2806 = vst.msk [vmem:[#allocation3 + $0x70] sm:$0xff] %vm1188, %v2734
        %2807 = vst.msk [vmem:[#allocation3 + $0x78] sm:$0xff] %vm1188, %v2735
        %2808 = vst.msk [vmem:[#allocation3 + $0x80] sm:$0xff] %vm1188, %v2736
        %2809 = vst.msk [vmem:[#allocation3 + $0x88] sm:$0xff] %vm1188, %v2737
        %2810 = vst.msk [vmem:[#allocation3 + $0x90] sm:$0xff] %vm1188, %v2738
        %2811 = vst.msk [vmem:[#allocation3 + $0x98] sm:$0xff] %vm1188, %v2739
        %2812 = vst.msk [vmem:[#allocation3 + $0xa0] sm:$0xff] %vm1188, %v2740
        %2813 = vst.msk [vmem:[#allocation3 + $0xa8] sm:$0xff] %vm1188, %v2741
        %2814 = vst.msk [vmem:[#allocation3 + $0xb0] sm:$0xff] %vm1188, %v2742
        %2815 = vst.msk [vmem:[#allocation3 + $0xb8] sm:$0xff] %vm1188, %v2743
        %2816 = vst.msk [vmem:[#allocation3 + $0xc0] sm:$0xff] %vm1188, %v2744
        %2817 = vst.msk [vmem:[#allocation3 + $0xc8] sm:$0xff] %vm1188, %v2745
        %2818 = vst.msk [vmem:[#allocation3 + $0xd0] sm:$0xff] %vm1188, %v2746
        %2819 = vst.msk [vmem:[#allocation3 + $0xd8] sm:$0xff] %vm1188, %v2747
        %2820 = vst.msk [vmem:[#allocation3 + $0xe0] sm:$0xff] %vm1188, %v2748
        %2821 = vst.msk [vmem:[#allocation3 + $0xe8] sm:$0xff] %vm1188, %v2749
        %2822 = vst.msk [vmem:[#allocation3 + $0xf0] sm:$0xff] %vm1188, %v2750
        %2823 = vst.msk [vmem:[#allocation3 + $0xf8] sm:$0xff] %vm1188, %v2751
        %2824 = vst.msk [vmem:[#allocation3 + $0x100] sm:$0xff] %vm1188, %v2752
        %2825 = vst.msk [vmem:[#allocation3 + $0x108] sm:$0xff] %vm1188, %v2753
        %2826 = vst.msk [vmem:[#allocation3 + $0x110] sm:$0xff] %vm1188, %v2754
        %2827 = vst.msk [vmem:[#allocation3 + $0x118] sm:$0xff] %vm1188, %v2755
        %2828 = vst.msk [vmem:[#allocation3 + $0x120] sm:$0xff] %vm1188, %v2756
        %2829 = vst.msk [vmem:[#allocation3 + $0x128] sm:$0xff] %vm1188, %v2757
        %2830 = vst.msk [vmem:[#allocation3 + $0x130] sm:$0xff] %vm1188, %v2758
        %2831 = vst.msk [vmem:[#allocation3 + $0x138] sm:$0xff] %vm1188, %v2759
        %2832 = vst.msk [vmem:[#allocation3 + $0x140] sm:$0xff] %vm1188, %v2760
        %2833 = vst.msk [vmem:[#allocation3 + $0x148] sm:$0xff] %vm1188, %v2761
        %2834 = vst.msk [vmem:[#allocation3 + $0x150] sm:$0xff] %vm1188, %v2762
        %2835 = vst.msk [vmem:[#allocation3 + $0x158] sm:$0xff] %vm1188, %v2763
        %2836 = vst.msk [vmem:[#allocation3 + $0x160] sm:$0xff] %vm1188, %v2764
        %2837 = vst.msk [vmem:[#allocation3 + $0x168] sm:$0xff] %vm1188, %v2765
        %2838 = vst.msk [vmem:[#allocation3 + $0x170] sm:$0xff] %vm1188, %v2766
        %2839 = vst.msk [vmem:[#allocation3 + $0x178] sm:$0xff] %vm1188, %v2767
        %2840 = vst.msk [vmem:[#allocation3 + $0x180] sm:$0xff] %vm1188, %v2768
        %2841 = vst.msk [vmem:[#allocation3 + $0x188] sm:$0xff] %vm1188, %v2769
        %2842 = vst.msk [vmem:[#allocation3 + $0x190] sm:$0xff] %vm1188, %v2770
        %2843 = vst.msk [vmem:[#allocation3 + $0x198] sm:$0xff] %vm1188, %v2771
        %2844 = vst.msk [vmem:[#allocation3 + $0x1a0] sm:$0xff] %vm1188, %v2772
        %2845 = vst.msk [vmem:[#allocation3 + $0x1a8] sm:$0xff] %vm1188, %v2773
        %2846 = vst.msk [vmem:[#allocation3 + $0x1b0] sm:$0xff] %vm1188, %v2774
        %2847 = vst.msk [vmem:[#allocation3 + $0x1b8] sm:$0xff] %vm1188, %v2775
        %2848 = vst.msk [vmem:[#allocation3 + $0x1c0] sm:$0xff] %vm1188, %v2776
        %2849 = vst.msk [vmem:[#allocation3 + $0x1c8] sm:$0xff] %vm1188, %v2777
        %2850 = vst.msk [vmem:[#allocation3 + $0x1d0] sm:$0xff] %vm1188, %v2778
        %2851 = vst.msk [vmem:[#allocation3 + $0x1d8] sm:$0xff] %vm1188, %v2779
        %2852 = vst.msk [vmem:[#allocation3 + $0x1e0] sm:$0xff] %vm1188, %v2780
        %2853 = vst.msk [vmem:[#allocation3 + $0x1e8] sm:$0xff] %vm1188, %v2781
        %2854 = vst.msk [vmem:[#allocation3 + $0x1f0] sm:$0xff] %vm1188, %v2782
        %2855 = vst.msk [vmem:[#allocation3 + $0x1f8] sm:$0xff] %vm1188, %v2783
        %2856 = vst.msk [vmem:[#allocation3 + $0x200] sm:$0xff] %vm1188, %v2784
        %2857 = vst.msk [vmem:[#allocation3 + $0x208] sm:$0xff] %vm1188, %v2785
        %2858 = vst.msk [vmem:[#allocation3 + $0x210] sm:$0xff] %vm1188, %v2786
        %2859 = vst.msk [vmem:[#allocation3 + $0x218] sm:$0xff] %vm1188, %v2787
        %2860 = vst.msk [vmem:[#allocation3 + $0x220] sm:$0xff] %vm1188, %v2788
        %2861 = vst.msk [vmem:[#allocation3 + $0x228] sm:$0xff] %vm1188, %v2789
        %2862 = vst.msk [vmem:[#allocation3 + $0x230] sm:$0xff] %vm1188, %v2790
        %2863 = vst.msk [vmem:[#allocation3 + $0x238] sm:$0xff] %vm1188, %v2791
        %v2864 = vld [vmem:[#allocation2 + $0x30] sm:$0xff]
        %v2865 = vld [vmem:[#allocation2 + $0x38] sm:$0xff]
        %v2866 = vld [vmem:[#allocation2 + $0x40] sm:$0xff]
        %v2867 = vld [vmem:[#allocation2 + $0x48] sm:$0xff]
        %v2868 = vld [vmem:[#allocation2 + $0x50] sm:$0xff]
        %v2869 = vld [vmem:[#allocation2 + $0x58] sm:$0xff]
        %v2870 = vld [vmem:[#allocation2 + $0x60] sm:$0xff]
        %v2871 = vld [vmem:[#allocation2 + $0x68] sm:$0xff]
        %v2872 = vld [vmem:[#allocation2 + $0x70] sm:$0xff]
        %v2873 = vld [vmem:[#allocation2 + $0x78] sm:$0xff]
        %v2874 = vld [vmem:[#allocation2 + $0x80] sm:$0xff]
        %v2875 = vld [vmem:[#allocation2 + $0x88] sm:$0xff]
        %v2876 = vld [vmem:[#allocation2 + $0x90] sm:$0xff]
        %v2877 = vld [vmem:[#allocation2 + $0x98] sm:$0xff]
        %v2878 = vld [vmem:[#allocation2 + $0xa0] sm:$0xff]
        %v2879 = vld [vmem:[#allocation2 + $0xa8] sm:$0xff]
        %v2880 = vld [vmem:[#allocation2 + $0xb0] sm:$0xff]
        %v2881 = vld [vmem:[#allocation2 + $0xb8] sm:$0xff]
        %v2882 = vld [vmem:[#allocation2 + $0xc0] sm:$0xff]
        %v2883 = vld [vmem:[#allocation2 + $0xc8] sm:$0xff]
        %v2884 = vld [vmem:[#allocation2 + $0xd0] sm:$0xff]
        %v2885 = vld [vmem:[#allocation2 + $0xd8] sm:$0xff]
        %v2886 = vld [vmem:[#allocation2 + $0xe0] sm:$0xff]
        %v2887 = vld [vmem:[#allocation2 + $0xe8] sm:$0xff]
        %v2888 = vld [vmem:[#allocation2 + $0xf0] sm:$0xff]
        %v2889 = vld [vmem:[#allocation2 + $0xf8] sm:$0xff]
        %v2890 = vld [vmem:[#allocation2 + $0x100] sm:$0xff]
        %v2891 = vld [vmem:[#allocation2 + $0x108] sm:$0xff]
        %v2892 = vld [vmem:[#allocation2 + $0x110] sm:$0xff]
        %v2893 = vld [vmem:[#allocation2 + $0x118] sm:$0xff]
        %v2894 = vld [vmem:[#allocation2 + $0x120] sm:$0xff]
        %v2895 = vld [vmem:[#allocation2 + $0x128] sm:$0xff]
        %v2896 = vld [vmem:[#allocation2 + $0x130] sm:$0xff]
        %v2897 = vld [vmem:[#allocation2 + $0x138] sm:$0xff]
        %v2898 = vld [vmem:[#allocation2 + $0x140] sm:$0xff]
        %v2899 = vld [vmem:[#allocation2 + $0x148] sm:$0xff]
        %v2900 = vld [vmem:[#allocation2 + $0x150] sm:$0xff]
        %v2901 = vld [vmem:[#allocation2 + $0x158] sm:$0xff]
        %v2902 = vld [vmem:[#allocation2 + $0x160] sm:$0xff]
        %v2903 = vld [vmem:[#allocation2 + $0x168] sm:$0xff]
        %v2904 = vld [vmem:[#allocation2 + $0x170] sm:$0xff]
        %v2905 = vld [vmem:[#allocation2 + $0x178] sm:$0xff]
        %v2906 = vld [vmem:[#allocation2 + $0x180] sm:$0xff]
        %v2907 = vld [vmem:[#allocation2 + $0x188] sm:$0xff]
        %v2908 = vld [vmem:[#allocation2 + $0x190] sm:$0xff]
        %v2909 = vld [vmem:[#allocation2 + $0x198] sm:$0xff]
        %v2910 = vld [vmem:[#allocation2 + $0x1a0] sm:$0xff]
        %v2911 = vld [vmem:[#allocation2 + $0x1a8] sm:$0xff]
        %v2912 = vld [vmem:[#allocation2 + $0x1b0] sm:$0xff]
        %v2913 = vld [vmem:[#allocation2 + $0x1b8] sm:$0xff]
        %v2914 = vld [vmem:[#allocation2 + $0x1c0] sm:$0xff]
        %v2915 = vld [vmem:[#allocation2 + $0x1c8] sm:$0xff]
        %v2916 = vld [vmem:[#allocation2 + $0x1d0] sm:$0xff]
        %v2917 = vld [vmem:[#allocation2 + $0x1d8] sm:$0xff]
        %v2918 = vld [vmem:[#allocation2 + $0x1e0] sm:$0xff]
        %v2919 = vld [vmem:[#allocation2 + $0x1e8] sm:$0xff]
        %v2920 = vld [vmem:[#allocation2 + $0x1f0] sm:$0xff]
        %v2921 = vld [vmem:[#allocation2 + $0x1f8] sm:$0xff]
        %v2922 = vld [vmem:[#allocation2 + $0x200] sm:$0xff]
        %v2923 = vld [vmem:[#allocation2 + $0x208] sm:$0xff]
        %v2924 = vld [vmem:[#allocation2 + $0x210] sm:$0xff]
        %v2925 = vld [vmem:[#allocation2 + $0x218] sm:$0xff]
        %v2926 = vld [vmem:[#allocation2 + $0x220] sm:$0xff]
        %v2927 = vld [vmem:[#allocation2 + $0x228] sm:$0xff]
        %v2928 = vld [vmem:[#allocation2 + $0x230] sm:$0xff]
        %v2929 = vld [vmem:[#allocation2 + $0x238] sm:$0xff]
        %v2930 = vld [vmem:[#allocation2 + $0x240] sm:$0xff]
        %v2931 = vld [vmem:[#allocation2 + $0x248] sm:$0xff]
        %v2932 = vld [vmem:[#allocation2 + $0x250] sm:$0xff]
        %v2933 = vld [vmem:[#allocation2 + $0x258] sm:$0xff]
        %v2934 = vld [vmem:[#allocation2 + $0x260] sm:$0xff]
        %v2935 = vld [vmem:[#allocation2 + $0x268] sm:$0xff]
        %v2936 = vpack.c.bf16 %v2865, %v2864
        %v2937 = vpack.c.bf16 %v2867, %v2866
        %v2938 = vpack.c.bf16 %v2869, %v2868
        %v2939 = vpack.c.bf16 %v2871, %v2870
        %v2940 = vpack.c.bf16 %v2873, %v2872
        %v2941 = vpack.c.bf16 %v2875, %v2874
        %v2942 = vpack.c.bf16 %v2877, %v2876
        %v2943 = vpack.c.bf16 %v2879, %v2878
        %v2944 = vpack.c.bf16 %v2881, %v2880
        %v2945 = vpack.c.bf16 %v2883, %v2882
        %v2946 = vpack.c.bf16 %v2885, %v2884
        %v2947 = vpack.c.bf16 %v2887, %v2886
        %v2948 = vpack.c.bf16 %v2889, %v2888
        %v2949 = vpack.c.bf16 %v2891, %v2890
        %v2950 = vpack.c.bf16 %v2893, %v2892
        %v2951 = vpack.c.bf16 %v2895, %v2894
        %v2952 = vpack.c.bf16 %v2897, %v2896
        %v2953 = vpack.c.bf16 %v2899, %v2898
        %v2954 = vpack.c.bf16 %v2901, %v2900
        %v2955 = vpack.c.bf16 %v2903, %v2902
        %v2956 = vpack.c.bf16 %v2905, %v2904
        %v2957 = vpack.c.bf16 %v2907, %v2906
        %v2958 = vpack.c.bf16 %v2909, %v2908
        %v2959 = vpack.c.bf16 %v2911, %v2910
        %v2960 = vpack.c.bf16 %v2913, %v2912
        %v2961 = vpack.c.bf16 %v2915, %v2914
        %v2962 = vpack.c.bf16 %v2917, %v2916
        %v2963 = vpack.c.bf16 %v2919, %v2918
        %v2964 = vpack.c.bf16 %v2921, %v2920
        %v2965 = vpack.c.bf16 %v2923, %v2922
        %v2966 = vpack.c.bf16 %v2925, %v2924
        %v2967 = vpack.c.bf16 %v2927, %v2926
        %v2968 = vpack.c.bf16 %v2929, %v2928
        %v2969 = vpack.c.bf16 %v2931, %v2930
        %v2970 = vpack.c.bf16 %v2933, %v2932
        %v2971 = vpack.c.bf16 %v2935, %v2934
        %v2972 = vld [vmem:[#allocation3] sm:$0xff]
        %v2973 = vld [vmem:[#allocation3 + $0x8] sm:$0xff]
        %v2974 = vld [vmem:[#allocation3 + $0x10] sm:$0xff]
        %v2975 = vld [vmem:[#allocation3 + $0x18] sm:$0xff]
        %v2976 = vld [vmem:[#allocation3 + $0x20] sm:$0xff]
        %v2977 = vld [vmem:[#allocation3 + $0x28] sm:$0xff]
        %v2978 = vld [vmem:[#allocation3 + $0x30] sm:$0xff]
        %v2979 = vld [vmem:[#allocation3 + $0x38] sm:$0xff]
        %v2980 = vld [vmem:[#allocation3 + $0x40] sm:$0xff]
        %v2981 = vld [vmem:[#allocation3 + $0x48] sm:$0xff]
        %v2982 = vld [vmem:[#allocation3 + $0x50] sm:$0xff]
        %v2983 = vld [vmem:[#allocation3 + $0x58] sm:$0xff]
        %v2984 = vld [vmem:[#allocation3 + $0x60] sm:$0xff]
        %v2985 = vld [vmem:[#allocation3 + $0x68] sm:$0xff]
        %v2986 = vld [vmem:[#allocation3 + $0x70] sm:$0xff]
        %v2987 = vld [vmem:[#allocation3 + $0x78] sm:$0xff]
        %v2988 = vld [vmem:[#allocation3 + $0x80] sm:$0xff]
        %v2989 = vld [vmem:[#allocation3 + $0x88] sm:$0xff]
        %v2990 = vld [vmem:[#allocation3 + $0x90] sm:$0xff]
        %v2991 = vld [vmem:[#allocation3 + $0x98] sm:$0xff]
        %v2992 = vld [vmem:[#allocation3 + $0xa0] sm:$0xff]
        %v2993 = vld [vmem:[#allocation3 + $0xa8] sm:$0xff]
        %v2994 = vld [vmem:[#allocation3 + $0xb0] sm:$0xff]
        %v2995 = vld [vmem:[#allocation3 + $0xb8] sm:$0xff]
        %v2996 = vld [vmem:[#allocation3 + $0xc0] sm:$0xff]
        %v2997 = vld [vmem:[#allocation3 + $0xc8] sm:$0xff]
        %v2998 = vld [vmem:[#allocation3 + $0xd0] sm:$0xff]
        %v2999 = vld [vmem:[#allocation3 + $0xd8] sm:$0xff]
        %v3000 = vld [vmem:[#allocation3 + $0xe0] sm:$0xff]
        %v3001 = vld [vmem:[#allocation3 + $0xe8] sm:$0xff]
        %v3002 = vld [vmem:[#allocation3 + $0xf0] sm:$0xff]
        %v3003 = vld [vmem:[#allocation3 + $0xf8] sm:$0xff]
        %v3004 = vld [vmem:[#allocation3 + $0x100] sm:$0xff]
        %v3005 = vld [vmem:[#allocation3 + $0x108] sm:$0xff]
        %v3006 = vld [vmem:[#allocation3 + $0x110] sm:$0xff]
        %v3007 = vld [vmem:[#allocation3 + $0x118] sm:$0xff]
        %v3008 = vld [vmem:[#allocation3 + $0x120] sm:$0xff]
        %v3009 = vld [vmem:[#allocation3 + $0x128] sm:$0xff]
        %v3010 = vld [vmem:[#allocation3 + $0x130] sm:$0xff]
        %v3011 = vld [vmem:[#allocation3 + $0x138] sm:$0xff]
        %v3012 = vld [vmem:[#allocation3 + $0x140] sm:$0xff]
        %v3013 = vld [vmem:[#allocation3 + $0x148] sm:$0xff]
        %v3014 = vld [vmem:[#allocation3 + $0x150] sm:$0xff]
        %v3015 = vld [vmem:[#allocation3 + $0x158] sm:$0xff]
        %v3016 = vld [vmem:[#allocation3 + $0x160] sm:$0xff]
        %v3017 = vld [vmem:[#allocation3 + $0x168] sm:$0xff]
        %v3018 = vld [vmem:[#allocation3 + $0x170] sm:$0xff]
        %v3019 = vld [vmem:[#allocation3 + $0x178] sm:$0xff]
        %v3020 = vld [vmem:[#allocation3 + $0x180] sm:$0xff]
        %v3021 = vld [vmem:[#allocation3 + $0x188] sm:$0xff]
        %v3022 = vld [vmem:[#allocation3 + $0x190] sm:$0xff]
        %v3023 = vld [vmem:[#allocation3 + $0x198] sm:$0xff]
        %v3024 = vld [vmem:[#allocation3 + $0x1a0] sm:$0xff]
        %v3025 = vld [vmem:[#allocation3 + $0x1a8] sm:$0xff]
        %v3026 = vld [vmem:[#allocation3 + $0x1b0] sm:$0xff]
        %v3027 = vld [vmem:[#allocation3 + $0x1b8] sm:$0xff]
        %v3028 = vld [vmem:[#allocation3 + $0x1c0] sm:$0xff]
        %v3029 = vld [vmem:[#allocation3 + $0x1c8] sm:$0xff]
        %v3030 = vld [vmem:[#allocation3 + $0x1d0] sm:$0xff]
        %v3031 = vld [vmem:[#allocation3 + $0x1d8] sm:$0xff]
        %v3032 = vld [vmem:[#allocation3 + $0x1e0] sm:$0xff]
        %v3033 = vld [vmem:[#allocation3 + $0x1e8] sm:$0xff]
        %v3034 = vld [vmem:[#allocation3 + $0x1f0] sm:$0xff]
        %v3035 = vld [vmem:[#allocation3 + $0x1f8] sm:$0xff]
        %v3036 = vld [vmem:[#allocation3 + $0x200] sm:$0xff]
        %v3037 = vld [vmem:[#allocation3 + $0x208] sm:$0xff]
        %v3038 = vld [vmem:[#allocation3 + $0x210] sm:$0xff]
        %v3039 = vld [vmem:[#allocation3 + $0x218] sm:$0xff]
        %v3040 = vld [vmem:[#allocation3 + $0x220] sm:$0xff]
        %v3041 = vld [vmem:[#allocation3 + $0x228] sm:$0xff]
        %v3042 = vld [vmem:[#allocation3 + $0x230] sm:$0xff]
        %v3043 = vld [vmem:[#allocation3 + $0x238] sm:$0xff]
        %s3044 = scalar_lea.vmem %s3, 96
        %v3045 = vld [vmem:[%s3044] sm:$0xf]
        %v3046 = vld [vmem:[%s3044 + $0x4] sm:$0xf]
        %v3047 = vld [vmem:[%s3044 + $0x8] sm:$0xf]
        %v3048 = vld [vmem:[%s3044 + $0xc] sm:$0xf]
        %v3049 = vld [vmem:[%s3044 + $0x10] sm:$0xf]
        %v3050 = vld [vmem:[%s3044 + $0x14] sm:$0xf]
        %v3051 = vld [vmem:[%s3044 + $0x18] sm:$0xf]
        %v3052 = vld [vmem:[%s3044 + $0x1c] sm:$0xf]
        %v3053 = vld [vmem:[%s3044 + $0x20] sm:$0xf]
        %v3054 = vld [vmem:[%s3044 + $0x24] sm:$0xf]
        %v3055 = vld [vmem:[%s3044 + $0x28] sm:$0xf]
        %v3056 = vld [vmem:[%s3044 + $0x2c] sm:$0xf]
        %v3069 = vunpack.c.l.b16 %v3045
        %v3070 = vunpack.c.l.b16 %v3046
        %v3071 = vunpack.c.l.b16 %v3047
        %v3072 = vunpack.c.l.b16 %v3048
        %v3073 = vunpack.c.l.b16 %v3049
        %v3074 = vunpack.c.l.b16 %v3050
        %v3075 = vunpack.c.l.b16 %v3051
        %v3076 = vunpack.c.l.b16 %v3052
        %v3077 = vunpack.c.l.b16 %v3053
        %v3078 = vunpack.c.l.b16 %v3054
        %v3079 = vunpack.c.l.b16 %v3055
        %v3080 = vunpack.c.l.b16 %v3056
        %v3081 = vpack.c.b16 %v3070, %v3069
        %v3082 = vpack.c.b16 %v3072, %v3071
        %v3083 = vpack.c.b16 %v3074, %v3073
        %v3084 = vpack.c.b16 %v3076, %v3075
        %v3085 = vpack.c.b16 %v3078, %v3077
        %v3086 = vpack.c.b16 %v3080, %v3079
        %v3094 = vsel %vm1102, %v2936, 0
        %v3097 = vsel %vm1102, %v2937, 0
        %v3100 = vsel %vm1102, %v2938, 0
        %v3103 = vsel %vm1102, %v2939, 0
        %v3106 = vsel %vm1102, %v2940, 0
        %v3109 = vsel %vm1102, %v2941, 0
        %v3112 = vsel %vm1102, %v2942, 0
        %v3115 = vsel %vm1102, %v2943, 0
        %v3118 = vsel %vm1102, %v2944, 0
        %v3121 = vsel %vm1102, %v2945, 0
        %v3124 = vsel %vm1102, %v2946, 0
        %v3127 = vsel %vm1102, %v2947, 0
        %v3130 = vsel %vm1102, %v2948, 0
        %v3133 = vsel %vm1102, %v2949, 0
        %v3136 = vsel %vm1102, %v2950, 0
        %v3139 = vsel %vm1102, %v2951, 0
        %v3142 = vsel %vm1102, %v2952, 0
        %v3145 = vsel %vm1102, %v2953, 0
        %v3148 = vsel %vm1102, %v2954, 0
        %v3151 = vsel %vm1102, %v2955, 0
        %v3154 = vsel %vm1102, %v2956, 0
        %v3157 = vsel %vm1102, %v2957, 0
        %v3160 = vsel %vm1102, %v2958, 0
        %v3163 = vsel %vm1102, %v2959, 0
        %v3166 = vsel %vm1102, %v2960, 0
        %v3169 = vsel %vm1102, %v2961, 0
        %v3172 = vsel %vm1102, %v2962, 0
        %v3175 = vsel %vm1102, %v2963, 0
        %v3178 = vsel %vm1102, %v2964, 0
        %v3181 = vsel %vm1102, %v2965, 0
        %v3184 = vsel %vm1102, %v2966, 0
        %v3187 = vsel %vm1102, %v2967, 0
        %v3190 = vsel %vm1102, %v2968, 0
        %v3193 = vsel %vm1102, %v2969, 0
        %v3196 = vsel %vm1102, %v2970, 0
        %v3199 = vsel %vm1102, %v2971, 0
        %3201 = vmatprep.subr.bf16.mxu0 0
        %3202 = vmatpush1.bf16.msra.mxu0 0
        %3203 = vmatprep.subr.bf16.mxu0 0
        %3204 = vmatpush1.bf16.msra.mxu0 0
        %3205 = vmatprep.subr.bf16.mxu0 0
        %3206 = vmatpush1.bf16.msra.mxu0 %v3086
        %3207 = vmatprep.subr.bf16.mxu0 0
        %3208 = vmatpush1.bf16.msra.mxu0 %v3085
        %3209 = vmatprep.subr.bf16.mxu0 0
        %3210 = vmatpush1.bf16.msra.mxu0 %v3084
        %3211 = vmatprep.subr.bf16.mxu0 0
        %3212 = vmatpush1.bf16.msra.mxu0 %v3083
        %3213 = vmatprep.subr.bf16.mxu0 0
        %3214 = vmatpush1.bf16.msra.mxu0 %v3082
        %3215 = vmatprep.subr.bf16.mxu0 0
        %3216 = vmatpush1.bf16.msra.mxu0 %v3081
        %3217 = vmatprep.subr.bf16.mxu0 0
        %3218 = vmatpush2.bf16.msra.mxu0 0
        %3219 = vmatprep.subr.bf16.mxu0 0
        %3220 = vmatpush2.bf16.msra.mxu0 0
        %3221 = vmatprep.subr.bf16.mxu0 0
        %3222 = vmatpush2.bf16.msra.mxu0 0
        %3223 = vmatprep.subr.bf16.mxu0 0
        %3224 = vmatpush2.bf16.msra.mxu0 0
        %3225 = vmatprep.subr.bf16.mxu0 0
        %3226 = vmatpush2.bf16.msra.mxu0 0
        %3227 = vmatprep.subr.bf16.mxu0 0
        %3228 = vmatpush2.bf16.msra.mxu0 0
        %3229 = vmatprep.subr.bf16.mxu0 0
        %3230 = vmatpush2.bf16.msra.mxu0 0
        %3231 = vmatprep.subr.bf16.mxu0 0
        %3232 = vmatpush2.bf16.msra.mxu0 0
        %3233 = vmatprep.mubr.bf16.mxu0 0
        %3234 = vmatmul.mubr.bf16.gmra.mxu0 %v3094
        %v3235 = vpop.f32.mrf.mxu0
        %v3236 = vadd.f32 0.0, %v3235
        %v3237 = vpop.f32.mrf.mxu0
        %v3238 = vpop.f32.mrf.mxu0
        %v3239 = vadd.f32 0.0, %v3238
        %v3240 = vpop.f32.mrf.mxu0
        %3241 = vmatprep.mubr.bf16.mxu0 0
        %3242 = vmatmul.mubr.bf16.gmra.mxu0 %v3097
        %v3243 = vpop.f32.mrf.mxu0
        %v3244 = vadd.f32 0.0, %v3243
        %v3245 = vpop.f32.mrf.mxu0
        %v3246 = vpop.f32.mrf.mxu0
        %v3247 = vadd.f32 0.0, %v3246
        %v3248 = vpop.f32.mrf.mxu0
        %3249 = vmatprep.mubr.bf16.mxu0 0
        %3250 = vmatmul.mubr.bf16.gmra.mxu0 %v3100
        %v3251 = vpop.f32.mrf.mxu0
        %v3252 = vadd.f32 0.0, %v3251
        %v3253 = vpop.f32.mrf.mxu0
        %v3254 = vpop.f32.mrf.mxu0
        %v3255 = vadd.f32 0.0, %v3254
        %v3256 = vpop.f32.mrf.mxu0
        %3257 = vmatprep.mubr.bf16.mxu0 0
        %3258 = vmatmul.mubr.bf16.gmra.mxu0 %v3103
        %v3259 = vpop.f32.mrf.mxu0
        %v3260 = vadd.f32 0.0, %v3259
        %v3261 = vpop.f32.mrf.mxu0
        %v3262 = vpop.f32.mrf.mxu0
        %v3263 = vadd.f32 0.0, %v3262
        %v3264 = vpop.f32.mrf.mxu0
        %3265 = vmatprep.mubr.bf16.mxu0 0
        %3266 = vmatmul.mubr.bf16.gmra.mxu0 %v3106
        %v3267 = vpop.f32.mrf.mxu0
        %v3268 = vadd.f32 0.0, %v3267
        %v3269 = vpop.f32.mrf.mxu0
        %v3270 = vpop.f32.mrf.mxu0
        %v3271 = vadd.f32 0.0, %v3270
        %v3272 = vpop.f32.mrf.mxu0
        %3273 = vmatprep.mubr.bf16.mxu0 0
        %3274 = vmatmul.mubr.bf16.gmra.mxu0 %v3109
        %v3275 = vpop.f32.mrf.mxu0
        %v3276 = vadd.f32 0.0, %v3275
        %v3277 = vpop.f32.mrf.mxu0
        %v3278 = vpop.f32.mrf.mxu0
        %v3279 = vadd.f32 0.0, %v3278
        %v3280 = vpop.f32.mrf.mxu0
        %3281 = vmatprep.mubr.bf16.mxu0 0
        %3282 = vmatmul.mubr.bf16.gmra.mxu0 %v3112
        %v3283 = vpop.f32.mrf.mxu0
        %v3284 = vadd.f32 0.0, %v3283
        %v3285 = vpop.f32.mrf.mxu0
        %v3286 = vpop.f32.mrf.mxu0
        %v3287 = vadd.f32 0.0, %v3286
        %v3288 = vpop.f32.mrf.mxu0
        %3289 = vmatprep.mubr.bf16.mxu0 0
        %3290 = vmatmul.mubr.bf16.gmra.mxu0 %v3115
        %v3291 = vpop.f32.mrf.mxu0
        %v3292 = vadd.f32 0.0, %v3291
        %v3293 = vpop.f32.mrf.mxu0
        %v3294 = vpop.f32.mrf.mxu0
        %v3295 = vadd.f32 0.0, %v3294
        %v3296 = vpop.f32.mrf.mxu0
        %3297 = vmatprep.mubr.bf16.mxu0 0
        %3298 = vmatmul.mubr.bf16.gmra.mxu0 %v3118
        %v3299 = vpop.f32.mrf.mxu0
        %v3300 = vadd.f32 0.0, %v3299
        %v3301 = vpop.f32.mrf.mxu0
        %v3302 = vpop.f32.mrf.mxu0
        %v3303 = vadd.f32 0.0, %v3302
        %v3304 = vpop.f32.mrf.mxu0
        %3305 = vmatprep.mubr.bf16.mxu0 0
        %3306 = vmatmul.mubr.bf16.gmra.mxu0 %v3121
        %v3307 = vpop.f32.mrf.mxu0
        %v3308 = vadd.f32 0.0, %v3307
        %v3309 = vpop.f32.mrf.mxu0
        %v3310 = vpop.f32.mrf.mxu0
        %v3311 = vadd.f32 0.0, %v3310
        %v3312 = vpop.f32.mrf.mxu0
        %3313 = vmatprep.mubr.bf16.mxu0 0
        %3314 = vmatmul.mubr.bf16.gmra.mxu0 %v3124
        %v3315 = vpop.f32.mrf.mxu0
        %v3316 = vadd.f32 0.0, %v3315
        %v3317 = vpop.f32.mrf.mxu0
        %v3318 = vpop.f32.mrf.mxu0
        %v3319 = vadd.f32 0.0, %v3318
        %v3320 = vpop.f32.mrf.mxu0
        %3321 = vmatprep.mubr.bf16.mxu0 0
        %3322 = vmatmul.mubr.bf16.gmra.mxu0 %v3127
        %v3323 = vpop.f32.mrf.mxu0
        %v3324 = vadd.f32 0.0, %v3323
        %v3325 = vpop.f32.mrf.mxu0
        %v3326 = vpop.f32.mrf.mxu0
        %v3327 = vadd.f32 0.0, %v3326
        %v3328 = vpop.f32.mrf.mxu0
        %3329 = vmatprep.mubr.bf16.mxu0 0
        %3330 = vmatmul.mubr.bf16.gmra.mxu0 %v3130
        %v3331 = vpop.f32.mrf.mxu0
        %v3332 = vadd.f32 0.0, %v3331
        %v3333 = vpop.f32.mrf.mxu0
        %v3334 = vpop.f32.mrf.mxu0
        %v3335 = vadd.f32 0.0, %v3334
        %v3336 = vpop.f32.mrf.mxu0
        %3337 = vmatprep.mubr.bf16.mxu0 0
        %3338 = vmatmul.mubr.bf16.gmra.mxu0 %v3133
        %v3339 = vpop.f32.mrf.mxu0
        %v3340 = vadd.f32 0.0, %v3339
        %v3341 = vpop.f32.mrf.mxu0
        %v3342 = vpop.f32.mrf.mxu0
        %v3343 = vadd.f32 0.0, %v3342
        %v3344 = vpop.f32.mrf.mxu0
        %3345 = vmatprep.mubr.bf16.mxu0 0
        %3346 = vmatmul.mubr.bf16.gmra.mxu0 %v3136
        %v3347 = vpop.f32.mrf.mxu0
        %v3348 = vadd.f32 0.0, %v3347
        %v3349 = vpop.f32.mrf.mxu0
        %v3350 = vpop.f32.mrf.mxu0
        %v3351 = vadd.f32 0.0, %v3350
        %v3352 = vpop.f32.mrf.mxu0
        %3353 = vmatprep.mubr.bf16.mxu0 0
        %3354 = vmatmul.mubr.bf16.gmra.mxu0 %v3139
        %v3355 = vpop.f32.mrf.mxu0
        %v3356 = vadd.f32 0.0, %v3355
        %v3357 = vpop.f32.mrf.mxu0
        %v3358 = vpop.f32.mrf.mxu0
        %v3359 = vadd.f32 0.0, %v3358
        %v3360 = vpop.f32.mrf.mxu0
        %3361 = vmatprep.mubr.bf16.mxu0 0
        %3362 = vmatmul.mubr.bf16.gmra.mxu0 %v3142
        %v3363 = vpop.f32.mrf.mxu0
        %v3364 = vadd.f32 0.0, %v3363
        %v3365 = vpop.f32.mrf.mxu0
        %v3366 = vpop.f32.mrf.mxu0
        %v3367 = vadd.f32 0.0, %v3366
        %v3368 = vpop.f32.mrf.mxu0
        %3369 = vmatprep.mubr.bf16.mxu0 0
        %3370 = vmatmul.mubr.bf16.gmra.mxu0 %v3145
        %v3371 = vpop.f32.mrf.mxu0
        %v3372 = vadd.f32 0.0, %v3371
        %v3373 = vpop.f32.mrf.mxu0
        %v3374 = vpop.f32.mrf.mxu0
        %v3375 = vadd.f32 0.0, %v3374
        %v3376 = vpop.f32.mrf.mxu0
        %3377 = vmatprep.mubr.bf16.mxu0 0
        %3378 = vmatmul.mubr.bf16.gmra.mxu0 %v3148
        %v3379 = vpop.f32.mrf.mxu0
        %v3380 = vadd.f32 0.0, %v3379
        %v3381 = vpop.f32.mrf.mxu0
        %v3382 = vpop.f32.mrf.mxu0
        %v3383 = vadd.f32 0.0, %v3382
        %v3384 = vpop.f32.mrf.mxu0
        %3385 = vmatprep.mubr.bf16.mxu0 0
        %3386 = vmatmul.mubr.bf16.gmra.mxu0 %v3151
        %v3387 = vpop.f32.mrf.mxu0
        %v3388 = vadd.f32 0.0, %v3387
        %v3389 = vpop.f32.mrf.mxu0
        %v3390 = vpop.f32.mrf.mxu0
        %v3391 = vadd.f32 0.0, %v3390
        %v3392 = vpop.f32.mrf.mxu0
        %3393 = vmatprep.mubr.bf16.mxu0 0
        %3394 = vmatmul.mubr.bf16.gmra.mxu0 %v3154
        %v3395 = vpop.f32.mrf.mxu0
        %v3396 = vadd.f32 0.0, %v3395
        %v3397 = vpop.f32.mrf.mxu0
        %v3398 = vpop.f32.mrf.mxu0
        %v3399 = vadd.f32 0.0, %v3398
        %v3400 = vpop.f32.mrf.mxu0
        %3401 = vmatprep.mubr.bf16.mxu0 0
        %3402 = vmatmul.mubr.bf16.gmra.mxu0 %v3157
        %v3403 = vpop.f32.mrf.mxu0
        %v3404 = vadd.f32 0.0, %v3403
        %v3405 = vpop.f32.mrf.mxu0
        %v3406 = vpop.f32.mrf.mxu0
        %v3407 = vadd.f32 0.0, %v3406
        %v3408 = vpop.f32.mrf.mxu0
        %3409 = vmatprep.mubr.bf16.mxu0 0
        %3410 = vmatmul.mubr.bf16.gmra.mxu0 %v3160
        %v3411 = vpop.f32.mrf.mxu0
        %v3412 = vadd.f32 0.0, %v3411
        %v3413 = vpop.f32.mrf.mxu0
        %v3414 = vpop.f32.mrf.mxu0
        %v3415 = vadd.f32 0.0, %v3414
        %v3416 = vpop.f32.mrf.mxu0
        %3417 = vmatprep.mubr.bf16.mxu0 0
        %3418 = vmatmul.mubr.bf16.gmra.mxu0 %v3163
        %v3419 = vpop.f32.mrf.mxu0
        %v3420 = vadd.f32 0.0, %v3419
        %v3421 = vpop.f32.mrf.mxu0
        %v3422 = vpop.f32.mrf.mxu0
        %v3423 = vadd.f32 0.0, %v3422
        %v3424 = vpop.f32.mrf.mxu0
        %3425 = vmatprep.mubr.bf16.mxu0 0
        %3426 = vmatmul.mubr.bf16.gmra.mxu0 %v3166
        %v3427 = vpop.f32.mrf.mxu0
        %v3428 = vadd.f32 0.0, %v3427
        %v3429 = vpop.f32.mrf.mxu0
        %v3430 = vpop.f32.mrf.mxu0
        %v3431 = vadd.f32 0.0, %v3430
        %v3432 = vpop.f32.mrf.mxu0
        %3433 = vmatprep.mubr.bf16.mxu0 0
        %3434 = vmatmul.mubr.bf16.gmra.mxu0 %v3169
        %v3435 = vpop.f32.mrf.mxu0
        %v3436 = vadd.f32 0.0, %v3435
        %v3437 = vpop.f32.mrf.mxu0
        %v3438 = vpop.f32.mrf.mxu0
        %v3439 = vadd.f32 0.0, %v3438
        %v3440 = vpop.f32.mrf.mxu0
        %3441 = vmatprep.mubr.bf16.mxu0 0
        %3442 = vmatmul.mubr.bf16.gmra.mxu0 %v3172
        %v3443 = vpop.f32.mrf.mxu0
        %v3444 = vadd.f32 0.0, %v3443
        %v3445 = vpop.f32.mrf.mxu0
        %v3446 = vpop.f32.mrf.mxu0
        %v3447 = vadd.f32 0.0, %v3446
        %v3448 = vpop.f32.mrf.mxu0
        %3449 = vmatprep.mubr.bf16.mxu0 0
        %3450 = vmatmul.mubr.bf16.gmra.mxu0 %v3175
        %v3451 = vpop.f32.mrf.mxu0
        %v3452 = vadd.f32 0.0, %v3451
        %v3453 = vpop.f32.mrf.mxu0
        %v3454 = vpop.f32.mrf.mxu0
        %v3455 = vadd.f32 0.0, %v3454
        %v3456 = vpop.f32.mrf.mxu0
        %3457 = vmatprep.mubr.bf16.mxu0 0
        %3458 = vmatmul.mubr.bf16.gmra.mxu0 %v3178
        %v3459 = vpop.f32.mrf.mxu0
        %v3460 = vadd.f32 0.0, %v3459
        %v3461 = vpop.f32.mrf.mxu0
        %v3462 = vpop.f32.mrf.mxu0
        %v3463 = vadd.f32 0.0, %v3462
        %v3464 = vpop.f32.mrf.mxu0
        %3465 = vmatprep.mubr.bf16.mxu0 0
        %3466 = vmatmul.mubr.bf16.gmra.mxu0 %v3181
        %v3467 = vpop.f32.mrf.mxu0
        %v3468 = vadd.f32 0.0, %v3467
        %v3469 = vpop.f32.mrf.mxu0
        %v3470 = vpop.f32.mrf.mxu0
        %v3471 = vadd.f32 0.0, %v3470
        %v3472 = vpop.f32.mrf.mxu0
        %3473 = vmatprep.mubr.bf16.mxu0 0
        %3474 = vmatmul.mubr.bf16.gmra.mxu0 %v3184
        %v3475 = vpop.f32.mrf.mxu0
        %v3476 = vadd.f32 0.0, %v3475
        %v3477 = vpop.f32.mrf.mxu0
        %v3478 = vpop.f32.mrf.mxu0
        %v3479 = vadd.f32 0.0, %v3478
        %v3480 = vpop.f32.mrf.mxu0
        %3481 = vmatprep.mubr.bf16.mxu0 0
        %3482 = vmatmul.mubr.bf16.gmra.mxu0 %v3187
        %v3483 = vpop.f32.mrf.mxu0
        %v3484 = vadd.f32 0.0, %v3483
        %v3485 = vpop.f32.mrf.mxu0
        %v3486 = vpop.f32.mrf.mxu0
        %v3487 = vadd.f32 0.0, %v3486
        %v3488 = vpop.f32.mrf.mxu0
        %3489 = vmatprep.mubr.bf16.mxu0 0
        %3490 = vmatmul.mubr.bf16.gmra.mxu0 %v3190
        %v3491 = vpop.f32.mrf.mxu0
        %v3492 = vadd.f32 0.0, %v3491
        %v3493 = vpop.f32.mrf.mxu0
        %v3494 = vpop.f32.mrf.mxu0
        %v3495 = vadd.f32 0.0, %v3494
        %v3496 = vpop.f32.mrf.mxu0
        %3497 = vmatprep.mubr.bf16.mxu0 0
        %3498 = vmatmul.mubr.bf16.gmra.mxu0 %v3193
        %v3499 = vpop.f32.mrf.mxu0
        %v3500 = vadd.f32 0.0, %v3499
        %v3501 = vpop.f32.mrf.mxu0
        %v3502 = vpop.f32.mrf.mxu0
        %v3503 = vadd.f32 0.0, %v3502
        %v3504 = vpop.f32.mrf.mxu0
        %3505 = vmatprep.mubr.bf16.mxu0 0
        %3506 = vmatmul.mubr.bf16.gmra.mxu0 %v3196
        %v3507 = vpop.f32.mrf.mxu0
        %v3508 = vadd.f32 0.0, %v3507
        %v3509 = vpop.f32.mrf.mxu0
        %v3510 = vpop.f32.mrf.mxu0
        %v3511 = vadd.f32 0.0, %v3510
        %v3512 = vpop.f32.mrf.mxu0
        %3513 = vmatprep.mubr.bf16.mxu0 0
        %3514 = vmatmul.mubr.bf16.gmra.mxu0 %v3199
        %v3515 = vpop.f32.mrf.mxu0
        %v3516 = vadd.f32 0.0, %v3515
        %v3517 = vpop.f32.mrf.mxu0
        %v3518 = vpop.f32.mrf.mxu0
        %v3519 = vadd.f32 0.0, %v3518
        %v3520 = vpop.f32.mrf.mxu0
        %3521 = vdwg.mxu0
        %v3522 = vadd.f32 %v2972, %v3236
        %v3523 = vadd.f32 %v2973, %v3239
        %v3524 = vadd.f32 %v2974, %v3244
        %v3525 = vadd.f32 %v2975, %v3247
        %v3526 = vadd.f32 %v2976, %v3252
        %v3527 = vadd.f32 %v2977, %v3255
        %v3528 = vadd.f32 %v2978, %v3260
        %v3529 = vadd.f32 %v2979, %v3263
        %v3530 = vadd.f32 %v2980, %v3268
        %v3531 = vadd.f32 %v2981, %v3271
        %v3532 = vadd.f32 %v2982, %v3276
        %v3533 = vadd.f32 %v2983, %v3279
        %v3534 = vadd.f32 %v2984, %v3284
        %v3535 = vadd.f32 %v2985, %v3287
        %v3536 = vadd.f32 %v2986, %v3292
        %v3537 = vadd.f32 %v2987, %v3295
        %v3538 = vadd.f32 %v2988, %v3300
        %v3539 = vadd.f32 %v2989, %v3303
        %v3540 = vadd.f32 %v2990, %v3308
        %v3541 = vadd.f32 %v2991, %v3311
        %v3542 = vadd.f32 %v2992, %v3316
        %v3543 = vadd.f32 %v2993, %v3319
        %v3544 = vadd.f32 %v2994, %v3324
        %v3545 = vadd.f32 %v2995, %v3327
        %v3546 = vadd.f32 %v2996, %v3332
        %v3547 = vadd.f32 %v2997, %v3335
        %v3548 = vadd.f32 %v2998, %v3340
        %v3549 = vadd.f32 %v2999, %v3343
        %v3550 = vadd.f32 %v3000, %v3348
        %v3551 = vadd.f32 %v3001, %v3351
        %v3552 = vadd.f32 %v3002, %v3356
        %v3553 = vadd.f32 %v3003, %v3359
        %v3554 = vadd.f32 %v3004, %v3364
        %v3555 = vadd.f32 %v3005, %v3367
        %v3556 = vadd.f32 %v3006, %v3372
        %v3557 = vadd.f32 %v3007, %v3375
        %v3558 = vadd.f32 %v3008, %v3380
        %v3559 = vadd.f32 %v3009, %v3383
        %v3560 = vadd.f32 %v3010, %v3388
        %v3561 = vadd.f32 %v3011, %v3391
        %v3562 = vadd.f32 %v3012, %v3396
        %v3563 = vadd.f32 %v3013, %v3399
        %v3564 = vadd.f32 %v3014, %v3404
        %v3565 = vadd.f32 %v3015, %v3407
        %v3566 = vadd.f32 %v3016, %v3412
        %v3567 = vadd.f32 %v3017, %v3415
        %v3568 = vadd.f32 %v3018, %v3420
        %v3569 = vadd.f32 %v3019, %v3423
        %v3570 = vadd.f32 %v3020, %v3428
        %v3571 = vadd.f32 %v3021, %v3431
        %v3572 = vadd.f32 %v3022, %v3436
        %v3573 = vadd.f32 %v3023, %v3439
        %v3574 = vadd.f32 %v3024, %v3444
        %v3575 = vadd.f32 %v3025, %v3447
        %v3576 = vadd.f32 %v3026, %v3452
        %v3577 = vadd.f32 %v3027, %v3455
        %v3578 = vadd.f32 %v3028, %v3460
        %v3579 = vadd.f32 %v3029, %v3463
        %v3580 = vadd.f32 %v3030, %v3468
        %v3581 = vadd.f32 %v3031, %v3471
        %v3582 = vadd.f32 %v3032, %v3476
        %v3583 = vadd.f32 %v3033, %v3479
        %v3584 = vadd.f32 %v3034, %v3484
        %v3585 = vadd.f32 %v3035, %v3487
        %v3586 = vadd.f32 %v3036, %v3492
        %v3587 = vadd.f32 %v3037, %v3495
        %v3588 = vadd.f32 %v3038, %v3500
        %v3589 = vadd.f32 %v3039, %v3503
        %v3590 = vadd.f32 %v3040, %v3508
        %v3591 = vadd.f32 %v3041, %v3511
        %v3592 = vadd.f32 %v3042, %v3516
        %v3593 = vadd.f32 %v3043, %v3519
        %3594 = vst.msk [vmem:[#allocation3] sm:$0xff] %vm1188, %v3522
        %3595 = vst.msk [vmem:[#allocation3 + $0x8] sm:$0xff] %vm1188, %v3523
        %3596 = vst.msk [vmem:[#allocation3 + $0x10] sm:$0xff] %vm1188, %v3524
        %3597 = vst.msk [vmem:[#allocation3 + $0x18] sm:$0xff] %vm1188, %v3525
        %3598 = vst.msk [vmem:[#allocation3 + $0x20] sm:$0xff] %vm1188, %v3526
        %3599 = vst.msk [vmem:[#allocation3 + $0x28] sm:$0xff] %vm1188, %v3527
        %3600 = vst.msk [vmem:[#allocation3 + $0x30] sm:$0xff] %vm1188, %v3528
        %3601 = vst.msk [vmem:[#allocation3 + $0x38] sm:$0xff] %vm1188, %v3529
        %3602 = vst.msk [vmem:[#allocation3 + $0x40] sm:$0xff] %vm1188, %v3530
        %3603 = vst.msk [vmem:[#allocation3 + $0x48] sm:$0xff] %vm1188, %v3531
        %3604 = vst.msk [vmem:[#allocation3 + $0x50] sm:$0xff] %vm1188, %v3532
        %3605 = vst.msk [vmem:[#allocation3 + $0x58] sm:$0xff] %vm1188, %v3533
        %3606 = vst.msk [vmem:[#allocation3 + $0x60] sm:$0xff] %vm1188, %v3534
        %3607 = vst.msk [vmem:[#allocation3 + $0x68] sm:$0xff] %vm1188, %v3535
        %3608 = vst.msk [vmem:[#allocation3 + $0x70] sm:$0xff] %vm1188, %v3536
        %3609 = vst.msk [vmem:[#allocation3 + $0x78] sm:$0xff] %vm1188, %v3537
        %3610 = vst.msk [vmem:[#allocation3 + $0x80] sm:$0xff] %vm1188, %v3538
        %3611 = vst.msk [vmem:[#allocation3 + $0x88] sm:$0xff] %vm1188, %v3539
        %3612 = vst.msk [vmem:[#allocation3 + $0x90] sm:$0xff] %vm1188, %v3540
        %3613 = vst.msk [vmem:[#allocation3 + $0x98] sm:$0xff] %vm1188, %v3541
        %3614 = vst.msk [vmem:[#allocation3 + $0xa0] sm:$0xff] %vm1188, %v3542
        %3615 = vst.msk [vmem:[#allocation3 + $0xa8] sm:$0xff] %vm1188, %v3543
        %3616 = vst.msk [vmem:[#allocation3 + $0xb0] sm:$0xff] %vm1188, %v3544
        %3617 = vst.msk [vmem:[#allocation3 + $0xb8] sm:$0xff] %vm1188, %v3545
        %3618 = vst.msk [vmem:[#allocation3 + $0xc0] sm:$0xff] %vm1188, %v3546
        %3619 = vst.msk [vmem:[#allocation3 + $0xc8] sm:$0xff] %vm1188, %v3547
        %3620 = vst.msk [vmem:[#allocation3 + $0xd0] sm:$0xff] %vm1188, %v3548
        %3621 = vst.msk [vmem:[#allocation3 + $0xd8] sm:$0xff] %vm1188, %v3549
        %3622 = vst.msk [vmem:[#allocation3 + $0xe0] sm:$0xff] %vm1188, %v3550
        %3623 = vst.msk [vmem:[#allocation3 + $0xe8] sm:$0xff] %vm1188, %v3551
        %3624 = vst.msk [vmem:[#allocation3 + $0xf0] sm:$0xff] %vm1188, %v3552
        %3625 = vst.msk [vmem:[#allocation3 + $0xf8] sm:$0xff] %vm1188, %v3553
        %3626 = vst.msk [vmem:[#allocation3 + $0x100] sm:$0xff] %vm1188, %v3554
        %3627 = vst.msk [vmem:[#allocation3 + $0x108] sm:$0xff] %vm1188, %v3555
        %3628 = vst.msk [vmem:[#allocation3 + $0x110] sm:$0xff] %vm1188, %v3556
        %3629 = vst.msk [vmem:[#allocation3 + $0x118] sm:$0xff] %vm1188, %v3557
        %3630 = vst.msk [vmem:[#allocation3 + $0x120] sm:$0xff] %vm1188, %v3558
        %3631 = vst.msk [vmem:[#allocation3 + $0x128] sm:$0xff] %vm1188, %v3559
        %3632 = vst.msk [vmem:[#allocation3 + $0x130] sm:$0xff] %vm1188, %v3560
        %3633 = vst.msk [vmem:[#allocation3 + $0x138] sm:$0xff] %vm1188, %v3561
        %3634 = vst.msk [vmem:[#allocation3 + $0x140] sm:$0xff] %vm1188, %v3562
        %3635 = vst.msk [vmem:[#allocation3 + $0x148] sm:$0xff] %vm1188, %v3563
        %3636 = vst.msk [vmem:[#allocation3 + $0x150] sm:$0xff] %vm1188, %v3564
        %3637 = vst.msk [vmem:[#allocation3 + $0x158] sm:$0xff] %vm1188, %v3565
        %3638 = vst.msk [vmem:[#allocation3 + $0x160] sm:$0xff] %vm1188, %v3566
        %3639 = vst.msk [vmem:[#allocation3 + $0x168] sm:$0xff] %vm1188, %v3567
        %3640 = vst.msk [vmem:[#allocation3 + $0x170] sm:$0xff] %vm1188, %v3568
        %3641 = vst.msk [vmem:[#allocation3 + $0x178] sm:$0xff] %vm1188, %v3569
        %3642 = vst.msk [vmem:[#allocation3 + $0x180] sm:$0xff] %vm1188, %v3570
        %3643 = vst.msk [vmem:[#allocation3 + $0x188] sm:$0xff] %vm1188, %v3571
        %3644 = vst.msk [vmem:[#allocation3 + $0x190] sm:$0xff] %vm1188, %v3572
        %3645 = vst.msk [vmem:[#allocation3 + $0x198] sm:$0xff] %vm1188, %v3573
        %3646 = vst.msk [vmem:[#allocation3 + $0x1a0] sm:$0xff] %vm1188, %v3574
        %3647 = vst.msk [vmem:[#allocation3 + $0x1a8] sm:$0xff] %vm1188, %v3575
        %3648 = vst.msk [vmem:[#allocation3 + $0x1b0] sm:$0xff] %vm1188, %v3576
        %3649 = vst.msk [vmem:[#allocation3 + $0x1b8] sm:$0xff] %vm1188, %v3577
        %3650 = vst.msk [vmem:[#allocation3 + $0x1c0] sm:$0xff] %vm1188, %v3578
        %3651 = vst.msk [vmem:[#allocation3 + $0x1c8] sm:$0xff] %vm1188, %v3579
        %3652 = vst.msk [vmem:[#allocation3 + $0x1d0] sm:$0xff] %vm1188, %v3580
        %3653 = vst.msk [vmem:[#allocation3 + $0x1d8] sm:$0xff] %vm1188, %v3581
        %3654 = vst.msk [vmem:[#allocation3 + $0x1e0] sm:$0xff] %vm1188, %v3582
        %3655 = vst.msk [vmem:[#allocation3 + $0x1e8] sm:$0xff] %vm1188, %v3583
        %3656 = vst.msk [vmem:[#allocation3 + $0x1f0] sm:$0xff] %vm1188, %v3584
        %3657 = vst.msk [vmem:[#allocation3 + $0x1f8] sm:$0xff] %vm1188, %v3585
        %3658 = vst.msk [vmem:[#allocation3 + $0x200] sm:$0xff] %vm1188, %v3586
        %3659 = vst.msk [vmem:[#allocation3 + $0x208] sm:$0xff] %vm1188, %v3587
        %3660 = vst.msk [vmem:[#allocation3 + $0x210] sm:$0xff] %vm1188, %v3588
        %3661 = vst.msk [vmem:[#allocation3 + $0x218] sm:$0xff] %vm1188, %v3589
        %3662 = vst.msk [vmem:[#allocation3 + $0x220] sm:$0xff] %vm1188, %v3590
        %3663 = vst.msk [vmem:[#allocation3 + $0x228] sm:$0xff] %vm1188, %v3591
        %3664 = vst.msk [vmem:[#allocation3 + $0x230] sm:$0xff] %vm1188, %v3592
        %3665 = vst.msk [vmem:[#allocation3 + $0x238] sm:$0xff] %vm1188, %v3593
        %v3666 = vld [vmem:[#allocation3] ss:$2 sm:$0xff]
        %s3667 = scalar_lea.vmem [#allocation3], 16
        %v3668 = vld [vmem:[%s3667] ss:$2 sm:$0xf]
        %s3669 = scalar_lea.vmem [#allocation3], 24
        %v3670 = vld [vmem:[%s3669] ss:$2 sm:$0xff]
        %s3671 = scalar_lea.vmem [#allocation3], 40
        %v3672 = vld [vmem:[%s3671] ss:$2 sm:$0xf]
        %s3673 = scalar_lea.vmem [#allocation3], 48
        %v3674 = vld [vmem:[%s3673] ss:$2 sm:$0xff]
        %s3675 = scalar_lea.vmem [#allocation3], 64
        %v3676 = vld [vmem:[%s3675] ss:$2 sm:$0xf]
        %s3677 = scalar_lea.vmem [#allocation3], 72
        %v3678 = vld [vmem:[%s3677] ss:$2 sm:$0xff]
        %s3679 = scalar_lea.vmem [#allocation3], 88
        %v3680 = vld [vmem:[%s3679] ss:$2 sm:$0xf]
        %s3681 = scalar_lea.vmem [#allocation3], 96
        %v3682 = vld [vmem:[%s3681] ss:$2 sm:$0xff]
        %s3683 = scalar_lea.vmem [#allocation3], 112
        %v3684 = vld [vmem:[%s3683] ss:$2 sm:$0xf]
        %s3685 = scalar_lea.vmem [#allocation3], 120
        %v3686 = vld [vmem:[%s3685] ss:$2 sm:$0xff]
        %s3687 = scalar_lea.vmem [#allocation3], 136
        %v3688 = vld [vmem:[%s3687] ss:$2 sm:$0xf]
        %s3689 = scalar_lea.vmem [#allocation3], 144
        %v3690 = vld [vmem:[%s3689] ss:$2 sm:$0xff]
        %s3691 = scalar_lea.vmem [#allocation3], 160
        %v3692 = vld [vmem:[%s3691] ss:$2 sm:$0xf]
        %s3693 = scalar_lea.vmem [#allocation3], 168
        %v3694 = vld [vmem:[%s3693] ss:$2 sm:$0xff]
        %s3695 = scalar_lea.vmem [#allocation3], 184
        %v3696 = vld [vmem:[%s3695] ss:$2 sm:$0xf]
        %s3697 = scalar_lea.vmem [#allocation3], 192
        %v3698 = vld [vmem:[%s3697] ss:$2 sm:$0xff]
        %s3699 = scalar_lea.vmem [#allocation3], 208
        %v3700 = vld [vmem:[%s3699] ss:$2 sm:$0xf]
        %s3701 = scalar_lea.vmem [#allocation3], 216
        %v3702 = vld [vmem:[%s3701] ss:$2 sm:$0xff]
        %s3703 = scalar_lea.vmem [#allocation3], 232
        %v3704 = vld [vmem:[%s3703] ss:$2 sm:$0xf]
        %s3705 = scalar_lea.vmem [#allocation3], 240
        %v3706 = vld [vmem:[%s3705] ss:$2 sm:$0xff]
        %s3707 = scalar_lea.vmem [#allocation3], 256
        %v3708 = vld [vmem:[%s3707] ss:$2 sm:$0xf]
        %s3709 = scalar_lea.vmem [#allocation3], 264
        %v3710 = vld [vmem:[%s3709] ss:$2 sm:$0xff]
        %s3711 = scalar_lea.vmem [#allocation3], 280
        %v3712 = vld [vmem:[%s3711] ss:$2 sm:$0xf]
        %s3713 = scalar_lea.vmem [#allocation3], 288
        %v3714 = vld [vmem:[%s3713] ss:$2 sm:$0xff]
        %s3715 = scalar_lea.vmem [#allocation3], 304
        %v3716 = vld [vmem:[%s3715] ss:$2 sm:$0xf]
        %s3717 = scalar_lea.vmem [#allocation3], 312
        %v3718 = vld [vmem:[%s3717] ss:$2 sm:$0xff]
        %s3719 = scalar_lea.vmem [#allocation3], 328
        %v3720 = vld [vmem:[%s3719] ss:$2 sm:$0xf]
        %s3721 = scalar_lea.vmem [#allocation3], 336
        %v3722 = vld [vmem:[%s3721] ss:$2 sm:$0xff]
        %s3723 = scalar_lea.vmem [#allocation3], 352
        %v3724 = vld [vmem:[%s3723] ss:$2 sm:$0xf]
        %s3725 = scalar_lea.vmem [#allocation3], 360
        %v3726 = vld [vmem:[%s3725] ss:$2 sm:$0xff]
        %s3727 = scalar_lea.vmem [#allocation3], 376
        %v3728 = vld [vmem:[%s3727] ss:$2 sm:$0xf]
        %s3729 = scalar_lea.vmem [#allocation3], 384
        %v3730 = vld [vmem:[%s3729] ss:$2 sm:$0xff]
        %s3731 = scalar_lea.vmem [#allocation3], 400
        %v3732 = vld [vmem:[%s3731] ss:$2 sm:$0xf]
        %s3733 = scalar_lea.vmem [#allocation3], 408
        %v3734 = vld [vmem:[%s3733] ss:$2 sm:$0xff]
        %s3735 = scalar_lea.vmem [#allocation3], 424
        %v3736 = vld [vmem:[%s3735] ss:$2 sm:$0xf]
        %s3737 = scalar_lea.vmem [#allocation3], 432
        %v3738 = vld [vmem:[%s3737] ss:$2 sm:$0xff]
        %s3739 = scalar_lea.vmem [#allocation3], 448
        %v3740 = vld [vmem:[%s3739] ss:$2 sm:$0xf]
        %s3741 = scalar_lea.vmem [#allocation3], 456
        %v3742 = vld [vmem:[%s3741] ss:$2 sm:$0xff]
        %s3743 = scalar_lea.vmem [#allocation3], 472
        %v3744 = vld [vmem:[%s3743] ss:$2 sm:$0xf]
        %s3745 = scalar_lea.vmem [#allocation3], 480
        %v3746 = vld [vmem:[%s3745] ss:$2 sm:$0xff]
        %s3747 = scalar_lea.vmem [#allocation3], 496
        %v3748 = vld [vmem:[%s3747] ss:$2 sm:$0xf]
        %s3749 = scalar_lea.vmem [#allocation3], 504
        %v3750 = vld [vmem:[%s3749] ss:$2 sm:$0xff]
        %s3751 = scalar_lea.vmem [#allocation3], 520
        %v3752 = vld [vmem:[%s3751] ss:$2 sm:$0xf]
        %s3753 = scalar_lea.vmem [#allocation3], 528
        %v3754 = vld [vmem:[%s3753] ss:$2 sm:$0xff]
        %s3755 = scalar_lea.vmem [#allocation3], 544
        %v3756 = vld [vmem:[%s3755] ss:$2 sm:$0xf]
        %s3757 = scalar_lea.vmem [#allocation3], 552
        %v3758 = vld [vmem:[%s3757] ss:$2 sm:$0xff]
        %s3759 = scalar_lea.vmem [#allocation3], 568
        %v3760 = vld [vmem:[%s3759] ss:$2 sm:$0xf]
        %s3761 = scalar_lea.vmem [#allocation3], 1
        %v3762 = vld [vmem:[%s3761] ss:$2 sm:$0xff]
        %s3763 = scalar_lea.vmem [#allocation3], 17
        %v3764 = vld [vmem:[%s3763] ss:$2 sm:$0xf]
        %s3765 = scalar_lea.vmem [#allocation3], 25
        %v3766 = vld [vmem:[%s3765] ss:$2 sm:$0xff]
        %s3767 = scalar_lea.vmem [#allocation3], 41
        %v3768 = vld [vmem:[%s3767] ss:$2 sm:$0xf]
        %s3769 = scalar_lea.vmem [#allocation3], 49
        %v3770 = vld [vmem:[%s3769] ss:$2 sm:$0xff]
        %s3771 = scalar_lea.vmem [#allocation3], 65
        %v3772 = vld [vmem:[%s3771] ss:$2 sm:$0xf]
        %s3773 = scalar_lea.vmem [#allocation3], 73
        %v3774 = vld [vmem:[%s3773] ss:$2 sm:$0xff]
        %s3775 = scalar_lea.vmem [#allocation3], 89
        %v3776 = vld [vmem:[%s3775] ss:$2 sm:$0xf]
        %s3777 = scalar_lea.vmem [#allocation3], 97
        %v3778 = vld [vmem:[%s3777] ss:$2 sm:$0xff]
        %s3779 = scalar_lea.vmem [#allocation3], 113
        %v3780 = vld [vmem:[%s3779] ss:$2 sm:$0xf]
        %s3781 = scalar_lea.vmem [#allocation3], 121
        %v3782 = vld [vmem:[%s3781] ss:$2 sm:$0xff]
        %s3783 = scalar_lea.vmem [#allocation3], 137
        %v3784 = vld [vmem:[%s3783] ss:$2 sm:$0xf]
        %s3785 = scalar_lea.vmem [#allocation3], 145
        %v3786 = vld [vmem:[%s3785] ss:$2 sm:$0xff]
        %s3787 = scalar_lea.vmem [#allocation3], 161
        %v3788 = vld [vmem:[%s3787] ss:$2 sm:$0xf]
        %s3789 = scalar_lea.vmem [#allocation3], 169
        %v3790 = vld [vmem:[%s3789] ss:$2 sm:$0xff]
        %s3791 = scalar_lea.vmem [#allocation3], 185
        %v3792 = vld [vmem:[%s3791] ss:$2 sm:$0xf]
        %s3793 = scalar_lea.vmem [#allocation3], 193
        %v3794 = vld [vmem:[%s3793] ss:$2 sm:$0xff]
        %s3795 = scalar_lea.vmem [#allocation3], 209
        %v3796 = vld [vmem:[%s3795] ss:$2 sm:$0xf]
        %s3797 = scalar_lea.vmem [#allocation3], 217
        %v3798 = vld [vmem:[%s3797] ss:$2 sm:$0xff]
        %s3799 = scalar_lea.vmem [#allocation3], 233
        %v3800 = vld [vmem:[%s3799] ss:$2 sm:$0xf]
        %s3801 = scalar_lea.vmem [#allocation3], 241
        %v3802 = vld [vmem:[%s3801] ss:$2 sm:$0xff]
        %s3803 = scalar_lea.vmem [#allocation3], 257
        %v3804 = vld [vmem:[%s3803] ss:$2 sm:$0xf]
        %s3805 = scalar_lea.vmem [#allocation3], 265
        %v3806 = vld [vmem:[%s3805] ss:$2 sm:$0xff]
        %s3807 = scalar_lea.vmem [#allocation3], 281
        %v3808 = vld [vmem:[%s3807] ss:$2 sm:$0xf]
        %s3809 = scalar_lea.vmem [#allocation3], 289
        %v3810 = vld [vmem:[%s3809] ss:$2 sm:$0xff]
        %s3811 = scalar_lea.vmem [#allocation3], 305
        %v3812 = vld [vmem:[%s3811] ss:$2 sm:$0xf]
        %s3813 = scalar_lea.vmem [#allocation3], 313
        %v3814 = vld [vmem:[%s3813] ss:$2 sm:$0xff]
        %s3815 = scalar_lea.vmem [#allocation3], 329
        %v3816 = vld [vmem:[%s3815] ss:$2 sm:$0xf]
        %s3817 = scalar_lea.vmem [#allocation3], 337
        %v3818 = vld [vmem:[%s3817] ss:$2 sm:$0xff]
        %s3819 = scalar_lea.vmem [#allocation3], 353
        %v3820 = vld [vmem:[%s3819] ss:$2 sm:$0xf]
        %s3821 = scalar_lea.vmem [#allocation3], 361
        %v3822 = vld [vmem:[%s3821] ss:$2 sm:$0xff]
        %s3823 = scalar_lea.vmem [#allocation3], 377
        %v3824 = vld [vmem:[%s3823] ss:$2 sm:$0xf]
        %s3825 = scalar_lea.vmem [#allocation3], 385
        %v3826 = vld [vmem:[%s3825] ss:$2 sm:$0xff]
        %s3827 = scalar_lea.vmem [#allocation3], 401
        %v3828 = vld [vmem:[%s3827] ss:$2 sm:$0xf]
        %s3829 = scalar_lea.vmem [#allocation3], 409
        %v3830 = vld [vmem:[%s3829] ss:$2 sm:$0xff]
        %s3831 = scalar_lea.vmem [#allocation3], 425
        %v3832 = vld [vmem:[%s3831] ss:$2 sm:$0xf]
        %s3833 = scalar_lea.vmem [#allocation3], 433
        %v3834 = vld [vmem:[%s3833] ss:$2 sm:$0xff]
        %s3835 = scalar_lea.vmem [#allocation3], 449
        %v3836 = vld [vmem:[%s3835] ss:$2 sm:$0xf]
        %s3837 = scalar_lea.vmem [#allocation3], 457
        %v3838 = vld [vmem:[%s3837] ss:$2 sm:$0xff]
        %s3839 = scalar_lea.vmem [#allocation3], 473
        %v3840 = vld [vmem:[%s3839] ss:$2 sm:$0xf]
        %s3841 = scalar_lea.vmem [#allocation3], 481
        %v3842 = vld [vmem:[%s3841] ss:$2 sm:$0xff]
        %s3843 = scalar_lea.vmem [#allocation3], 497
        %v3844 = vld [vmem:[%s3843] ss:$2 sm:$0xf]
        %s3845 = scalar_lea.vmem [#allocation3], 505
        %v3846 = vld [vmem:[%s3845] ss:$2 sm:$0xff]
        %s3847 = scalar_lea.vmem [#allocation3], 521
        %v3848 = vld [vmem:[%s3847] ss:$2 sm:$0xf]
        %s3849 = scalar_lea.vmem [#allocation3], 529
        %v3850 = vld [vmem:[%s3849] ss:$2 sm:$0xff]
        %s3851 = scalar_lea.vmem [#allocation3], 545
        %v3852 = vld [vmem:[%s3851] ss:$2 sm:$0xf]
        %s3853 = scalar_lea.vmem [#allocation3], 553
        %v3854 = vld [vmem:[%s3853] ss:$2 sm:$0xff]
        %s3855 = scalar_lea.vmem [#allocation3], 569
        %v3856 = vld [vmem:[%s3855] ss:$2 sm:$0xf]
        %v3857 = vmax.f32 %v3666, %v3762
        %v3858 = vmax.f32 %v3668, %v3764
        %v3859 = vmax.f32 %v3670, %v3766
        %v3860 = vmax.f32 %v3672, %v3768
        %v3861 = vmax.f32 %v3674, %v3770
        %v3862 = vmax.f32 %v3676, %v3772
        %v3863 = vmax.f32 %v3678, %v3774
        %v3864 = vmax.f32 %v3680, %v3776
        %v3865 = vmax.f32 %v3682, %v3778
        %v3866 = vmax.f32 %v3684, %v3780
        %v3867 = vmax.f32 %v3686, %v3782
        %v3868 = vmax.f32 %v3688, %v3784
        %v3869 = vmax.f32 %v3690, %v3786
        %v3870 = vmax.f32 %v3692, %v3788
        %v3871 = vmax.f32 %v3694, %v3790
        %v3872 = vmax.f32 %v3696, %v3792
        %v3873 = vmax.f32 %v3698, %v3794
        %v3874 = vmax.f32 %v3700, %v3796
        %v3875 = vmax.f32 %v3702, %v3798
        %v3876 = vmax.f32 %v3704, %v3800
        %v3877 = vmax.f32 %v3706, %v3802
        %v3878 = vmax.f32 %v3708, %v3804
        %v3879 = vmax.f32 %v3710, %v3806
        %v3880 = vmax.f32 %v3712, %v3808
        %v3881 = vmax.f32 %v3714, %v3810
        %v3882 = vmax.f32 %v3716, %v3812
        %v3883 = vmax.f32 %v3718, %v3814
        %v3884 = vmax.f32 %v3720, %v3816
        %v3885 = vmax.f32 %v3722, %v3818
        %v3886 = vmax.f32 %v3724, %v3820
        %v3887 = vmax.f32 %v3726, %v3822
        %v3888 = vmax.f32 %v3728, %v3824
        %v3889 = vmax.f32 %v3730, %v3826
        %v3890 = vmax.f32 %v3732, %v3828
        %v3891 = vmax.f32 %v3734, %v3830
        %v3892 = vmax.f32 %v3736, %v3832
        %v3893 = vmax.f32 %v3738, %v3834
        %v3894 = vmax.f32 %v3740, %v3836
        %v3895 = vmax.f32 %v3742, %v3838
        %v3896 = vmax.f32 %v3744, %v3840
        %v3897 = vmax.f32 %v3746, %v3842
        %v3898 = vmax.f32 %v3748, %v3844
        %v3899 = vmax.f32 %v3750, %v3846
        %v3900 = vmax.f32 %v3752, %v3848
        %v3901 = vmax.f32 %v3754, %v3850
        %v3902 = vmax.f32 %v3756, %v3852
        %v3903 = vmax.f32 %v3758, %v3854
        %v3904 = vmax.f32 %v3760, %v3856
        %v3905 = vsel %vm1188, %v3857, -inf
        %v3906 = vsel %vm1188, %v3859, -inf
        %v3907 = vmax.f32 %v3905, %v3906
        %vm3908 = vcmask 519168
        %v3909 = vsel %vm3908, %v3858, -inf
        %v3910 = vsel %vm3908, %v3860, -inf
        %v3911 = vmax.f32 %v3909, %v3910
        %v3912 = vsel %vm1188, %v3861, -inf
        %v3913 = vsel %vm1188, %v3863, -inf
        %v3914 = vmax.f32 %v3912, %v3913
        %v3915 = vsel %vm3908, %v3862, -inf
        %v3916 = vsel %vm3908, %v3864, -inf
        %v3917 = vmax.f32 %v3915, %v3916
        %v3918 = vsel %vm1188, %v3865, -inf
        %v3919 = vsel %vm1188, %v3867, -inf
        %v3920 = vmax.f32 %v3918, %v3919
        %v3921 = vsel %vm3908, %v3866, -inf
        %v3922 = vsel %vm3908, %v3868, -inf
        %v3923 = vmax.f32 %v3921, %v3922
        %v3924 = vsel %vm1188, %v3869, -inf
        %v3925 = vsel %vm1188, %v3871, -inf
        %v3926 = vmax.f32 %v3924, %v3925
        %v3927 = vsel %vm3908, %v3870, -inf
        %v3928 = vsel %vm3908, %v3872, -inf
        %v3929 = vmax.f32 %v3927, %v3928
        %v3930 = vsel %vm1188, %v3873, -inf
        %v3931 = vsel %vm1188, %v3875, -inf
        %v3932 = vmax.f32 %v3930, %v3931
        %v3933 = vsel %vm3908, %v3874, -inf
        %v3934 = vsel %vm3908, %v3876, -inf
        %v3935 = vmax.f32 %v3933, %v3934
        %v3936 = vsel %vm1188, %v3877, -inf
        %v3937 = vsel %vm1188, %v3879, -inf
        %v3938 = vmax.f32 %v3936, %v3937
        %v3939 = vsel %vm3908, %v3878, -inf
        %v3940 = vsel %vm3908, %v3880, -inf
        %v3941 = vmax.f32 %v3939, %v3940
        %v3942 = vsel %vm1188, %v3881, -inf
        %v3943 = vsel %vm1188, %v3883, -inf
        %v3944 = vmax.f32 %v3942, %v3943
        %v3945 = vsel %vm3908, %v3882, -inf
        %v3946 = vsel %vm3908, %v3884, -inf
        %v3947 = vmax.f32 %v3945, %v3946
        %v3948 = vsel %vm1188, %v3885, -inf
        %v3949 = vsel %vm1188, %v3887, -inf
        %v3950 = vmax.f32 %v3948, %v3949
        %v3951 = vsel %vm3908, %v3886, -inf
        %v3952 = vsel %vm3908, %v3888, -inf
        %v3953 = vmax.f32 %v3951, %v3952
        %v3954 = vsel %vm1188, %v3889, -inf
        %v3955 = vsel %vm1188, %v3891, -inf
        %v3956 = vmax.f32 %v3954, %v3955
        %v3957 = vsel %vm3908, %v3890, -inf
        %v3958 = vsel %vm3908, %v3892, -inf
        %v3959 = vmax.f32 %v3957, %v3958
        %v3960 = vsel %vm1188, %v3893, -inf
        %v3961 = vsel %vm1188, %v3895, -inf
        %v3962 = vmax.f32 %v3960, %v3961
        %v3963 = vsel %vm3908, %v3894, -inf
        %v3964 = vsel %vm3908, %v3896, -inf
        %v3965 = vmax.f32 %v3963, %v3964
        %v3966 = vsel %vm1188, %v3897, -inf
        %v3967 = vsel %vm1188, %v3899, -inf
        %v3968 = vmax.f32 %v3966, %v3967
        %v3969 = vsel %vm3908, %v3898, -inf
        %v3970 = vsel %vm3908, %v3900, -inf
        %v3971 = vmax.f32 %v3969, %v3970
        %v3972 = vsel %vm1188, %v3901, -inf
        %v3973 = vsel %vm1188, %v3903, -inf
        %v3974 = vmax.f32 %v3972, %v3973
        %v3975 = vsel %vm3908, %v3902, -inf
        %v3976 = vsel %vm3908, %v3904, -inf
        %v3977 = vmax.f32 %v3975, %v3976
        %v3978 = vmax.f32 %v3907, 0.0
        %v3979 = vmax.f32 %v3911, 0.0
        %v3980 = vmax.f32 %v3914, 0.0
        %v3981 = vmax.f32 %v3917, 0.0
        %v3982 = vmax.f32 %v3920, 0.0
        %v3983 = vmax.f32 %v3923, 0.0
        %v3984 = vmax.f32 %v3926, 0.0
        %v3985 = vmax.f32 %v3929, 0.0
        %v3986 = vmax.f32 %v3932, 0.0
        %v3987 = vmax.f32 %v3935, 0.0
        %v3988 = vmax.f32 %v3938, 0.0
        %v3989 = vmax.f32 %v3941, 0.0
        %v3990 = vmax.f32 %v3944, 0.0
        %v3991 = vmax.f32 %v3947, 0.0
        %v3992 = vmax.f32 %v3950, 0.0
        %v3993 = vmax.f32 %v3953, 0.0
        %v3994 = vmax.f32 %v3956, 0.0
        %v3995 = vmax.f32 %v3959, 0.0
        %v3996 = vmax.f32 %v3962, 0.0
        %v3997 = vmax.f32 %v3965, 0.0
        %v3998 = vmax.f32 %v3968, 0.0
        %v3999 = vmax.f32 %v3971, 0.0
        %v4000 = vmax.f32 %v3974, 0.0
        %v4001 = vmax.f32 %v3977, 0.0
        %v4002 = vpack.c.bf16 %v3979, %v3978
        %v4003 = vpack.c.bf16 %v3981, %v3980
        %v4004 = vpack.c.bf16 %v3983, %v3982
        %v4005 = vpack.c.bf16 %v3985, %v3984
        %v4006 = vpack.c.bf16 %v3987, %v3986
        %v4007 = vpack.c.bf16 %v3989, %v3988
        %v4008 = vpack.c.bf16 %v3991, %v3990
        %v4009 = vpack.c.bf16 %v3993, %v3992
        %v4010 = vpack.c.bf16 %v3995, %v3994
        %v4011 = vpack.c.bf16 %v3997, %v3996
        %v4012 = vpack.c.bf16 %v3999, %v3998
        %v4013 = vpack.c.bf16 %v4001, %v4000
        %v4026 = vunpack.c.l.b16 %v4002
        %v4027 = vunpack.c.h.b16 %v4002
        %v4028 = vunpack.c.l.b16 %v4003
        %v4029 = vunpack.c.h.b16 %v4003
        %v4030 = vunpack.c.l.b16 %v4004
        %v4031 = vunpack.c.h.b16 %v4004
        %v4032 = vunpack.c.l.b16 %v4005
        %v4033 = vunpack.c.h.b16 %v4005
        %v4034 = vunpack.c.l.b16 %v4006
        %v4035 = vunpack.c.h.b16 %v4006
        %v4036 = vunpack.c.l.b16 %v4007
        %v4037 = vunpack.c.h.b16 %v4007
        %v4038 = vunpack.c.l.b16 %v4008
        %v4039 = vunpack.c.h.b16 %v4008
        %v4040 = vunpack.c.l.b16 %v4009
        %v4041 = vunpack.c.h.b16 %v4009
        %v4042 = vunpack.c.l.b16 %v4010
        %v4043 = vunpack.c.h.b16 %v4010
        %v4044 = vunpack.c.l.b16 %v4011
        %v4045 = vunpack.c.h.b16 %v4011
        %v4046 = vunpack.c.l.b16 %v4012
        %v4047 = vunpack.c.h.b16 %v4012
        %v4048 = vunpack.c.l.b16 %v4013
        %v4049 = vunpack.c.h.b16 %v4013
        %v4050 = vpack.c.b16 %v4026, %v4026
        %v4051 = vpack.c.b16 %v4027, %v4027
        %v4052 = vpack.c.b16 %v4028, %v4028
        %v4053 = vpack.c.b16 %v4029, %v4029
        %v4054 = vpack.c.b16 %v4030, %v4030
        %v4055 = vpack.c.b16 %v4031, %v4031
        %v4056 = vpack.c.b16 %v4032, %v4032
        %v4057 = vpack.c.b16 %v4033, %v4033
        %v4058 = vpack.c.b16 %v4034, %v4034
        %v4059 = vpack.c.b16 %v4035, %v4035
        %v4060 = vpack.c.b16 %v4036, %v4036
        %v4061 = vpack.c.b16 %v4037, %v4037
        %v4062 = vpack.c.b16 %v4038, %v4038
        %v4063 = vpack.c.b16 %v4039, %v4039
        %v4064 = vpack.c.b16 %v4040, %v4040
        %v4065 = vpack.c.b16 %v4041, %v4041
        %v4066 = vpack.c.b16 %v4042, %v4042
        %v4067 = vpack.c.b16 %v4043, %v4043
        %v4068 = vpack.c.b16 %v4044, %v4044
        %v4069 = vpack.c.b16 %v4045, %v4045
        %v4070 = vpack.c.b16 %v4046, %v4046
        %v4071 = vpack.c.b16 %v4047, %v4047
        %v4072 = vpack.c.b16 %v4048, %v4048
        %v4073 = vpack.c.b16 %v4049, %v4049
        %4098 = vst.msk [vmem:[%s264] sm:$0xf] %vm3908, %v4050
        %vm4099 = vcmask 517120
        %4100 = vst.msk [vmem:[%s264 + $0x4] sm:$0x3] %vm4099, %v4051
        %4101 = vst.msk [vmem:[%s264 + $0x8] sm:$0xf] %vm3908, %v4052
        %4102 = vst.msk [vmem:[%s264 + $0xc] sm:$0x3] %vm4099, %v4053
        %4103 = vst.msk [vmem:[%s264 + $0x10] sm:$0xf] %vm3908, %v4054
        %4104 = vst.msk [vmem:[%s264 + $0x14] sm:$0x3] %vm4099, %v4055
        %4105 = vst.msk [vmem:[%s264 + $0x18] sm:$0xf] %vm3908, %v4056
        %4106 = vst.msk [vmem:[%s264 + $0x1c] sm:$0x3] %vm4099, %v4057
        %4107 = vst.msk [vmem:[%s264 + $0x20] sm:$0xf] %vm3908, %v4058
        %4108 = vst.msk [vmem:[%s264 + $0x24] sm:$0x3] %vm4099, %v4059
        %4109 = vst.msk [vmem:[%s264 + $0x28] sm:$0xf] %vm3908, %v4060
        %4110 = vst.msk [vmem:[%s264 + $0x2c] sm:$0x3] %vm4099, %v4061
        %4111 = vst.msk [vmem:[%s264 + $0x30] sm:$0xf] %vm3908, %v4062
        %4112 = vst.msk [vmem:[%s264 + $0x34] sm:$0x3] %vm4099, %v4063
        %4113 = vst.msk [vmem:[%s264 + $0x38] sm:$0xf] %vm3908, %v4064
        %4114 = vst.msk [vmem:[%s264 + $0x3c] sm:$0x3] %vm4099, %v4065
        %4115 = vst.msk [vmem:[%s264 + $0x40] sm:$0xf] %vm3908, %v4066
        %4116 = vst.msk [vmem:[%s264 + $0x44] sm:$0x3] %vm4099, %v4067
        %4117 = vst.msk [vmem:[%s264 + $0x48] sm:$0xf] %vm3908, %v4068
        %4118 = vst.msk [vmem:[%s264 + $0x4c] sm:$0x3] %vm4099, %v4069
        %4119 = vst.msk [vmem:[%s264 + $0x50] sm:$0xf] %vm3908, %v4070
        %4120 = vst.msk [vmem:[%s264 + $0x54] sm:$0x3] %vm4099, %v4071
        %4121 = vst.msk [vmem:[%s264 + $0x58] sm:$0xf] %vm3908, %v4072
        %4122 = vst.msk [vmem:[%s264 + $0x5c] sm:$0x3] %vm4099, %v4073
        %p4123 = scmp.lt.s32.totalorder %s18, 1
        %s4124 = scalar_select %p4123, %s18, 1
        %s4125 = smul.addr %s4124, 24
        %s4126 = smul.addr %s4125, 4
        %s4127 = scalar_lea.vmem %s5, %s4126
        // Predicated region
        $region53: #{convnet_forward.2} parent=39 // pred_check
          %p4128 = pneg %p146
        $region54: #{convnet_forward.2} parent=39 // pred_check_branch
          %4130 = sbr.rel (%p4128) target = $region56
        $region55: #{convnet_forward.2} parent=39 // pred_region
          _
        $region56: #{convnet_forward.2} parent=39 // pred_fallthru
          _
      $region40: #{convnet_forward.2} parent=5 // pred_fallthru
        _
      %p4131 = scmp.le.s32.totalorder 2, %s13
      // Predicated region
      $region57: #{convnet_forward.2} parent=5 // pred_check
        %p4132 = pneg %p4131
      $region58: #{convnet_forward.2} parent=5 // pred_check_branch
        %4134 = sbr.rel (%p4132) target = $region60
      $region59: #{convnet_forward.2} parent=5 // pred_region
        %s4135 = ssub.s32 %s13, 2
        // Predicated region
        $region61: #{convnet_forward.2} parent=59 // pred_check
          %p4136 = pneg %p152
        $region62: #{convnet_forward.2} parent=59 // pred_check_branch
          %4138 = sbr.rel (%p4136) target = $region64
        $region63: #{convnet_forward.2} parent=59 // pred_region
          %p4139 = scmp.lt.s32.totalorder %s19, 1
          %s4140 = scalar_select %p4139, %s19, 1
          %s4141 = smul.addr %s4140, 24
          %s4142 = smul.addr %s4141, 4
          %s4143 = scalar_lea.vmem %s5, %s4142
        $region64: #{convnet_forward.2} parent=59 // pred_fallthru
          _
      $region60: #{convnet_forward.2} parent=5 // pred_fallthru
        _
    $region6: #{convnet_forward.2} parent=1 // loop_footer
      %s17 = sadd.s32 1, %s13
    $region7: #{convnet_forward.2} parent=1 // loop_footer_branch
      %12 = sbr.rel target = $region3
    $region8: #{convnet_forward.2} parent=1 // loop_exit
      _
    %4144 = vsyncpa [#allocation5], 1
    %s4145 = scalar_lea.sflag [#allocation5], 1
    %4146 = vsyncpa %s4145, 1
    %4147 = vsyncpa [#allocation7], 1

</llo_original>
